<compile_context>
chip_gen: v6e
topology: v6e:2x2x1
jax: 0.10.0
libtpu: 0.0.40
codegen_flags: <defaults>
</compile_context>

<pallas_src>
import numpy as np
import jax
import jax.numpy as jnp
from jax import lax
from jax.experimental import pallas as pl
from jax.experimental.pallas import tpu as pltpu

# ---------------- config (small synthetic BERT) ----------------
VOCAB = 100
TYPE_VOCAB = 2
MAX_POS = 16
SEQ = 8
HIDDEN = 32
NUM_HEADS = 4
HEAD_DIM = HIDDEN // NUM_HEADS
INTER = 64
NUM_LAYERS = 2
LN_EPS = 1e-12

# ---------------- parameter-slab layout (static row offsets) ----------------
# One (PSLAB_ROWS, 128) f32 slab; every block starts on an 8-aligned row so
# in-kernel static slices never cross an (8,128) tile boundary awkwardly.
POS_OFF = 0                            # pos_emb         rows [0, 16)   cols 0:H
TYPE_OFF = POS_OFF + MAX_POS           # type_emb        rows [16, 18)  cols 0:H
EMBLN_OFF = TYPE_OFF + TYPE_VOCAB      # emb LN g/b      rows [18, 20)  cols 0:H
QA_OFF = EMBLN_OFF + 2                 # wqa rows [20,22) cols 0:H, bqa col H
LAYER_OFF = 24                         # per-layer blocks start here (8-aligned)
L_MISC = 0                             # 8 rows: bqkv, bo, b1, b2, ln1_g, ln1_b, ln2_g, ln2_b
L_WQKV = 8                             # (H, 3H)
L_WO = L_WQKV + HIDDEN                 # (H, H)
L_W1 = L_WO + HIDDEN                   # (H, I)
L_W2 = L_W1 + HIDDEN                   # (I, H)
LAYER_STRIDE = L_W2 + INTER            # 168 rows / layer
PSLAB_ROWS = LAYER_OFF + NUM_LAYERS * LAYER_STRIDE   # 360
PSLAB_LANES = 128


# ---------------- in-kernel helpers ----------------
def _layer_norm(x, gamma, beta):
    # Two independent lane reductions (overlap on the XLU); var = E[x^2] - mu^2.
    mu = jnp.mean(x, axis=-1, keepdims=True)
    ms = jnp.mean(x * x, axis=-1, keepdims=True)
    var = jnp.maximum(ms - mu * mu, 0.0)
    return (x - mu) * lax.rsqrt(var + LN_EPS) * gamma + beta


def _gelu(x):
    # TODO(synk): HF BERT uses the exact erf-based GELU; tanh approximation kept for robust Mosaic lowering.
    c = 0.7978845608028654  # sqrt(2/pi)
    return 0.5 * x * (1.0 + jnp.tanh(c * (x + 0.044715 * x * x * x)))


def _softmax_rows(scores):
    m = jnp.max(scores, axis=-1, keepdims=True)
    p = jnp.exp(scores - m)
    return p * pl.reciprocal(jnp.sum(p, axis=-1, keepdims=True), approx=True)


# ---------------- fused forward kernel ----------------
def qabert_kernel(idtt_ref, mask_ref, wemb_ref, pslab_ref, out_ref, ctx_ref):
    # ----- embeddings -----
    idtt = idtt_ref[...]                                              # (S,2) int32
    ids = idtt[:, 0:1]                                                # (S,1)
    ttf = idtt[:, 1:2].astype(jnp.float32)                            # (S,1)

    # word-embedding gather as a one-hot MXU matmul: (S,V) @ (V,H)
    # TODO(synk): at real-vocab scale, replace whole-table load + one-hot matmul
    # with a scalar-prefetch / manual-DMA row gather (VMEM-size bound on v7x).
    onehot = (ids == lax.broadcasted_iota(jnp.int32, (SEQ, VOCAB), 1)).astype(jnp.float32)
    we = jnp.dot(onehot, wemb_ref[...], preferred_element_type=jnp.float32)   # (S,H)

    pe = pslab_ref[POS_OFF:POS_OFF + SEQ, 0:HIDDEN]                   # (S,H)
    te0 = pslab_ref[TYPE_OFF:TYPE_OFF + 1, 0:HIDDEN]                  # (1,H)
    te1 = pslab_ref[TYPE_OFF + 1:TYPE_OFF + 2, 0:HIDDEN]              # (1,H)
    te = te0 * (1.0 - ttf) + te1 * ttf                                # (S,H)

    x = _layer_norm(we + pe + te,
                    pslab_ref[EMBLN_OFF:EMBLN_OFF + 1, 0:HIDDEN],
                    pslab_ref[EMBLN_OFF + 1:EMBLN_OFF + 2, 0:HIDDEN])

    # extended attention-mask bias: computed and pre-broadcast ONCE (hoisted
    # out of the layer/head loops; JAX does not CSE broadcast_in_dim).
    bias = jnp.broadcast_to((1.0 - mask_ref[...]) * -10000.0, (SEQ, SEQ))

    # ----- transformer layers (weights sliced out of the packed slab) -----
    for l in range(NUM_LAYERS):
        base = LAYER_OFF + l * LAYER_STRIDE
        wqkv = pslab_ref[base + L_WQKV:base + L_WQKV + HIDDEN, 0:3 * HIDDEN]
        bqkv = pslab_ref[base + L_MISC + 0:base + L_MISC + 1, 0:3 * HIDDEN]
        wo = pslab_ref[base + L_WO:base + L_WO + HIDDEN, 0:HIDDEN]
        bo = pslab_ref[base + L_MISC + 1:base + L_MISC + 2, 0:HIDDEN]
        w1 = pslab_ref[base + L_W1:base + L_W1 + HIDDEN, 0:INTER]
        b1 = pslab_ref[base + L_MISC + 2:base + L_MISC + 3, 0:INTER]
        w2 = pslab_ref[base + L_W2:base + L_W2 + INTER, 0:HIDDEN]
        b2 = pslab_ref[base + L_MISC + 3:base + L_MISC + 4, 0:HIDDEN]
        ln1_g = pslab_ref[base + L_MISC + 4:base + L_MISC + 5, 0:HIDDEN]
        ln1_b = pslab_ref[base + L_MISC + 5:base + L_MISC + 6, 0:HIDDEN]
        ln2_g = pslab_ref[base + L_MISC + 6:base + L_MISC + 7, 0:HIDDEN]
        ln2_b = pslab_ref[base + L_MISC + 7:base + L_MISC + 8, 0:HIDDEN]

        # fused QKV projection: (S,H) @ (H,3H).  1/sqrt(head_dim) is already
        # folded into the Q columns of wqkv/bqkv at pack time.
        qkv = jnp.dot(x, wqkv, preferred_element_type=jnp.float32) + bqkv
        q = qkv[:, 0:HIDDEN]
        k = qkv[:, HIDDEN:2 * HIDDEN]
        v = qkv[:, 2 * HIDDEN:3 * HIDDEN]

        # per-head attention; contexts written straight into a VMEM scratch
        # (no jnp.concatenate lane-shift/select chain).
        for h in range(NUM_HEADS):
            sl = slice(h * HEAD_DIM, (h + 1) * HEAD_DIM)
            scores = lax.dot_general(q[:, sl], k[:, sl], (((1,), (1,)), ((), ())),
                                     preferred_element_type=jnp.float32) + bias
            p = _softmax_rows(scores)
            ctx_ref[:, sl] = jnp.dot(p, v[:, sl], preferred_element_type=jnp.float32)
        ctx = ctx_ref[...]                                            # (S,H)

        attn = jnp.dot(ctx, wo, preferred_element_type=jnp.float32) + bo
        h1 = _layer_norm(x + attn, ln1_g, ln1_b)

        ff = jnp.dot(h1, w1, preferred_element_type=jnp.float32) + b1
        ff = _gelu(ff)
        ff = jnp.dot(ff, w2, preferred_element_type=jnp.float32) + b2
        x = _layer_norm(h1 + ff, ln2_g, ln2_b)

    # ----- fused QA heads: stacked start/end weights, (2,H)·(S,H)^T -> (2,S) -----
    # nn.Dropout(p=0.1) is defined in __init__ but never applied in forward -> identity.
    wqa = pslab_ref[QA_OFF:QA_OFF + 2, 0:HIDDEN]                      # (2,H)
    bqa = pslab_ref[QA_OFF:QA_OFF + 2, HIDDEN:HIDDEN + 1]             # (2,1)
    logits = lax.dot_general(wqa, x, (((1,), (1,)), ((), ())),
                             preferred_element_type=jnp.float32) + bqa  # (2,S)
    # log_softmax over the sequence axis (lane axis)
    m = jnp.max(logits, axis=-1, keepdims=True)
    zs = logits - m
    out_ref[...] = zs - jnp.log(jnp.sum(jnp.exp(zs), axis=-1, keepdims=True))


# ---------------- pallas_call wrapper ----------------
def _full_spec(shape):
    return pl.BlockSpec(shape, lambda *_: (0,) * len(shape))


def qabert_forward(packed, input_ids, attention_mask, token_type_ids):
    S = input_ids.shape[0]
    assert S == SEQ
    idtt = jnp.stack([input_ids.astype(jnp.int32),
                      token_type_ids.astype(jnp.int32)], axis=-1)     # (S,2) int32
    mask = attention_mask.astype(jnp.float32).reshape(1, S)

    args = (idtt, mask, packed["word_emb"], packed["pslab"])

    out = pl.pallas_call(
        qabert_kernel,
        out_shape=jax.ShapeDtypeStruct((2, S), jnp.float32),
        in_specs=[_full_spec(a.shape) for a in args],
        out_specs=_full_spec((2, S)),
        scratch_shapes=[pltpu.VMEM((SEQ, HIDDEN), jnp.float32)],
    )(*args)

    # mirror the .view(1, seq) after Linear(H, 1): row 0 = start, row 1 = end
    return out[0:1, :], out[1:2, :]


# ---------------- parameters ----------------
def _normal(key, shape, scale=0.02):
    return scale * jax.random.normal(key, shape, jnp.float32)


def init_params(key):
    keys = jax.random.split(key, 4 + NUM_LAYERS)
    ln_gb = jnp.concatenate([jnp.ones((1, HIDDEN), jnp.float32),
                             jnp.zeros((1, HIDDEN), jnp.float32)], axis=0)   # (2,H)
    p = {
        "word_emb": _normal(keys[0], (VOCAB, HIDDEN)),
        "pos_emb": _normal(keys[1], (MAX_POS, HIDDEN)),
        "type_emb": _normal(keys[2], (TYPE_VOCAB, HIDDEN)),
        "emb_ln": ln_gb,
    }
    wqkv, wo, w1, w2 = [], [], [], []
    for l in range(NUM_LAYERS):
        lk = jax.random.split(keys[3 + l], 4)
        wqkv.append(_normal(lk[0], (HIDDEN, 3 * HIDDEN)))   # heads concatenated on lanes
        wo.append(_normal(lk[1], (HIDDEN, HIDDEN)))
        w1.append(_normal(lk[2], (HIDDEN, INTER)))
        w2.append(_normal(lk[3], (INTER, HIDDEN)))
    p.update(
        wqkv=jnp.stack(wqkv),
        bqkv=jnp.zeros((NUM_LAYERS, 1, 3 * HIDDEN), jnp.float32),
        wo=jnp.stack(wo),
        bo=jnp.zeros((NUM_LAYERS, 1, HIDDEN), jnp.float32),
        ln1=jnp.stack([ln_gb] * NUM_LAYERS),
        w1=jnp.stack(w1),
        b1=jnp.zeros((NUM_LAYERS, 1, INTER), jnp.float32),
        w2=jnp.stack(w2),
        b2=jnp.zeros((NUM_LAYERS, 1, HIDDEN), jnp.float32),
        ln2=jnp.stack([ln_gb] * NUM_LAYERS),
    )
    # stacked QA heads: row 0 = linearStart weights, row 1 = linearEnd weights
    p["wqa"] = _normal(keys[3 + NUM_LAYERS], (2, HIDDEN))
    p["bqa"] = jnp.zeros((2, 1), jnp.float32)
    return p


def pack_params(p):
    """One-time host transform: pack all small params into one 128-lane slab,
    folding 1/sqrt(head_dim) into the Q projection (weights AND bias)."""
    slab = np.zeros((PSLAB_ROWS, PSLAB_LANES), np.float32)
    slab[POS_OFF:POS_OFF + MAX_POS, :HIDDEN] = np.asarray(p["pos_emb"])
    slab[TYPE_OFF:TYPE_OFF + TYPE_VOCAB, :HIDDEN] = np.asarray(p["type_emb"])
    slab[EMBLN_OFF:EMBLN_OFF + 2, :HIDDEN] = np.asarray(p["emb_ln"])
    slab[QA_OFF:QA_OFF + 2, :HIDDEN] = np.asarray(p["wqa"])
    slab[QA_OFF:QA_OFF + 2, HIDDEN:HIDDEN + 1] = np.asarray(p["bqa"])

    scale = float(HEAD_DIM) ** -0.5
    for l in range(NUM_LAYERS):
        base = LAYER_OFF + l * LAYER_STRIDE
        wqkv = np.array(p["wqkv"][l])            # (H, 3H)
        bqkv = np.array(p["bqkv"][l])            # (1, 3H)
        wqkv[:, :HIDDEN] *= scale                # fold attention scale into Q
        bqkv[:, :HIDDEN] *= scale
        slab[base + L_MISC + 0, :3 * HIDDEN] = bqkv[0]
        slab[base + L_MISC + 1, :HIDDEN] = np.asarray(p["bo"][l])[0]
        slab[base + L_MISC + 2, :INTER] = np.asarray(p["b1"][l])[0]
        slab[base + L_MISC + 3, :HIDDEN] = np.asarray(p["b2"][l])[0]
        slab[base + L_MISC + 4:base + L_MISC + 6, :HIDDEN] = np.asarray(p["ln1"][l])
        slab[base + L_MISC + 6:base + L_MISC + 8, :HIDDEN] = np.asarray(p["ln2"][l])
        slab[base + L_WQKV:base + L_WQKV + HIDDEN, :3 * HIDDEN] = wqkv
        slab[base + L_WO:base + L_WO + HIDDEN, :HIDDEN] = np.asarray(p["wo"][l])
        slab[base + L_W1:base + L_W1 + HIDDEN, :INTER] = np.asarray(p["w1"][l])
        slab[base + L_W2:base + L_W2 + INTER, :HIDDEN] = np.asarray(p["w2"][l])
    return {"word_emb": jnp.asarray(p["word_emb"]), "pslab": jnp.asarray(slab)}


if __name__ == "__main__":
    key = jax.random.PRNGKey(0)
    kp, kid = jax.random.split(key)
    packed = pack_params(init_params(kp))        # one-time packing (2 param DMAs/call)

    input_ids = jax.random.randint(kid, (SEQ,), 0, VOCAB, dtype=jnp.int32)
    attention_mask = jnp.array([1, 1, 1, 1, 1, 1, 0, 0], dtype=jnp.int32)
    token_type_ids = jnp.array([0, 0, 0, 0, 1, 1, 1, 1], dtype=jnp.int32)

    start_log_softmax, end_log_softmax = qabert_forward(
        packed, input_ids, attention_mask, token_type_ids)
    jax.block_until_ready((start_log_softmax, end_log_softmax))

    assert start_log_softmax.shape == (1, SEQ)
    assert end_log_softmax.shape == (1, SEQ)
    print("KERNEL_OK")
</pallas_src>

<mosaic_0001>
module attributes {stable_mosaic.version = 11 : i64} {
  func.func @qabert_kernel(%arg0: memref<8x2xi32, #tpu.memory_space<vmem>>, %arg1: memref<1x8xf32, #tpu.memory_space<vmem>>, %arg2: memref<100x32xf32, #tpu.memory_space<vmem>>, %arg3: memref<360x128xf32, #tpu.memory_space<vmem>>, %arg4: memref<2x8xf32, #tpu.memory_space<vmem>>, %arg5: memref<8x32xf32, #tpu.memory_space<vmem>>) attributes {dimension_semantics = [], scalar_prefetch = 0 : i64, scratch_operands = 1 : i64, tpu.core_type = #tpu.core_type<tc>} {
    %c0 = arith.constant 0 : index
    %c0_0 = arith.constant 0 : index
    %0 = vector.load %arg0[%c0, %c0_0] : memref<8x2xi32, #tpu.memory_space<vmem>>, vector<8x2xi32>
    %1 = vector.extract_strided_slice %0 {offsets = [0, 0], sizes = [8, 1], strides = [1, 1]} : vector<8x2xi32> to vector<8x1xi32>
    %2 = vector.extract_strided_slice %0 {offsets = [0, 1], sizes = [8, 1], strides = [1, 1]} : vector<8x2xi32> to vector<8x1xi32>
    %3 = arith.sitofp %2 : vector<8x1xi32> to vector<8x1xf32>
    %4 = tpu.iota {dimensions = array<i32: 1>} : vector<8x100xi32>
    %5 = vector.broadcast %1 : vector<8x1xi32> to vector<8x100xi32>
    %6 = arith.cmpi eq, %5, %4 : vector<8x100xi32>
    %7 = arith.extui %6 : vector<8x100xi1> to vector<8x100xi32>
    %8 = arith.sitofp %7 : vector<8x100xi32> to vector<8x100xf32>
    %c0_1 = arith.constant 0 : index
    %c0_2 = arith.constant 0 : index
    %9 = vector.load %arg2[%c0_1, %c0_2] : memref<100x32xf32, #tpu.memory_space<vmem>>, vector<100x32xf32>
    %cst = arith.constant dense<0.000000e+00> : vector<8x32xf32>
    %10 = tpu.matmul %8, %9, %cst {dimension_numbers = #tpu.dot_dimension_numbers<[1], [0], [0], [1], [0, 0, 1, 1], [], []>} : vector<8x100xf32>, vector<100x32xf32>, vector<8x32xf32> -> vector<8x32xf32>
    %c0_3 = arith.constant 0 : index
    %c0_4 = arith.constant 0 : index
    %11 = vector.load %arg3[%c0_3, %c0_4] : memref<360x128xf32, #tpu.memory_space<vmem>>, vector<8x32xf32>
    %c16 = arith.constant 16 : index
    %c0_5 = arith.constant 0 : index
    %12 = vector.load %arg3[%c16, %c0_5] : memref<360x128xf32, #tpu.memory_space<vmem>>, vector<1x32xf32>
    %c17 = arith.constant 17 : index
    %c0_6 = arith.constant 0 : index
    %13 = vector.load %arg3[%c17, %c0_6] : memref<360x128xf32, #tpu.memory_space<vmem>>, vector<1x32xf32>
    %cst_7 = arith.constant 1.000000e+00 : f32
    %14 = vector.broadcast %cst_7 : f32 to vector<8x1xf32>
    %15 = arith.subf %14, %3 : vector<8x1xf32>
    %16 = vector.broadcast %12 : vector<1x32xf32> to vector<8x32xf32>
    %17 = vector.broadcast %15 : vector<8x1xf32> to vector<8x32xf32>
    %18 = arith.mulf %16, %17 : vector<8x32xf32>
    %19 = vector.broadcast %13 : vector<1x32xf32> to vector<8x32xf32>
    %20 = vector.broadcast %3 : vector<8x1xf32> to vector<8x32xf32>
    %21 = arith.mulf %19, %20 : vector<8x32xf32>
    %22 = arith.addf %18, %21 : vector<8x32xf32>
    %23 = arith.addf %10, %11 : vector<8x32xf32>
    %24 = arith.addf %23, %22 : vector<8x32xf32>
    %c18 = arith.constant 18 : index
    %c0_8 = arith.constant 0 : index
    %25 = vector.load %arg3[%c18, %c0_8] : memref<360x128xf32, #tpu.memory_space<vmem>>, vector<1x32xf32>
    %c19 = arith.constant 19 : index
    %c0_9 = arith.constant 0 : index
    %26 = vector.load %arg3[%c19, %c0_9] : memref<360x128xf32, #tpu.memory_space<vmem>>, vector<1x32xf32>
    %cst_10 = arith.constant dense<0.000000e+00> : vector<8xf32>
    %27 = vector.multi_reduction <add>, %24, %cst_10 [1] : vector<8x32xf32> to vector<8xf32>
    %28 = vector.shape_cast %27 : vector<8xf32> to vector<8x1xf32>
    %cst_11 = arith.constant 3.200000e+01 : f32
    %29 = vector.broadcast %cst_11 : f32 to vector<8x1xf32>
    %30 = arith.divf %28, %29 : vector<8x1xf32>
    %31 = arith.mulf %24, %24 : vector<8x32xf32>
    %cst_12 = arith.constant dense<0.000000e+00> : vector<8xf32>
    %32 = vector.multi_reduction <add>, %31, %cst_12 [1] : vector<8x32xf32> to vector<8xf32>
    %33 = vector.shape_cast %32 : vector<8xf32> to vector<8x1xf32>
    %cst_13 = arith.constant 3.200000e+01 : f32
    %34 = vector.broadcast %cst_13 : f32 to vector<8x1xf32>
    %35 = arith.divf %33, %34 : vector<8x1xf32>
    %36 = arith.mulf %30, %30 : vector<8x1xf32>
    %37 = arith.subf %35, %36 : vector<8x1xf32>
    %cst_14 = arith.constant 0.000000e+00 : f32
    %38 = vector.broadcast %cst_14 : f32 to vector<8x1xf32>
    %39 = arith.maximumf %37, %38 : vector<8x1xf32>
    %40 = vector.broadcast %30 : vector<8x1xf32> to vector<8x32xf32>
    %41 = arith.subf %24, %40 : vector<8x32xf32>
    %cst_15 = arith.constant 9.99999996E-13 : f32
    %42 = vector.broadcast %cst_15 : f32 to vector<8x1xf32>
    %43 = arith.addf %39, %42 : vector<8x1xf32>
    %44 = math.rsqrt %43 : vector<8x1xf32>
    %45 = vector.broadcast %44 : vector<8x1xf32> to vector<8x32xf32>
    %46 = arith.mulf %41, %45 : vector<8x32xf32>
    %47 = vector.broadcast %25 : vector<1x32xf32> to vector<8x32xf32>
    %48 = arith.mulf %46, %47 : vector<8x32xf32>
    %49 = vector.broadcast %26 : vector<1x32xf32> to vector<8x32xf32>
    %50 = arith.addf %48, %49 : vector<8x32xf32>
    %c0_16 = arith.constant 0 : index
    %c0_17 = arith.constant 0 : index
    %51 = vector.load %arg1[%c0_16, %c0_17] : memref<1x8xf32, #tpu.memory_space<vmem>>, vector<1x8xf32>
    %cst_18 = arith.constant 1.000000e+00 : f32
    %52 = vector.broadcast %cst_18 : f32 to vector<1x8xf32>
    %53 = arith.subf %52, %51 : vector<1x8xf32>
    %cst_19 = arith.constant -1.000000e+04 : f32
    %54 = vector.broadcast %cst_19 : f32 to vector<1x8xf32>
    %55 = arith.mulf %53, %54 : vector<1x8xf32>
    %56 = vector.shape_cast %55 : vector<1x8xf32> to vector<1x8xf32>
    %57 = vector.broadcast %56 : vector<1x8xf32> to vector<8x8xf32>
    %c32 = arith.constant 32 : index
    %c0_20 = arith.constant 0 : index
    %58 = vector.load %arg3[%c32, %c0_20] : memref<360x128xf32, #tpu.memory_space<vmem>>, vector<32x96xf32>
    %c24 = arith.constant 24 : index
    %c0_21 = arith.constant 0 : index
    %59 = vector.load %arg3[%c24, %c0_21] : memref<360x128xf32, #tpu.memory_space<vmem>>, vector<1x96xf32>
    %c64 = arith.constant 64 : index
    %c0_22 = arith.constant 0 : index
    %60 = vector.load %arg3[%c64, %c0_22] : memref<360x128xf32, #tpu.memory_space<vmem>>, vector<32x32xf32>
    %c25 = arith.constant 25 : index
    %c0_23 = arith.constant 0 : index
    %61 = vector.load %arg3[%c25, %c0_23] : memref<360x128xf32, #tpu.memory_space<vmem>>, vector<1x32xf32>
    %c96 = arith.constant 96 : index
    %c0_24 = arith.constant 0 : index
    %62 = vector.load %arg3[%c96, %c0_24] : memref<360x128xf32, #tpu.memory_space<vmem>>, vector<32x64xf32>
    %c26 = arith.constant 26 : index
    %c0_25 = arith.constant 0 : index
    %63 = vector.load %arg3[%c26, %c0_25] : memref<360x128xf32, #tpu.memory_space<vmem>>, vector<1x64xf32>
    %c128 = arith.constant 128 : index
    %c0_26 = arith.constant 0 : index
    %64 = vector.load %arg3[%c128, %c0_26] : memref<360x128xf32, #tpu.memory_space<vmem>>, vector<64x32xf32>
    %c27 = arith.constant 27 : index
    %c0_27 = arith.constant 0 : index
    %65 = vector.load %arg3[%c27, %c0_27] : memref<360x128xf32, #tpu.memory_space<vmem>>, vector<1x32xf32>
    %c28 = arith.constant 28 : index
    %c0_28 = arith.constant 0 : index
    %66 = vector.load %arg3[%c28, %c0_28] : memref<360x128xf32, #tpu.memory_space<vmem>>, vector<1x32xf32>
    %c29 = arith.constant 29 : index
    %c0_29 = arith.constant 0 : index
    %67 = vector.load %arg3[%c29, %c0_29] : memref<360x128xf32, #tpu.memory_space<vmem>>, vector<1x32xf32>
    %c30 = arith.constant 30 : index
    %c0_30 = arith.constant 0 : index
    %68 = vector.load %arg3[%c30, %c0_30] : memref<360x128xf32, #tpu.memory_space<vmem>>, vector<1x32xf32>
    %c31 = arith.constant 31 : index
    %c0_31 = arith.constant 0 : index
    %69 = vector.load %arg3[%c31, %c0_31] : memref<360x128xf32, #tpu.memory_space<vmem>>, vector<1x32xf32>
    %cst_32 = arith.constant dense<0.000000e+00> : vector<8x96xf32>
    %70 = tpu.matmul %50, %58, %cst_32 {dimension_numbers = #tpu.dot_dimension_numbers<[1], [0], [0], [1], [0, 0, 1, 1], [], []>} : vector<8x32xf32>, vector<32x96xf32>, vector<8x96xf32> -> vector<8x96xf32>
    %71 = vector.broadcast %59 : vector<1x96xf32> to vector<8x96xf32>
    %72 = arith.addf %70, %71 : vector<8x96xf32>
    %73 = vector.extract_strided_slice %72 {offsets = [0, 0], sizes = [8, 32], strides = [1, 1]} : vector<8x96xf32> to vector<8x32xf32>
    %74 = vector.extract_strided_slice %72 {offsets = [0, 32], sizes = [8, 32], strides = [1, 1]} : vector<8x96xf32> to vector<8x32xf32>
    %75 = vector.extract_strided_slice %72 {offsets = [0, 64], sizes = [8, 32], strides = [1, 1]} : vector<8x96xf32> to vector<8x32xf32>
    %76 = vector.extract_strided_slice %73 {offsets = [0, 0], sizes = [8, 8], strides = [1, 1]} : vector<8x32xf32> to vector<8x8xf32>
    %77 = vector.extract_strided_slice %74 {offsets = [0, 0], sizes = [8, 8], strides = [1, 1]} : vector<8x32xf32> to vector<8x8xf32>
    %cst_33 = arith.constant dense<0.000000e+00> : vector<8x8xf32>
    %78 = tpu.matmul %76, %77, %cst_33 {dimension_numbers = #tpu.dot_dimension_numbers<[1], [1], [0], [0], [0, 0, 1, 0], [], []>} : vector<8x8xf32>, vector<8x8xf32>, vector<8x8xf32> -> vector<8x8xf32>
    %79 = arith.addf %78, %57 : vector<8x8xf32>
    %cst_34 = arith.constant dense<0xFF800000> : vector<8xf32>
    %80 = vector.multi_reduction <maximumf>, %79, %cst_34 [1] : vector<8x8xf32> to vector<8xf32>
    %81 = vector.shape_cast %80 : vector<8xf32> to vector<8x1xf32>
    %82 = vector.broadcast %81 : vector<8x1xf32> to vector<8x8xf32>
    %83 = arith.subf %79, %82 : vector<8x8xf32>
    %84 = math.exp %83 : vector<8x8xf32>
    %cst_35 = arith.constant dense<0.000000e+00> : vector<8xf32>
    %85 = vector.multi_reduction <add>, %84, %cst_35 [1] : vector<8x8xf32> to vector<8xf32>
    %86 = vector.shape_cast %85 : vector<8xf32> to vector<8x1xf32>
    %87 = tpu.reciprocal %86 {approx = true} : vector<8x1xf32> -> vector<8x1xf32>
    %88 = vector.broadcast %87 : vector<8x1xf32> to vector<8x8xf32>
    %89 = arith.mulf %84, %88 : vector<8x8xf32>
    %90 = vector.extract_strided_slice %75 {offsets = [0, 0], sizes = [8, 8], strides = [1, 1]} : vector<8x32xf32> to vector<8x8xf32>
    %cst_36 = arith.constant dense<0.000000e+00> : vector<8x8xf32>
    %91 = tpu.matmul %89, %90, %cst_36 {dimension_numbers = #tpu.dot_dimension_numbers<[1], [0], [0], [1], [0, 0, 1, 1], [], []>} : vector<8x8xf32>, vector<8x8xf32>, vector<8x8xf32> -> vector<8x8xf32>
    %c0_37 = arith.constant 0 : index
    %c0_38 = arith.constant 0 : index
    %92 = vector.load %arg5[%c0_37, %c0_38] : memref<8x32xf32, #tpu.memory_space<vmem>>, vector<8x8xf32>
    tpu.vector_store %arg5[%c0_37, %c0_38], %91 {strides = array<i32>} : memref<8x32xf32, #tpu.memory_space<vmem>>, vector<8x8xf32>,
    %93 = vector.extract_strided_slice %73 {offsets = [0, 8], sizes = [8, 8], strides = [1, 1]} : vector<8x32xf32> to vector<8x8xf32>
    %94 = vector.extract_strided_slice %74 {offsets = [0, 8], sizes = [8, 8], strides = [1, 1]} : vector<8x32xf32> to vector<8x8xf32>
    %cst_39 = arith.constant dense<0.000000e+00> : vector<8x8xf32>
    %95 = tpu.matmul %93, %94, %cst_39 {dimension_numbers = #tpu.dot_dimension_numbers<[1], [1], [0], [0], [0, 0, 1, 0], [], []>} : vector<8x8xf32>, vector<8x8xf32>, vector<8x8xf32> -> vector<8x8xf32>
    %96 = arith.addf %95, %57 : vector<8x8xf32>
    %cst_40 = arith.constant dense<0xFF800000> : vector<8xf32>
    %97 = vector.multi_reduction <maximumf>, %96, %cst_40 [1] : vector<8x8xf32> to vector<8xf32>
    %98 = vector.shape_cast %97 : vector<8xf32> to vector<8x1xf32>
    %99 = vector.broadcast %98 : vector<8x1xf32> to vector<8x8xf32>
    %100 = arith.subf %96, %99 : vector<8x8xf32>
    %101 = math.exp %100 : vector<8x8xf32>
    %cst_41 = arith.constant dense<0.000000e+00> : vector<8xf32>
    %102 = vector.multi_reduction <add>, %101, %cst_41 [1] : vector<8x8xf32> to vector<8xf32>
    %103 = vector.shape_cast %102 : vector<8xf32> to vector<8x1xf32>
    %104 = tpu.reciprocal %103 {approx = true} : vector<8x1xf32> -> vector<8x1xf32>
    %105 = vector.broadcast %104 : vector<8x1xf32> to vector<8x8xf32>
    %106 = arith.mulf %101, %105 : vector<8x8xf32>
    %107 = vector.extract_strided_slice %75 {offsets = [0, 8], sizes = [8, 8], strides = [1, 1]} : vector<8x32xf32> to vector<8x8xf32>
    %cst_42 = arith.constant dense<0.000000e+00> : vector<8x8xf32>
    %108 = tpu.matmul %106, %107, %cst_42 {dimension_numbers = #tpu.dot_dimension_numbers<[1], [0], [0], [1], [0, 0, 1, 1], [], []>} : vector<8x8xf32>, vector<8x8xf32>, vector<8x8xf32> -> vector<8x8xf32>
    %c0_43 = arith.constant 0 : index
    %c8 = arith.constant 8 : index
    %109 = vector.load %arg5[%c0_43, %c8] : memref<8x32xf32, #tpu.memory_space<vmem>>, vector<8x8xf32>
    tpu.vector_store %arg5[%c0_43, %c8], %108 {strides = array<i32>} : memref<8x32xf32, #tpu.memory_space<vmem>>, vector<8x8xf32>,
    %110 = vector.extract_strided_slice %73 {offsets = [0, 16], sizes = [8, 8], strides = [1, 1]} : vector<8x32xf32> to vector<8x8xf32>
    %111 = vector.extract_strided_slice %74 {offsets = [0, 16], sizes = [8, 8], strides = [1, 1]} : vector<8x32xf32> to vector<8x8xf32>
    %cst_44 = arith.constant dense<0.000000e+00> : vector<8x8xf32>
    %112 = tpu.matmul %110, %111, %cst_44 {dimension_numbers = #tpu.dot_dimension_numbers<[1], [1], [0], [0], [0, 0, 1, 0], [], []>} : vector<8x8xf32>, vector<8x8xf32>, vector<8x8xf32> -> vector<8x8xf32>
    %113 = arith.addf %112, %57 : vector<8x8xf32>
    %cst_45 = arith.constant dense<0xFF800000> : vector<8xf32>
    %114 = vector.multi_reduction <maximumf>, %113, %cst_45 [1] : vector<8x8xf32> to vector<8xf32>
    %115 = vector.shape_cast %114 : vector<8xf32> to vector<8x1xf32>
    %116 = vector.broadcast %115 : vector<8x1xf32> to vector<8x8xf32>
    %117 = arith.subf %113, %116 : vector<8x8xf32>
    %118 = math.exp %117 : vector<8x8xf32>
    %cst_46 = arith.constant dense<0.000000e+00> : vector<8xf32>
    %119 = vector.multi_reduction <add>, %118, %cst_46 [1] : vector<8x8xf32> to vector<8xf32>
    %120 = vector.shape_cast %119 : vector<8xf32> to vector<8x1xf32>
    %121 = tpu.reciprocal %120 {approx = true} : vector<8x1xf32> -> vector<8x1xf32>
    %122 = vector.broadcast %121 : vector<8x1xf32> to vector<8x8xf32>
    %123 = arith.mulf %118, %122 : vector<8x8xf32>
    %124 = vector.extract_strided_slice %75 {offsets = [0, 16], sizes = [8, 8], strides = [1, 1]} : vector<8x32xf32> to vector<8x8xf32>
    %cst_47 = arith.constant dense<0.000000e+00> : vector<8x8xf32>
    %125 = tpu.matmul %123, %124, %cst_47 {dimension_numbers = #tpu.dot_dimension_numbers<[1], [0], [0], [1], [0, 0, 1, 1], [], []>} : vector<8x8xf32>, vector<8x8xf32>, vector<8x8xf32> -> vector<8x8xf32>
    %c0_48 = arith.constant 0 : index
    %c16_49 = arith.constant 16 : index
    %126 = vector.load %arg5[%c0_48, %c16_49] : memref<8x32xf32, #tpu.memory_space<vmem>>, vector<8x8xf32>
    tpu.vector_store %arg5[%c0_48, %c16_49], %125 {strides = array<i32>} : memref<8x32xf32, #tpu.memory_space<vmem>>, vector<8x8xf32>,
    %127 = vector.extract_strided_slice %73 {offsets = [0, 24], sizes = [8, 8], strides = [1, 1]} : vector<8x32xf32> to vector<8x8xf32>
    %128 = vector.extract_strided_slice %74 {offsets = [0, 24], sizes = [8, 8], strides = [1, 1]} : vector<8x32xf32> to vector<8x8xf32>
    %cst_50 = arith.constant dense<0.000000e+00> : vector<8x8xf32>
    %129 = tpu.matmul %127, %128, %cst_50 {dimension_numbers = #tpu.dot_dimension_numbers<[1], [1], [0], [0], [0, 0, 1, 0], [], []>} : vector<8x8xf32>, vector<8x8xf32>, vector<8x8xf32> -> vector<8x8xf32>
    %130 = arith.addf %129, %57 : vector<8x8xf32>
    %cst_51 = arith.constant dense<0xFF800000> : vector<8xf32>
    %131 = vector.multi_reduction <maximumf>, %130, %cst_51 [1] : vector<8x8xf32> to vector<8xf32>
    %132 = vector.shape_cast %131 : vector<8xf32> to vector<8x1xf32>
    %133 = vector.broadcast %132 : vector<8x1xf32> to vector<8x8xf32>
    %134 = arith.subf %130, %133 : vector<8x8xf32>
    %135 = math.exp %134 : vector<8x8xf32>
    %cst_52 = arith.constant dense<0.000000e+00> : vector<8xf32>
    %136 = vector.multi_reduction <add>, %135, %cst_52 [1] : vector<8x8xf32> to vector<8xf32>
    %137 = vector.shape_cast %136 : vector<8xf32> to vector<8x1xf32>
    %138 = tpu.reciprocal %137 {approx = true} : vector<8x1xf32> -> vector<8x1xf32>
    %139 = vector.broadcast %138 : vector<8x1xf32> to vector<8x8xf32>
    %140 = arith.mulf %135, %139 : vector<8x8xf32>
    %141 = vector.extract_strided_slice %75 {offsets = [0, 24], sizes = [8, 8], strides = [1, 1]} : vector<8x32xf32> to vector<8x8xf32>
    %cst_53 = arith.constant dense<0.000000e+00> : vector<8x8xf32>
    %142 = tpu.matmul %140, %141, %cst_53 {dimension_numbers = #tpu.dot_dimension_numbers<[1], [0], [0], [1], [0, 0, 1, 1], [], []>} : vector<8x8xf32>, vector<8x8xf32>, vector<8x8xf32> -> vector<8x8xf32>
    %c0_54 = arith.constant 0 : index
    %c24_55 = arith.constant 24 : index
    %143 = vector.load %arg5[%c0_54, %c24_55] : memref<8x32xf32, #tpu.memory_space<vmem>>, vector<8x8xf32>
    tpu.vector_store %arg5[%c0_54, %c24_55], %142 {strides = array<i32>} : memref<8x32xf32, #tpu.memory_space<vmem>>, vector<8x8xf32>,
    %c0_56 = arith.constant 0 : index
    %c0_57 = arith.constant 0 : index
    %144 = vector.load %arg5[%c0_56, %c0_57] : memref<8x32xf32, #tpu.memory_space<vmem>>, vector<8x32xf32>
    %cst_58 = arith.constant dense<0.000000e+00> : vector<8x32xf32>
    %145 = tpu.matmul %144, %60, %cst_58 {dimension_numbers = #tpu.dot_dimension_numbers<[1], [0], [0], [1], [0, 0, 1, 1], [], []>} : vector<8x32xf32>, vector<32x32xf32>, vector<8x32xf32> -> vector<8x32xf32>
    %146 = vector.broadcast %61 : vector<1x32xf32> to vector<8x32xf32>
    %147 = arith.addf %145, %146 : vector<8x32xf32>
    %148 = arith.addf %50, %147 : vector<8x32xf32>
    %cst_59 = arith.constant dense<0.000000e+00> : vector<8xf32>
    %149 = vector.multi_reduction <add>, %148, %cst_59 [1] : vector<8x32xf32> to vector<8xf32>
    %150 = vector.shape_cast %149 : vector<8xf32> to vector<8x1xf32>
    %cst_60 = arith.constant 3.200000e+01 : f32
    %151 = vector.broadcast %cst_60 : f32 to vector<8x1xf32>
    %152 = arith.divf %150, %151 : vector<8x1xf32>
    %153 = arith.mulf %148, %148 : vector<8x32xf32>
    %cst_61 = arith.constant dense<0.000000e+00> : vector<8xf32>
    %154 = vector.multi_reduction <add>, %153, %cst_61 [1] : vector<8x32xf32> to vector<8xf32>
    %155 = vector.shape_cast %154 : vector<8xf32> to vector<8x1xf32>
    %cst_62 = arith.constant 3.200000e+01 : f32
    %156 = vector.broadcast %cst_62 : f32 to vector<8x1xf32>
    %157 = arith.divf %155, %156 : vector<8x1xf32>
    %158 = arith.mulf %152, %152 : vector<8x1xf32>
    %159 = arith.subf %157, %158 : vector<8x1xf32>
    %cst_63 = arith.constant 0.000000e+00 : f32
    %160 = vector.broadcast %cst_63 : f32 to vector<8x1xf32>
    %161 = arith.maximumf %159, %160 : vector<8x1xf32>
    %162 = vector.broadcast %152 : vector<8x1xf32> to vector<8x32xf32>
    %163 = arith.subf %148, %162 : vector<8x32xf32>
    %cst_64 = arith.constant 9.99999996E-13 : f32
    %164 = vector.broadcast %cst_64 : f32 to vector<8x1xf32>
    %165 = arith.addf %161, %164 : vector<8x1xf32>
    %166 = math.rsqrt %165 : vector<8x1xf32>
    %167 = vector.broadcast %166 : vector<8x1xf32> to vector<8x32xf32>
    %168 = arith.mulf %163, %167 : vector<8x32xf32>
    %169 = vector.broadcast %66 : vector<1x32xf32> to vector<8x32xf32>
    %170 = arith.mulf %168, %169 : vector<8x32xf32>
    %171 = vector.broadcast %67 : vector<1x32xf32> to vector<8x32xf32>
    %172 = arith.addf %170, %171 : vector<8x32xf32>
    %cst_65 = arith.constant dense<0.000000e+00> : vector<8x64xf32>
    %173 = tpu.matmul %172, %62, %cst_65 {dimension_numbers = #tpu.dot_dimension_numbers<[1], [0], [0], [1], [0, 0, 1, 1], [], []>} : vector<8x32xf32>, vector<32x64xf32>, vector<8x64xf32> -> vector<8x64xf32>
    %174 = vector.broadcast %63 : vector<1x64xf32> to vector<8x64xf32>
    %175 = arith.addf %173, %174 : vector<8x64xf32>
    %cst_66 = arith.constant 5.000000e-01 : f32
    %176 = vector.broadcast %cst_66 : f32 to vector<8x64xf32>
    %177 = arith.mulf %176, %175 : vector<8x64xf32>
    %cst_67 = arith.constant 4.471500e-02 : f32
    %178 = vector.broadcast %cst_67 : f32 to vector<8x64xf32>
    %179 = arith.mulf %178, %175 : vector<8x64xf32>
    %180 = arith.mulf %179, %175 : vector<8x64xf32>
    %181 = arith.mulf %180, %175 : vector<8x64xf32>
    %182 = arith.addf %175, %181 : vector<8x64xf32>
    %cst_68 = arith.constant 0.797884583 : f32
    %183 = vector.broadcast %cst_68 : f32 to vector<8x64xf32>
    %184 = arith.mulf %183, %182 : vector<8x64xf32>
    %185 = math.tanh %184 : vector<8x64xf32>
    %cst_69 = arith.constant 1.000000e+00 : f32
    %186 = vector.broadcast %cst_69 : f32 to vector<8x64xf32>
    %187 = arith.addf %186, %185 : vector<8x64xf32>
    %188 = arith.mulf %177, %187 : vector<8x64xf32>
    %cst_70 = arith.constant dense<0.000000e+00> : vector<8x32xf32>
    %189 = tpu.matmul %188, %64, %cst_70 {dimension_numbers = #tpu.dot_dimension_numbers<[1], [0], [0], [1], [0, 0, 1, 1], [], []>} : vector<8x64xf32>, vector<64x32xf32>, vector<8x32xf32> -> vector<8x32xf32>
    %190 = vector.broadcast %65 : vector<1x32xf32> to vector<8x32xf32>
    %191 = arith.addf %189, %190 : vector<8x32xf32>
    %192 = arith.addf %172, %191 : vector<8x32xf32>
    %cst_71 = arith.constant dense<0.000000e+00> : vector<8xf32>
    %193 = vector.multi_reduction <add>, %192, %cst_71 [1] : vector<8x32xf32> to vector<8xf32>
    %194 = vector.shape_cast %193 : vector<8xf32> to vector<8x1xf32>
    %cst_72 = arith.constant 3.200000e+01 : f32
    %195 = vector.broadcast %cst_72 : f32 to vector<8x1xf32>
    %196 = arith.divf %194, %195 : vector<8x1xf32>
    %197 = arith.mulf %192, %192 : vector<8x32xf32>
    %cst_73 = arith.constant dense<0.000000e+00> : vector<8xf32>
    %198 = vector.multi_reduction <add>, %197, %cst_73 [1] : vector<8x32xf32> to vector<8xf32>
    %199 = vector.shape_cast %198 : vector<8xf32> to vector<8x1xf32>
    %cst_74 = arith.constant 3.200000e+01 : f32
    %200 = vector.broadcast %cst_74 : f32 to vector<8x1xf32>
    %201 = arith.divf %199, %200 : vector<8x1xf32>
    %202 = arith.mulf %196, %196 : vector<8x1xf32>
    %203 = arith.subf %201, %202 : vector<8x1xf32>
    %cst_75 = arith.constant 0.000000e+00 : f32
    %204 = vector.broadcast %cst_75 : f32 to vector<8x1xf32>
    %205 = arith.maximumf %203, %204 : vector<8x1xf32>
    %206 = vector.broadcast %196 : vector<8x1xf32> to vector<8x32xf32>
    %207 = arith.subf %192, %206 : vector<8x32xf32>
    %cst_76 = arith.constant 9.99999996E-13 : f32
    %208 = vector.broadcast %cst_76 : f32 to vector<8x1xf32>
    %209 = arith.addf %205, %208 : vector<8x1xf32>
    %210 = math.rsqrt %209 : vector<8x1xf32>
    %211 = vector.broadcast %210 : vector<8x1xf32> to vector<8x32xf32>
    %212 = arith.mulf %207, %211 : vector<8x32xf32>
    %213 = vector.broadcast %68 : vector<1x32xf32> to vector<8x32xf32>
    %214 = arith.mulf %212, %213 : vector<8x32xf32>
    %215 = vector.broadcast %69 : vector<1x32xf32> to vector<8x32xf32>
    %216 = arith.addf %214, %215 : vector<8x32xf32>
    %c200 = arith.constant 200 : index
    %c0_77 = arith.constant 0 : index
    %217 = vector.load %arg3[%c200, %c0_77] : memref<360x128xf32, #tpu.memory_space<vmem>>, vector<32x96xf32>
    %c192 = arith.constant 192 : index
    %c0_78 = arith.constant 0 : index
    %218 = vector.load %arg3[%c192, %c0_78] : memref<360x128xf32, #tpu.memory_space<vmem>>, vector<1x96xf32>
    %c232 = arith.constant 232 : index
    %c0_79 = arith.constant 0 : index
    %219 = vector.load %arg3[%c232, %c0_79] : memref<360x128xf32, #tpu.memory_space<vmem>>, vector<32x32xf32>
    %c193 = arith.constant 193 : index
    %c0_80 = arith.constant 0 : index
    %220 = vector.load %arg3[%c193, %c0_80] : memref<360x128xf32, #tpu.memory_space<vmem>>, vector<1x32xf32>
    %c264 = arith.constant 264 : index
    %c0_81 = arith.constant 0 : index
    %221 = vector.load %arg3[%c264, %c0_81] : memref<360x128xf32, #tpu.memory_space<vmem>>, vector<32x64xf32>
    %c194 = arith.constant 194 : index
    %c0_82 = arith.constant 0 : index
    %222 = vector.load %arg3[%c194, %c0_82] : memref<360x128xf32, #tpu.memory_space<vmem>>, vector<1x64xf32>
    %c296 = arith.constant 296 : index
    %c0_83 = arith.constant 0 : index
    %223 = vector.load %arg3[%c296, %c0_83] : memref<360x128xf32, #tpu.memory_space<vmem>>, vector<64x32xf32>
    %c195 = arith.constant 195 : index
    %c0_84 = arith.constant 0 : index
    %224 = vector.load %arg3[%c195, %c0_84] : memref<360x128xf32, #tpu.memory_space<vmem>>, vector<1x32xf32>
    %c196 = arith.constant 196 : index
    %c0_85 = arith.constant 0 : index
    %225 = vector.load %arg3[%c196, %c0_85] : memref<360x128xf32, #tpu.memory_space<vmem>>, vector<1x32xf32>
    %c197 = arith.constant 197 : index
    %c0_86 = arith.constant 0 : index
    %226 = vector.load %arg3[%c197, %c0_86] : memref<360x128xf32, #tpu.memory_space<vmem>>, vector<1x32xf32>
    %c198 = arith.constant 198 : index
    %c0_87 = arith.constant 0 : index
    %227 = vector.load %arg3[%c198, %c0_87] : memref<360x128xf32, #tpu.memory_space<vmem>>, vector<1x32xf32>
    %c199 = arith.constant 199 : index
    %c0_88 = arith.constant 0 : index
    %228 = vector.load %arg3[%c199, %c0_88] : memref<360x128xf32, #tpu.memory_space<vmem>>, vector<1x32xf32>
    %cst_89 = arith.constant dense<0.000000e+00> : vector<8x96xf32>
    %229 = tpu.matmul %216, %217, %cst_89 {dimension_numbers = #tpu.dot_dimension_numbers<[1], [0], [0], [1], [0, 0, 1, 1], [], []>} : vector<8x32xf32>, vector<32x96xf32>, vector<8x96xf32> -> vector<8x96xf32>
    %230 = vector.broadcast %218 : vector<1x96xf32> to vector<8x96xf32>
    %231 = arith.addf %229, %230 : vector<8x96xf32>
    %232 = vector.extract_strided_slice %231 {offsets = [0, 0], sizes = [8, 32], strides = [1, 1]} : vector<8x96xf32> to vector<8x32xf32>
    %233 = vector.extract_strided_slice %231 {offsets = [0, 32], sizes = [8, 32], strides = [1, 1]} : vector<8x96xf32> to vector<8x32xf32>
    %234 = vector.extract_strided_slice %231 {offsets = [0, 64], sizes = [8, 32], strides = [1, 1]} : vector<8x96xf32> to vector<8x32xf32>
    %235 = vector.extract_strided_slice %232 {offsets = [0, 0], sizes = [8, 8], strides = [1, 1]} : vector<8x32xf32> to vector<8x8xf32>
    %236 = vector.extract_strided_slice %233 {offsets = [0, 0], sizes = [8, 8], strides = [1, 1]} : vector<8x32xf32> to vector<8x8xf32>
    %cst_90 = arith.constant dense<0.000000e+00> : vector<8x8xf32>
    %237 = tpu.matmul %235, %236, %cst_90 {dimension_numbers = #tpu.dot_dimension_numbers<[1], [1], [0], [0], [0, 0, 1, 0], [], []>} : vector<8x8xf32>, vector<8x8xf32>, vector<8x8xf32> -> vector<8x8xf32>
    %238 = arith.addf %237, %57 : vector<8x8xf32>
    %cst_91 = arith.constant dense<0xFF800000> : vector<8xf32>
    %239 = vector.multi_reduction <maximumf>, %238, %cst_91 [1] : vector<8x8xf32> to vector<8xf32>
    %240 = vector.shape_cast %239 : vector<8xf32> to vector<8x1xf32>
    %241 = vector.broadcast %240 : vector<8x1xf32> to vector<8x8xf32>
    %242 = arith.subf %238, %241 : vector<8x8xf32>
    %243 = math.exp %242 : vector<8x8xf32>
    %cst_92 = arith.constant dense<0.000000e+00> : vector<8xf32>
    %244 = vector.multi_reduction <add>, %243, %cst_92 [1] : vector<8x8xf32> to vector<8xf32>
    %245 = vector.shape_cast %244 : vector<8xf32> to vector<8x1xf32>
    %246 = tpu.reciprocal %245 {approx = true} : vector<8x1xf32> -> vector<8x1xf32>
    %247 = vector.broadcast %246 : vector<8x1xf32> to vector<8x8xf32>
    %248 = arith.mulf %243, %247 : vector<8x8xf32>
    %249 = vector.extract_strided_slice %234 {offsets = [0, 0], sizes = [8, 8], strides = [1, 1]} : vector<8x32xf32> to vector<8x8xf32>
    %cst_93 = arith.constant dense<0.000000e+00> : vector<8x8xf32>
    %250 = tpu.matmul %248, %249, %cst_93 {dimension_numbers = #tpu.dot_dimension_numbers<[1], [0], [0], [1], [0, 0, 1, 1], [], []>} : vector<8x8xf32>, vector<8x8xf32>, vector<8x8xf32> -> vector<8x8xf32>
    %c0_94 = arith.constant 0 : index
    %c0_95 = arith.constant 0 : index
    %251 = vector.load %arg5[%c0_94, %c0_95] : memref<8x32xf32, #tpu.memory_space<vmem>>, vector<8x8xf32>
    tpu.vector_store %arg5[%c0_94, %c0_95], %250 {strides = array<i32>} : memref<8x32xf32, #tpu.memory_space<vmem>>, vector<8x8xf32>,
    %252 = vector.extract_strided_slice %232 {offsets = [0, 8], sizes = [8, 8], strides = [1, 1]} : vector<8x32xf32> to vector<8x8xf32>
    %253 = vector.extract_strided_slice %233 {offsets = [0, 8], sizes = [8, 8], strides = [1, 1]} : vector<8x32xf32> to vector<8x8xf32>
    %cst_96 = arith.constant dense<0.000000e+00> : vector<8x8xf32>
    %254 = tpu.matmul %252, %253, %cst_96 {dimension_numbers = #tpu.dot_dimension_numbers<[1], [1], [0], [0], [0, 0, 1, 0], [], []>} : vector<8x8xf32>, vector<8x8xf32>, vector<8x8xf32> -> vector<8x8xf32>
    %255 = arith.addf %254, %57 : vector<8x8xf32>
    %cst_97 = arith.constant dense<0xFF800000> : vector<8xf32>
    %256 = vector.multi_reduction <maximumf>, %255, %cst_97 [1] : vector<8x8xf32> to vector<8xf32>
    %257 = vector.shape_cast %256 : vector<8xf32> to vector<8x1xf32>
    %258 = vector.broadcast %257 : vector<8x1xf32> to vector<8x8xf32>
    %259 = arith.subf %255, %258 : vector<8x8xf32>
    %260 = math.exp %259 : vector<8x8xf32>
    %cst_98 = arith.constant dense<0.000000e+00> : vector<8xf32>
    %261 = vector.multi_reduction <add>, %260, %cst_98 [1] : vector<8x8xf32> to vector<8xf32>
    %262 = vector.shape_cast %261 : vector<8xf32> to vector<8x1xf32>
    %263 = tpu.reciprocal %262 {approx = true} : vector<8x1xf32> -> vector<8x1xf32>
    %264 = vector.broadcast %263 : vector<8x1xf32> to vector<8x8xf32>
    %265 = arith.mulf %260, %264 : vector<8x8xf32>
    %266 = vector.extract_strided_slice %234 {offsets = [0, 8], sizes = [8, 8], strides = [1, 1]} : vector<8x32xf32> to vector<8x8xf32>
    %cst_99 = arith.constant dense<0.000000e+00> : vector<8x8xf32>
    %267 = tpu.matmul %265, %266, %cst_99 {dimension_numbers = #tpu.dot_dimension_numbers<[1], [0], [0], [1], [0, 0, 1, 1], [], []>} : vector<8x8xf32>, vector<8x8xf32>, vector<8x8xf32> -> vector<8x8xf32>
    %c0_100 = arith.constant 0 : index
    %c8_101 = arith.constant 8 : index
    %268 = vector.load %arg5[%c0_100, %c8_101] : memref<8x32xf32, #tpu.memory_space<vmem>>, vector<8x8xf32>
    tpu.vector_store %arg5[%c0_100, %c8_101], %267 {strides = array<i32>} : memref<8x32xf32, #tpu.memory_space<vmem>>, vector<8x8xf32>,
    %269 = vector.extract_strided_slice %232 {offsets = [0, 16], sizes = [8, 8], strides = [1, 1]} : vector<8x32xf32> to vector<8x8xf32>
    %270 = vector.extract_strided_slice %233 {offsets = [0, 16], sizes = [8, 8], strides = [1, 1]} : vector<8x32xf32> to vector<8x8xf32>
    %cst_102 = arith.constant dense<0.000000e+00> : vector<8x8xf32>
    %271 = tpu.matmul %269, %270, %cst_102 {dimension_numbers = #tpu.dot_dimension_numbers<[1], [1], [0], [0], [0, 0, 1, 0], [], []>} : vector<8x8xf32>, vector<8x8xf32>, vector<8x8xf32> -> vector<8x8xf32>
    %272 = arith.addf %271, %57 : vector<8x8xf32>
    %cst_103 = arith.constant dense<0xFF800000> : vector<8xf32>
    %273 = vector.multi_reduction <maximumf>, %272, %cst_103 [1] : vector<8x8xf32> to vector<8xf32>
    %274 = vector.shape_cast %273 : vector<8xf32> to vector<8x1xf32>
    %275 = vector.broadcast %274 : vector<8x1xf32> to vector<8x8xf32>
    %276 = arith.subf %272, %275 : vector<8x8xf32>
    %277 = math.exp %276 : vector<8x8xf32>
    %cst_104 = arith.constant dense<0.000000e+00> : vector<8xf32>
    %278 = vector.multi_reduction <add>, %277, %cst_104 [1] : vector<8x8xf32> to vector<8xf32>
    %279 = vector.shape_cast %278 : vector<8xf32> to vector<8x1xf32>
    %280 = tpu.reciprocal %279 {approx = true} : vector<8x1xf32> -> vector<8x1xf32>
    %281 = vector.broadcast %280 : vector<8x1xf32> to vector<8x8xf32>
    %282 = arith.mulf %277, %281 : vector<8x8xf32>
    %283 = vector.extract_strided_slice %234 {offsets = [0, 16], sizes = [8, 8], strides = [1, 1]} : vector<8x32xf32> to vector<8x8xf32>
    %cst_105 = arith.constant dense<0.000000e+00> : vector<8x8xf32>
    %284 = tpu.matmul %282, %283, %cst_105 {dimension_numbers = #tpu.dot_dimension_numbers<[1], [0], [0], [1], [0, 0, 1, 1], [], []>} : vector<8x8xf32>, vector<8x8xf32>, vector<8x8xf32> -> vector<8x8xf32>
    %c0_106 = arith.constant 0 : index
    %c16_107 = arith.constant 16 : index
    %285 = vector.load %arg5[%c0_106, %c16_107] : memref<8x32xf32, #tpu.memory_space<vmem>>, vector<8x8xf32>
    tpu.vector_store %arg5[%c0_106, %c16_107], %284 {strides = array<i32>} : memref<8x32xf32, #tpu.memory_space<vmem>>, vector<8x8xf32>,
    %286 = vector.extract_strided_slice %232 {offsets = [0, 24], sizes = [8, 8], strides = [1, 1]} : vector<8x32xf32> to vector<8x8xf32>
    %287 = vector.extract_strided_slice %233 {offsets = [0, 24], sizes = [8, 8], strides = [1, 1]} : vector<8x32xf32> to vector<8x8xf32>
    %cst_108 = arith.constant dense<0.000000e+00> : vector<8x8xf32>
    %288 = tpu.matmul %286, %287, %cst_108 {dimension_numbers = #tpu.dot_dimension_numbers<[1], [1], [0], [0], [0, 0, 1, 0], [], []>} : vector<8x8xf32>, vector<8x8xf32>, vector<8x8xf32> -> vector<8x8xf32>
    %289 = arith.addf %288, %57 : vector<8x8xf32>
    %cst_109 = arith.constant dense<0xFF800000> : vector<8xf32>
    %290 = vector.multi_reduction <maximumf>, %289, %cst_109 [1] : vector<8x8xf32> to vector<8xf32>
    %291 = vector.shape_cast %290 : vector<8xf32> to vector<8x1xf32>
    %292 = vector.broadcast %291 : vector<8x1xf32> to vector<8x8xf32>
    %293 = arith.subf %289, %292 : vector<8x8xf32>
    %294 = math.exp %293 : vector<8x8xf32>
    %cst_110 = arith.constant dense<0.000000e+00> : vector<8xf32>
    %295 = vector.multi_reduction <add>, %294, %cst_110 [1] : vector<8x8xf32> to vector<8xf32>
    %296 = vector.shape_cast %295 : vector<8xf32> to vector<8x1xf32>
    %297 = tpu.reciprocal %296 {approx = true} : vector<8x1xf32> -> vector<8x1xf32>
    %298 = vector.broadcast %297 : vector<8x1xf32> to vector<8x8xf32>
    %299 = arith.mulf %294, %298 : vector<8x8xf32>
    %300 = vector.extract_strided_slice %234 {offsets = [0, 24], sizes = [8, 8], strides = [1, 1]} : vector<8x32xf32> to vector<8x8xf32>
    %cst_111 = arith.constant dense<0.000000e+00> : vector<8x8xf32>
    %301 = tpu.matmul %299, %300, %cst_111 {dimension_numbers = #tpu.dot_dimension_numbers<[1], [0], [0], [1], [0, 0, 1, 1], [], []>} : vector<8x8xf32>, vector<8x8xf32>, vector<8x8xf32> -> vector<8x8xf32>
    %c0_112 = arith.constant 0 : index
    %c24_113 = arith.constant 24 : index
    %302 = vector.load %arg5[%c0_112, %c24_113] : memref<8x32xf32, #tpu.memory_space<vmem>>, vector<8x8xf32>
    tpu.vector_store %arg5[%c0_112, %c24_113], %301 {strides = array<i32>} : memref<8x32xf32, #tpu.memory_space<vmem>>, vector<8x8xf32>,
    %c0_114 = arith.constant 0 : index
    %c0_115 = arith.constant 0 : index
    %303 = vector.load %arg5[%c0_114, %c0_115] : memref<8x32xf32, #tpu.memory_space<vmem>>, vector<8x32xf32>
    %cst_116 = arith.constant dense<0.000000e+00> : vector<8x32xf32>
    %304 = tpu.matmul %303, %219, %cst_116 {dimension_numbers = #tpu.dot_dimension_numbers<[1], [0], [0], [1], [0, 0, 1, 1], [], []>} : vector<8x32xf32>, vector<32x32xf32>, vector<8x32xf32> -> vector<8x32xf32>
    %305 = vector.broadcast %220 : vector<1x32xf32> to vector<8x32xf32>
    %306 = arith.addf %304, %305 : vector<8x32xf32>
    %307 = arith.addf %216, %306 : vector<8x32xf32>
    %cst_117 = arith.constant dense<0.000000e+00> : vector<8xf32>
    %308 = vector.multi_reduction <add>, %307, %cst_117 [1] : vector<8x32xf32> to vector<8xf32>
    %309 = vector.shape_cast %308 : vector<8xf32> to vector<8x1xf32>
    %cst_118 = arith.constant 3.200000e+01 : f32
    %310 = vector.broadcast %cst_118 : f32 to vector<8x1xf32>
    %311 = arith.divf %309, %310 : vector<8x1xf32>
    %312 = arith.mulf %307, %307 : vector<8x32xf32>
    %cst_119 = arith.constant dense<0.000000e+00> : vector<8xf32>
    %313 = vector.multi_reduction <add>, %312, %cst_119 [1] : vector<8x32xf32> to vector<8xf32>
    %314 = vector.shape_cast %313 : vector<8xf32> to vector<8x1xf32>
    %cst_120 = arith.constant 3.200000e+01 : f32
    %315 = vector.broadcast %cst_120 : f32 to vector<8x1xf32>
    %316 = arith.divf %314, %315 : vector<8x1xf32>
    %317 = arith.mulf %311, %311 : vector<8x1xf32>
    %318 = arith.subf %316, %317 : vector<8x1xf32>
    %cst_121 = arith.constant 0.000000e+00 : f32
    %319 = vector.broadcast %cst_121 : f32 to vector<8x1xf32>
    %320 = arith.maximumf %318, %319 : vector<8x1xf32>
    %321 = vector.broadcast %311 : vector<8x1xf32> to vector<8x32xf32>
    %322 = arith.subf %307, %321 : vector<8x32xf32>
    %cst_122 = arith.constant 9.99999996E-13 : f32
    %323 = vector.broadcast %cst_122 : f32 to vector<8x1xf32>
    %324 = arith.addf %320, %323 : vector<8x1xf32>
    %325 = math.rsqrt %324 : vector<8x1xf32>
    %326 = vector.broadcast %325 : vector<8x1xf32> to vector<8x32xf32>
    %327 = arith.mulf %322, %326 : vector<8x32xf32>
    %328 = vector.broadcast %225 : vector<1x32xf32> to vector<8x32xf32>
    %329 = arith.mulf %327, %328 : vector<8x32xf32>
    %330 = vector.broadcast %226 : vector<1x32xf32> to vector<8x32xf32>
    %331 = arith.addf %329, %330 : vector<8x32xf32>
    %cst_123 = arith.constant dense<0.000000e+00> : vector<8x64xf32>
    %332 = tpu.matmul %331, %221, %cst_123 {dimension_numbers = #tpu.dot_dimension_numbers<[1], [0], [0], [1], [0, 0, 1, 1], [], []>} : vector<8x32xf32>, vector<32x64xf32>, vector<8x64xf32> -> vector<8x64xf32>
    %333 = vector.broadcast %222 : vector<1x64xf32> to vector<8x64xf32>
    %334 = arith.addf %332, %333 : vector<8x64xf32>
    %cst_124 = arith.constant 5.000000e-01 : f32
    %335 = vector.broadcast %cst_124 : f32 to vector<8x64xf32>
    %336 = arith.mulf %335, %334 : vector<8x64xf32>
    %cst_125 = arith.constant 4.471500e-02 : f32
    %337 = vector.broadcast %cst_125 : f32 to vector<8x64xf32>
    %338 = arith.mulf %337, %334 : vector<8x64xf32>
    %339 = arith.mulf %338, %334 : vector<8x64xf32>
    %340 = arith.mulf %339, %334 : vector<8x64xf32>
    %341 = arith.addf %334, %340 : vector<8x64xf32>
    %cst_126 = arith.constant 0.797884583 : f32
    %342 = vector.broadcast %cst_126 : f32 to vector<8x64xf32>
    %343 = arith.mulf %342, %341 : vector<8x64xf32>
    %344 = math.tanh %343 : vector<8x64xf32>
    %cst_127 = arith.constant 1.000000e+00 : f32
    %345 = vector.broadcast %cst_127 : f32 to vector<8x64xf32>
    %346 = arith.addf %345, %344 : vector<8x64xf32>
    %347 = arith.mulf %336, %346 : vector<8x64xf32>
    %cst_128 = arith.constant dense<0.000000e+00> : vector<8x32xf32>
    %348 = tpu.matmul %347, %223, %cst_128 {dimension_numbers = #tpu.dot_dimension_numbers<[1], [0], [0], [1], [0, 0, 1, 1], [], []>} : vector<8x64xf32>, vector<64x32xf32>, vector<8x32xf32> -> vector<8x32xf32>
    %349 = vector.broadcast %224 : vector<1x32xf32> to vector<8x32xf32>
    %350 = arith.addf %348, %349 : vector<8x32xf32>
    %351 = arith.addf %331, %350 : vector<8x32xf32>
    %cst_129 = arith.constant dense<0.000000e+00> : vector<8xf32>
    %352 = vector.multi_reduction <add>, %351, %cst_129 [1] : vector<8x32xf32> to vector<8xf32>
    %353 = vector.shape_cast %352 : vector<8xf32> to vector<8x1xf32>
    %cst_130 = arith.constant 3.200000e+01 : f32
    %354 = vector.broadcast %cst_130 : f32 to vector<8x1xf32>
    %355 = arith.divf %353, %354 : vector<8x1xf32>
    %356 = arith.mulf %351, %351 : vector<8x32xf32>
    %cst_131 = arith.constant dense<0.000000e+00> : vector<8xf32>
    %357 = vector.multi_reduction <add>, %356, %cst_131 [1] : vector<8x32xf32> to vector<8xf32>
    %358 = vector.shape_cast %357 : vector<8xf32> to vector<8x1xf32>
    %cst_132 = arith.constant 3.200000e+01 : f32
    %359 = vector.broadcast %cst_132 : f32 to vector<8x1xf32>
    %360 = arith.divf %358, %359 : vector<8x1xf32>
    %361 = arith.mulf %355, %355 : vector<8x1xf32>
    %362 = arith.subf %360, %361 : vector<8x1xf32>
    %cst_133 = arith.constant 0.000000e+00 : f32
    %363 = vector.broadcast %cst_133 : f32 to vector<8x1xf32>
    %364 = arith.maximumf %362, %363 : vector<8x1xf32>
    %365 = vector.broadcast %355 : vector<8x1xf32> to vector<8x32xf32>
    %366 = arith.subf %351, %365 : vector<8x32xf32>
    %cst_134 = arith.constant 9.99999996E-13 : f32
    %367 = vector.broadcast %cst_134 : f32 to vector<8x1xf32>
    %368 = arith.addf %364, %367 : vector<8x1xf32>
    %369 = math.rsqrt %368 : vector<8x1xf32>
    %370 = vector.broadcast %369 : vector<8x1xf32> to vector<8x32xf32>
    %371 = arith.mulf %366, %370 : vector<8x32xf32>
    %372 = vector.broadcast %227 : vector<1x32xf32> to vector<8x32xf32>
    %373 = arith.mulf %371, %372 : vector<8x32xf32>
    %374 = vector.broadcast %228 : vector<1x32xf32> to vector<8x32xf32>
    %375 = arith.addf %373, %374 : vector<8x32xf32>
    %c20 = arith.constant 20 : index
    %c0_135 = arith.constant 0 : index
    %376 = vector.load %arg3[%c20, %c0_135] : memref<360x128xf32, #tpu.memory_space<vmem>>, vector<2x32xf32>
    %c20_136 = arith.constant 20 : index
    %c32_137 = arith.constant 32 : index
    %377 = vector.load %arg3[%c20_136, %c32_137] : memref<360x128xf32, #tpu.memory_space<vmem>>, vector<2x1xf32>
    %cst_138 = arith.constant dense<0.000000e+00> : vector<2x8xf32>
    %378 = tpu.matmul %376, %375, %cst_138 {dimension_numbers = #tpu.dot_dimension_numbers<[1], [1], [0], [0], [0, 0, 1, 0], [], []>} : vector<2x32xf32>, vector<8x32xf32>, vector<2x8xf32> -> vector<2x8xf32>
    %379 = vector.broadcast %377 : vector<2x1xf32> to vector<2x8xf32>
    %380 = arith.addf %378, %379 : vector<2x8xf32>
    %cst_139 = arith.constant dense<0xFF800000> : vector<2xf32>
    %381 = vector.multi_reduction <maximumf>, %380, %cst_139 [1] : vector<2x8xf32> to vector<2xf32>
    %382 = vector.shape_cast %381 : vector<2xf32> to vector<2x1xf32>
    %383 = vector.broadcast %382 : vector<2x1xf32> to vector<2x8xf32>
    %384 = arith.subf %380, %383 : vector<2x8xf32>
    %385 = math.exp %384 : vector<2x8xf32>
    %cst_140 = arith.constant dense<0.000000e+00> : vector<2xf32>
    %386 = vector.multi_reduction <add>, %385, %cst_140 [1] : vector<2x8xf32> to vector<2xf32>
    %387 = vector.shape_cast %386 : vector<2xf32> to vector<2x1xf32>
    %388 = math.log %387 : vector<2x1xf32>
    %389 = vector.broadcast %388 : vector<2x1xf32> to vector<2x8xf32>
    %390 = arith.subf %384, %389 : vector<2x8xf32>
    %c0_141 = arith.constant 0 : index
    %c0_142 = arith.constant 0 : index
    %391 = vector.load %arg4[%c0_141, %c0_142] : memref<2x8xf32, #tpu.memory_space<vmem>>, vector<2x8xf32>
    tpu.vector_store %arg4[%c0_141, %c0_142], %390 {strides = array<i32>} : memref<2x8xf32, #tpu.memory_space<vmem>>, vector<2x8xf32>,
    return
  }
}

</mosaic_0001>

<llo_original>
// kernel: tpu_custom_call.1
$region0: #{tpu_custom_call.1}
  #allocation0 [shape = 'u32[]', space=smem, size = 0x4, offset = 0x4, fixed_abs, tag = 'smem constant byte address 0x4 - core index']
  #allocation1 [shape = 'u32[144,128]{1,0:T(1,128)}', space=vmem, size = 0x12000, scoped, tag = 'internal scratch']
  #allocation2 [shape = 'f32[8,32]{1,0:T(8,128)}', space=vmem, size = 0x1000, scoped, tag = 'scratch operand']
  %s0 = inlined_call_operand.vmem [shape: s32[8,2], index: 0, kind: input, shape index: {}]
  %s1 = inlined_call_operand.vmem [shape: f32[1,8], index: 1, kind: input, shape index: {}]
  %s2 = inlined_call_operand.vmem [shape: f32[100,32], index: 2, kind: input, shape index: {}]
  %s3 = inlined_call_operand.hbm [shape: f32[360,128], index: 3, kind: input, shape index: {}]
  %s4 = inlined_call_operand.hbm [shape: f32[2,8], index: 4, kind: output, shape index: {}]
  %s5 = sld [smem:[#allocation0]]
  $region30: #{tpu_custom_call.1} parent=0
    _
  %s7 = ssub.s32 1, %s5
  %s8 = scalar_select 0, %s7, %s5
  $region1: #{tpu_custom_call.1} parent=0
    #allocation3 [shape = 'u8[184320]{0}', space=vmem, size = 0x2d000, scoped, tag = 'input window, operand 3, single buffered']
    #allocation4 [shape = 's32[1]{0}', space=sflag, size = 0x4, scoped, tag = 'scoped memory for tpu_custom_call.1']
    #allocation5 [shape = 's32[1]{0}', space=sflag, size = 0x4, scoped, tag = 'scoped memory for tpu_custom_call.1']
    #allocation6 [shape = 'u8[1024]{0}', space=vmem, size = 0x400, scoped, tag = 'output window, operand 0, single buffered']
    %9 = vsyncpa [#allocation4], 0
    %10 = vsyncpa [#allocation5], 0
    // Predicated region
    $region2: #{tpu_custom_call.1} parent=1 // pred_check
      _
    $region3: #{tpu_custom_call.1} parent=1 // pred_check_branch
      %12 = sbr.rel (0) target = $region5
    $region4: #{tpu_custom_call.1} parent=1 // pred_region
      _
    $region5: #{tpu_custom_call.1} parent=1 // pred_fallthru
      _
    // Predicated region
    $region6: #{tpu_custom_call.1} parent=1 // pred_check
      _
    $region7: #{tpu_custom_call.1} parent=1 // pred_check_branch
      %14 = sbr.rel (0) target = $region9
    $region8: #{tpu_custom_call.1} parent=1 // pred_region
      _
    $region9: #{tpu_custom_call.1} parent=1 // pred_fallthru
      _
    // Predicated region
    $region10: #{tpu_custom_call.1} parent=1 // pred_check
      _
    $region11: #{tpu_custom_call.1} parent=1 // pred_check_branch
      %16 = sbr.rel (0) target = $region13
    $region12: #{tpu_custom_call.1} parent=1 // pred_region
      _
    $region13: #{tpu_custom_call.1} parent=1 // pred_fallthru
      _
    // Predicated region
    $region14: #{tpu_custom_call.1} parent=1 // pred_check
      _
    $region15: #{tpu_custom_call.1} parent=1 // pred_check_branch
      %18 = sbr.rel (0) target = $region17
    $region16: #{tpu_custom_call.1} parent=1 // pred_region
      %s20 = ssub.s32 5760, 5760
      %21 = vsyncadd [#allocation4], %s20
      %s22 = sshll.u32 [#allocation3], 4
      %s23 = int_to_ptr.vmem [resolvable:$true] %s22
      %28 = dma.hbm_to_vmem [thread:$0]  %s3, 5760, %s23, [#allocation4], 128, 128, 8
    $region17: #{tpu_custom_call.1} parent=1 // pred_fallthru
      _
    // Predicated region
    $region18: #{tpu_custom_call.1} parent=1 // pred_check
      _
    $region19: #{tpu_custom_call.1} parent=1 // pred_check_branch
      %30 = sbr.rel (0) target = $region21
    $region20: #{tpu_custom_call.1} parent=1 // pred_region
      %31 = dma.done [#allocation4], 5760
    $region21: #{tpu_custom_call.1} parent=1 // pred_fallthru
      _
    %v32 = vld [vmem:[%s0] sm:$0xff]
    %v33 = vcvt.s32.f32 %v32
    %v34 = vlaneseq
    %v35 = vand.u32 %v34, 127
    %36 = vset.pattern.permute.xlu0 0
    %37 = vperm.xlu0 %36, %v32
    %v38 = vpop.permute.xlu0 %37
    %vm39 = vcmp.eq.s32.totalorder %v38, %v35
    %v40 = vsel %vm39, 1, 0
    %v41 = vcvt.s32.f32 %v40
    %v42 = vld [vmem:[%s2] sm:$0xff]
    %v43 = vld [vmem:[%s2 + $0x8] sm:$0xff]
    %v44 = vld [vmem:[%s2 + $0x10] sm:$0xff]
    %v45 = vld [vmem:[%s2 + $0x18] sm:$0xff]
    %v46 = vld [vmem:[%s2 + $0x20] sm:$0xff]
    %v47 = vld [vmem:[%s2 + $0x28] sm:$0xff]
    %v48 = vld [vmem:[%s2 + $0x30] sm:$0xff]
    %v49 = vld [vmem:[%s2 + $0x38] sm:$0xff]
    %v50 = vld [vmem:[%s2 + $0x40] sm:$0xff]
    %v51 = vld [vmem:[%s2 + $0x48] sm:$0xff]
    %v52 = vld [vmem:[%s2 + $0x50] sm:$0xff]
    %v53 = vld [vmem:[%s2 + $0x58] sm:$0xff]
    %v54 = vld [vmem:[%s2 + $0x60] sm:$0xf]
    %v55 = vld [vmem:[#allocation3] sm:$0xff]
    %v56 = vld [vmem:[#allocation3 + $0x10] sm:$0x1]
    %v57 = vld [vmem:[#allocation3 + $0x11] sm:$0x1]
    %v58 = vsub.f32 1.0, %v33
    %v59 = vlaneseq
    %v60 = vshrl.u32 %v59, 7
    %v61 = vsub.s32 0, %v60
    %v62 = vrot.slane %v56, %v61
    %64 = vset.pattern.permute.xlu0 1
    %65 = vperm.xlu0 %64, %v58
    %v66 = vpop.permute.xlu0 %65
    %v68 = vmul.f32 %v62, %v66
    %v69 = vlaneseq
    %v70 = vshrl.u32 %v69, 7
    %v71 = vsub.s32 0, %v70
    %v72 = vrot.slane %v57, %v71
    %74 = vset.pattern.permute.xlu0 1
    %75 = vperm.xlu0 %74, %v33
    %v76 = vpop.permute.xlu0 %75
    %v78 = vmul.f32 %v72, %v76
    %v79 = vadd.f32 %v68, %v78
    %vm80 = vcmask 818176
    %v82 = vsel %vm80, %v41, 0
    %vm84 = vcmask 1043456
    %v86 = vsel %vm84, %v54, 0
    %88 = vmatprep.subr.mxu0 0.0
    %89 = vmatpush1.msra.mxu0 0.0
    %90 = vmatprep.subr.mxu0 0.0
    %91 = vmatpush1.msra.mxu0 0.0
    %92 = vmatprep.subr.mxu0 0.0
    %93 = vmatpush1.msra.mxu0 0.0
    %94 = vmatprep.subr.mxu0 0.0
    %95 = vmatpush1.msra.mxu0 %v86
    %96 = vmatprep.subr.mxu0 0.0
    %97 = vmatpush1.msra.mxu0 %v53
    %98 = vmatprep.subr.mxu0 0.0
    %99 = vmatpush1.msra.mxu0 %v52
    %100 = vmatprep.subr.mxu0 0.0
    %101 = vmatpush1.msra.mxu0 %v51
    %102 = vmatprep.subr.mxu0 0.0
    %103 = vmatpush1.msra.mxu0 %v50
    %104 = vmatprep.subr.mxu0 0.0
    %105 = vmatpush1.msra.mxu0 %v49
    %106 = vmatprep.subr.mxu0 0.0
    %107 = vmatpush1.msra.mxu0 %v48
    %108 = vmatprep.subr.mxu0 0.0
    %109 = vmatpush1.msra.mxu0 %v47
    %110 = vmatprep.subr.mxu0 0.0
    %111 = vmatpush1.msra.mxu0 %v46
    %112 = vmatprep.subr.mxu0 0.0
    %113 = vmatpush1.msra.mxu0 %v45
    %114 = vmatprep.subr.mxu0 0.0
    %115 = vmatpush1.msra.mxu0 %v44
    %116 = vmatprep.subr.mxu0 0.0
    %117 = vmatpush1.msra.mxu0 %v43
    %118 = vmatprep.subr.mxu0 0.0
    %119 = vmatpush1.msra.mxu0 %v42
    %120 = vmatprep.subr.mxu0 0.0
    %121 = vmatpush2.msra.mxu0 0.0
    %122 = vmatprep.subr.mxu0 0.0
    %123 = vmatpush2.msra.mxu0 0.0
    %124 = vmatprep.subr.mxu0 0.0
    %125 = vmatpush2.msra.mxu0 0.0
    %126 = vmatprep.subr.mxu0 0.0
    %127 = vmatpush2.msra.mxu0 0.0
    %128 = vmatprep.subr.mxu0 0.0
    %129 = vmatpush2.msra.mxu0 0.0
    %130 = vmatprep.subr.mxu0 0.0
    %131 = vmatpush2.msra.mxu0 0.0
    %132 = vmatprep.subr.mxu0 0.0
    %133 = vmatpush2.msra.mxu0 0.0
    %134 = vmatprep.subr.mxu0 0.0
    %135 = vmatpush2.msra.mxu0 0.0
    %136 = vmatprep.subr.mxu0 0.0
    %137 = vmatpush2.msra.mxu0 0.0
    %138 = vmatprep.subr.mxu0 0.0
    %139 = vmatpush2.msra.mxu0 0.0
    %140 = vmatprep.subr.mxu0 0.0
    %141 = vmatpush2.msra.mxu0 0.0
    %142 = vmatprep.subr.mxu0 0.0
    %143 = vmatpush2.msra.mxu0 0.0
    %144 = vmatprep.subr.mxu0 0.0
    %145 = vmatpush2.msra.mxu0 0.0
    %146 = vmatprep.subr.mxu0 0.0
    %147 = vmatpush2.msra.mxu0 0.0
    %148 = vmatprep.subr.mxu0 0.0
    %149 = vmatpush2.msra.mxu0 0.0
    %150 = vmatprep.subr.mxu0 0.0
    %151 = vmatpush2.msra.mxu0 0.0
    %152 = vmatprep.mubr.f32.mxu0 0.0
    %153 = vmatmul.mubr.f32.gmra.mxu0 %v82
    %v154 = vpop.f32.mrf.mxu0
    %v155 = vadd.f32 %v55, %v154
    %v156 = vpop.f32.mrf.mxu0
    %157 = vdwg.mxu0
    %v158 = vadd.f32 %v155, %v79
    %v159 = vld [vmem:[#allocation3 + $0x12] sm:$0x1]
    %v160 = vld [vmem:[#allocation3 + $0x13] sm:$0x1]
    %vm161 = vcmask 261120
    %v162 = vsel %vm161, %v158, 0.0
    %163 = vadd.xlane.f32.xlu0 %v162
    %v164 = vpop.xlane.xlu0 %163
    %v165 = vrcp.pop 32.0
    %v166 = vmul.f32 %v164, %v165
    %v167 = vmul.f32 %v158, %v158
    %v168 = vsel %vm161, %v167, 0.0
    %169 = vadd.xlane.f32.xlu0 %v168
    %v170 = vpop.xlane.xlu0 %169
    %v171 = vmul.f32 %v170, %v165
    %v172 = vmul.f32 %v166, %v166
    %v173 = vsub.f32 %v171, %v172
    %v174 = vmax.f32 %v173, 0.0
    %v175 = vsub.f32 %v158, %v166
    %v176 = vadd.f32 %v174, 1e-12
    %v177 = vrsqrt.pop %v176
    %v178 = vmul.f32 %v175, %v177
    %v179 = vlaneseq
    %v180 = vshrl.u32 %v179, 7
    %v181 = vsub.s32 0, %v180
    %v182 = vrot.slane %v159, %v181
    %v183 = vmul.f32 %v178, %v182
    %v184 = vlaneseq
    %v185 = vshrl.u32 %v184, 7
    %v186 = vsub.s32 0, %v185
    %v187 = vrot.slane %v160, %v186
    %v188 = vadd.f32 %v183, %v187
    %v189 = vld [vmem:[%s1] sm:$0x1]
    %v190 = vsub.f32 1.0, %v189
    %v191 = vmul.f32 %v190, -10000.0
    %v193 = vlaneseq
    %v194 = vshrl.u32 %v193, 7
    %v195 = vsub.s32 0, %v194
    %v196 = vrot.slane %v191, %v195
    %v198 = vld [vmem:[#allocation3 + $0x20] sm:$0xff]
    %v199 = vld [vmem:[#allocation3 + $0x28] sm:$0xff]
    %v200 = vld [vmem:[#allocation3 + $0x30] sm:$0xff]
    %v201 = vld [vmem:[#allocation3 + $0x38] sm:$0xff]
    %v202 = vld [vmem:[#allocation3 + $0x18] sm:$0x1]
    %v203 = vld [vmem:[#allocation3 + $0x40] sm:$0xff]
    %v204 = vld [vmem:[#allocation3 + $0x48] sm:$0xff]
    %v205 = vld [vmem:[#allocation3 + $0x50] sm:$0xff]
    %v206 = vld [vmem:[#allocation3 + $0x58] sm:$0xff]
    %v207 = vld [vmem:[#allocation3 + $0x19] sm:$0x1]
    %v208 = vld [vmem:[#allocation3 + $0x60] sm:$0xff]
    %v209 = vld [vmem:[#allocation3 + $0x68] sm:$0xff]
    %v210 = vld [vmem:[#allocation3 + $0x70] sm:$0xff]
    %v211 = vld [vmem:[#allocation3 + $0x78] sm:$0xff]
    %v212 = vld [vmem:[#allocation3 + $0x1a] sm:$0x1]
    %v213 = vld [vmem:[#allocation3 + $0x80] sm:$0xff]
    %v214 = vld [vmem:[#allocation3 + $0x88] sm:$0xff]
    %v215 = vld [vmem:[#allocation3 + $0x90] sm:$0xff]
    %v216 = vld [vmem:[#allocation3 + $0x98] sm:$0xff]
    %v217 = vld [vmem:[#allocation3 + $0xa0] sm:$0xff]
    %v218 = vld [vmem:[#allocation3 + $0xa8] sm:$0xff]
    %v219 = vld [vmem:[#allocation3 + $0xb0] sm:$0xff]
    %v220 = vld [vmem:[#allocation3 + $0xb8] sm:$0xff]
    %v221 = vld [vmem:[#allocation3 + $0x1b] sm:$0x1]
    %v222 = vld [vmem:[#allocation3 + $0x1c] sm:$0x1]
    %v223 = vld [vmem:[#allocation3 + $0x1d] sm:$0x1]
    %v224 = vld [vmem:[#allocation3 + $0x1e] sm:$0x1]
    %v225 = vld [vmem:[#allocation3 + $0x1f] sm:$0x1]
    %v226 = vlaneseq
    %v227 = vshrl.u32 %v226, 7
    %v228 = vsub.s32 0, %v227
    %v229 = vrot.slane %v202, %v228
    %v231 = vsel %vm161, %v188, 0
    %233 = vmatprep.subr.mxu0 0.0
    %234 = vmatpush1.msra.mxu0 0.0
    %235 = vmatprep.subr.mxu0 0.0
    %236 = vmatpush1.msra.mxu0 0.0
    %237 = vmatprep.subr.mxu0 0.0
    %238 = vmatpush1.msra.mxu0 0.0
    %239 = vmatprep.subr.mxu0 0.0
    %240 = vmatpush1.msra.mxu0 0.0
    %241 = vmatprep.subr.mxu0 0.0
    %242 = vmatpush1.msra.mxu0 0.0
    %243 = vmatprep.subr.mxu0 0.0
    %244 = vmatpush1.msra.mxu0 0.0
    %245 = vmatprep.subr.mxu0 0.0
    %246 = vmatpush1.msra.mxu0 0.0
    %247 = vmatprep.subr.mxu0 0.0
    %248 = vmatpush1.msra.mxu0 0.0
    %249 = vmatprep.subr.mxu0 0.0
    %250 = vmatpush1.msra.mxu0 0.0
    %251 = vmatprep.subr.mxu0 0.0
    %252 = vmatpush1.msra.mxu0 0.0
    %253 = vmatprep.subr.mxu0 0.0
    %254 = vmatpush1.msra.mxu0 0.0
    %255 = vmatprep.subr.mxu0 0.0
    %256 = vmatpush1.msra.mxu0 0.0
    %257 = vmatprep.subr.mxu0 0.0
    %258 = vmatpush1.msra.mxu0 %v201
    %259 = vmatprep.subr.mxu0 0.0
    %260 = vmatpush1.msra.mxu0 %v200
    %261 = vmatprep.subr.mxu0 0.0
    %262 = vmatpush1.msra.mxu0 %v199
    %263 = vmatprep.subr.mxu0 0.0
    %264 = vmatpush1.msra.mxu0 %v198
    %265 = vmatprep.subr.mxu0 0.0
    %266 = vmatpush2.msra.mxu0 0.0
    %267 = vmatprep.subr.mxu0 0.0
    %268 = vmatpush2.msra.mxu0 0.0
    %269 = vmatprep.subr.mxu0 0.0
    %270 = vmatpush2.msra.mxu0 0.0
    %271 = vmatprep.subr.mxu0 0.0
    %272 = vmatpush2.msra.mxu0 0.0
    %273 = vmatprep.subr.mxu0 0.0
    %274 = vmatpush2.msra.mxu0 0.0
    %275 = vmatprep.subr.mxu0 0.0
    %276 = vmatpush2.msra.mxu0 0.0
    %277 = vmatprep.subr.mxu0 0.0
    %278 = vmatpush2.msra.mxu0 0.0
    %279 = vmatprep.subr.mxu0 0.0
    %280 = vmatpush2.msra.mxu0 0.0
    %281 = vmatprep.subr.mxu0 0.0
    %282 = vmatpush2.msra.mxu0 0.0
    %283 = vmatprep.subr.mxu0 0.0
    %284 = vmatpush2.msra.mxu0 0.0
    %285 = vmatprep.subr.mxu0 0.0
    %286 = vmatpush2.msra.mxu0 0.0
    %287 = vmatprep.subr.mxu0 0.0
    %288 = vmatpush2.msra.mxu0 0.0
    %289 = vmatprep.subr.mxu0 0.0
    %290 = vmatpush2.msra.mxu0 0.0
    %291 = vmatprep.subr.mxu0 0.0
    %292 = vmatpush2.msra.mxu0 0.0
    %293 = vmatprep.subr.mxu0 0.0
    %294 = vmatpush2.msra.mxu0 0.0
    %295 = vmatprep.subr.mxu0 0.0
    %296 = vmatpush2.msra.mxu0 0.0
    %297 = vmatprep.mubr.f32.mxu0 0.0
    %298 = vmatmul.mubr.f32.gmra.mxu0 %v231
    %v299 = vpop.f32.mrf.mxu0
    %v300 = vadd.f32 %v229, %v299
    %v301 = vpop.f32.mrf.mxu0
    %302 = vdwg.mxu0
    %304 = vrot.lane.b32.xlu0 %v300, 96
    %v305 = vpop.permute.xlu0 %304
    %vm306 = vcmask 64512
    %v307 = vsel %vm306, %v300, 0
    %v309 = vsel %vm306, %v305, 0
    %311 = vmatprep.subr.mxu0 0.0
    %312 = vmatpush1.xpose.msra.mxu0 0.0
    %313 = vmatprep.subr.mxu0 0.0
    %314 = vmatpush1.xpose.msra.mxu0 0.0
    %315 = vmatprep.subr.mxu0 0.0
    %316 = vmatpush1.xpose.msra.mxu0 0.0
    %317 = vmatprep.subr.mxu0 0.0
    %318 = vmatpush1.xpose.msra.mxu0 0.0
    %319 = vmatprep.subr.mxu0 0.0
    %320 = vmatpush1.xpose.msra.mxu0 0.0
    %321 = vmatprep.subr.mxu0 0.0
    %322 = vmatpush1.xpose.msra.mxu0 0.0
    %323 = vmatprep.subr.mxu0 0.0
    %324 = vmatpush1.xpose.msra.mxu0 0.0
    %325 = vmatprep.subr.mxu0 0.0
    %326 = vmatpush1.xpose.msra.mxu0 0.0
    %327 = vmatprep.subr.mxu0 0.0
    %328 = vmatpush1.xpose.msra.mxu0 0.0
    %329 = vmatprep.subr.mxu0 0.0
    %330 = vmatpush1.xpose.msra.mxu0 0.0
    %331 = vmatprep.subr.mxu0 0.0
    %332 = vmatpush1.xpose.msra.mxu0 0.0
    %333 = vmatprep.subr.mxu0 0.0
    %334 = vmatpush1.xpose.msra.mxu0 0.0
    %335 = vmatprep.subr.mxu0 0.0
    %336 = vmatpush1.xpose.msra.mxu0 0.0
    %337 = vmatprep.subr.mxu0 0.0
    %338 = vmatpush1.xpose.msra.mxu0 0.0
    %339 = vmatprep.subr.mxu0 0.0
    %340 = vmatpush1.xpose.msra.mxu0 0.0
    %341 = vmatprep.subr.mxu0 0.0
    %342 = vmatpush1.xpose.msra.mxu0 %v309
    %343 = vmatprep.subr.mxu0 0.0
    %344 = vmatpush2.xpose.msra.mxu0 0.0
    %345 = vmatprep.subr.mxu0 0.0
    %346 = vmatpush2.xpose.msra.mxu0 0.0
    %347 = vmatprep.subr.mxu0 0.0
    %348 = vmatpush2.xpose.msra.mxu0 0.0
    %349 = vmatprep.subr.mxu0 0.0
    %350 = vmatpush2.xpose.msra.mxu0 0.0
    %351 = vmatprep.subr.mxu0 0.0
    %352 = vmatpush2.xpose.msra.mxu0 0.0
    %353 = vmatprep.subr.mxu0 0.0
    %354 = vmatpush2.xpose.msra.mxu0 0.0
    %355 = vmatprep.subr.mxu0 0.0
    %356 = vmatpush2.xpose.msra.mxu0 0.0
    %357 = vmatprep.subr.mxu0 0.0
    %358 = vmatpush2.xpose.msra.mxu0 0.0
    %359 = vmatprep.subr.mxu0 0.0
    %360 = vmatpush2.xpose.msra.mxu0 0.0
    %361 = vmatprep.subr.mxu0 0.0
    %362 = vmatpush2.xpose.msra.mxu0 0.0
    %363 = vmatprep.subr.mxu0 0.0
    %364 = vmatpush2.xpose.msra.mxu0 0.0
    %365 = vmatprep.subr.mxu0 0.0
    %366 = vmatpush2.xpose.msra.mxu0 0.0
    %367 = vmatprep.subr.mxu0 0.0
    %368 = vmatpush2.xpose.msra.mxu0 0.0
    %369 = vmatprep.subr.mxu0 0.0
    %370 = vmatpush2.xpose.msra.mxu0 0.0
    %371 = vmatprep.subr.mxu0 0.0
    %372 = vmatpush2.xpose.msra.mxu0 0.0
    %373 = vmatprep.subr.mxu0 0.0
    %374 = vmatpush2.xpose.msra.mxu0 0.0
    %375 = vmatprep.mubr.f32.mxu0 0.0
    %376 = vmatmul.mubr.f32.gmra.mxu0 %v307
    %v377 = vpop.f32.mrf.mxu0
    %v378 = vadd.f32 %v196, %v377
    %v379 = vpop.f32.mrf.mxu0
    %380 = vdwg.mxu0
    %v381 = vsel %vm306, %v378, -inf
    %382 = vmax.xlane.f32.xlu0 %v381
    %v383 = vpop.xlane.xlu0 %382
    %v384 = vsub.f32 %v378, %v383
    %v385 = vmul.f32 %v384, 1.442695
    %v386 = vpow.pop %v385
    %v387 = vsel %vm306, %v386, 0.0
    %388 = vadd.xlane.f32.xlu0 %v387
    %v389 = vpop.xlane.xlu0 %388
    %v390 = vrcp.pop %v389
    %v391 = vmul.f32 %v386, %v390
    %392 = vrot.lane.b32.xlu0 %v300, 64
    %v393 = vpop.permute.xlu0 %392
    %v396 = vsel %vm306, %v391, 0
    %398 = vmatprep.subr.mxu0 0.0
    %399 = vmatpush1.msra.mxu0 0.0
    %400 = vmatprep.subr.mxu0 0.0
    %401 = vmatpush1.msra.mxu0 0.0
    %402 = vmatprep.subr.mxu0 0.0
    %403 = vmatpush1.msra.mxu0 0.0
    %404 = vmatprep.subr.mxu0 0.0
    %405 = vmatpush1.msra.mxu0 0.0
    %406 = vmatprep.subr.mxu0 0.0
    %407 = vmatpush1.msra.mxu0 0.0
    %408 = vmatprep.subr.mxu0 0.0
    %409 = vmatpush1.msra.mxu0 0.0
    %410 = vmatprep.subr.mxu0 0.0
    %411 = vmatpush1.msra.mxu0 0.0
    %412 = vmatprep.subr.mxu0 0.0
    %413 = vmatpush1.msra.mxu0 0.0
    %414 = vmatprep.subr.mxu0 0.0
    %415 = vmatpush1.msra.mxu0 0.0
    %416 = vmatprep.subr.mxu0 0.0
    %417 = vmatpush1.msra.mxu0 0.0
    %418 = vmatprep.subr.mxu0 0.0
    %419 = vmatpush1.msra.mxu0 0.0
    %420 = vmatprep.subr.mxu0 0.0
    %421 = vmatpush1.msra.mxu0 0.0
    %422 = vmatprep.subr.mxu0 0.0
    %423 = vmatpush1.msra.mxu0 0.0
    %424 = vmatprep.subr.mxu0 0.0
    %425 = vmatpush1.msra.mxu0 0.0
    %426 = vmatprep.subr.mxu0 0.0
    %427 = vmatpush1.msra.mxu0 0.0
    %428 = vmatprep.subr.mxu0 0.0
    %429 = vmatpush1.msra.mxu0 %v393
    %430 = vmatprep.subr.mxu0 0.0
    %431 = vmatpush2.msra.mxu0 0.0
    %432 = vmatprep.subr.mxu0 0.0
    %433 = vmatpush2.msra.mxu0 0.0
    %434 = vmatprep.subr.mxu0 0.0
    %435 = vmatpush2.msra.mxu0 0.0
    %436 = vmatprep.subr.mxu0 0.0
    %437 = vmatpush2.msra.mxu0 0.0
    %438 = vmatprep.subr.mxu0 0.0
    %439 = vmatpush2.msra.mxu0 0.0
    %440 = vmatprep.subr.mxu0 0.0
    %441 = vmatpush2.msra.mxu0 0.0
    %442 = vmatprep.subr.mxu0 0.0
    %443 = vmatpush2.msra.mxu0 0.0
    %444 = vmatprep.subr.mxu0 0.0
    %445 = vmatpush2.msra.mxu0 0.0
    %446 = vmatprep.subr.mxu0 0.0
    %447 = vmatpush2.msra.mxu0 0.0
    %448 = vmatprep.subr.mxu0 0.0
    %449 = vmatpush2.msra.mxu0 0.0
    %450 = vmatprep.subr.mxu0 0.0
    %451 = vmatpush2.msra.mxu0 0.0
    %452 = vmatprep.subr.mxu0 0.0
    %453 = vmatpush2.msra.mxu0 0.0
    %454 = vmatprep.subr.mxu0 0.0
    %455 = vmatpush2.msra.mxu0 0.0
    %456 = vmatprep.subr.mxu0 0.0
    %457 = vmatpush2.msra.mxu0 0.0
    %458 = vmatprep.subr.mxu0 0.0
    %459 = vmatpush2.msra.mxu0 0.0
    %460 = vmatprep.subr.mxu0 0.0
    %461 = vmatpush2.msra.mxu0 0.0
    %462 = vmatprep.mubr.f32.mxu0 0.0
    %463 = vmatmul.mubr.f32.gmra.mxu0 %v396
    %v464 = vpop.f32.mrf.mxu0
    %v465 = vadd.f32 0.0, %v464
    %v466 = vpop.f32.mrf.mxu0
    %467 = vdwg.mxu0
    %468 = vst.msk [vmem:[#allocation2] sm:$0xff] %vm306, %v465
    %469 = vrot.lane.b32.xlu0 %v300, 120
    %v470 = vpop.permute.xlu0 %469
    %471 = vrot.lane.b32.xlu0 %v300, 88
    %v472 = vpop.permute.xlu0 %471
    %v473 = vsel %vm306, %v470, 0
    %v475 = vsel %vm306, %v472, 0
    %477 = vmatprep.subr.mxu0 0.0
    %478 = vmatpush1.xpose.msra.mxu0 0.0
    %479 = vmatprep.subr.mxu0 0.0
    %480 = vmatpush1.xpose.msra.mxu0 0.0
    %481 = vmatprep.subr.mxu0 0.0
    %482 = vmatpush1.xpose.msra.mxu0 0.0
    %483 = vmatprep.subr.mxu0 0.0
    %484 = vmatpush1.xpose.msra.mxu0 0.0
    %485 = vmatprep.subr.mxu0 0.0
    %486 = vmatpush1.xpose.msra.mxu0 0.0
    %487 = vmatprep.subr.mxu0 0.0
    %488 = vmatpush1.xpose.msra.mxu0 0.0
    %489 = vmatprep.subr.mxu0 0.0
    %490 = vmatpush1.xpose.msra.mxu0 0.0
    %491 = vmatprep.subr.mxu0 0.0
    %492 = vmatpush1.xpose.msra.mxu0 0.0
    %493 = vmatprep.subr.mxu0 0.0
    %494 = vmatpush1.xpose.msra.mxu0 0.0
    %495 = vmatprep.subr.mxu0 0.0
    %496 = vmatpush1.xpose.msra.mxu0 0.0
    %497 = vmatprep.subr.mxu0 0.0
    %498 = vmatpush1.xpose.msra.mxu0 0.0
    %499 = vmatprep.subr.mxu0 0.0
    %500 = vmatpush1.xpose.msra.mxu0 0.0
    %501 = vmatprep.subr.mxu0 0.0
    %502 = vmatpush1.xpose.msra.mxu0 0.0
    %503 = vmatprep.subr.mxu0 0.0
    %504 = vmatpush1.xpose.msra.mxu0 0.0
    %505 = vmatprep.subr.mxu0 0.0
    %506 = vmatpush1.xpose.msra.mxu0 0.0
    %507 = vmatprep.subr.mxu0 0.0
    %508 = vmatpush1.xpose.msra.mxu0 %v475
    %509 = vmatprep.subr.mxu0 0.0
    %510 = vmatpush2.xpose.msra.mxu0 0.0
    %511 = vmatprep.subr.mxu0 0.0
    %512 = vmatpush2.xpose.msra.mxu0 0.0
    %513 = vmatprep.subr.mxu0 0.0
    %514 = vmatpush2.xpose.msra.mxu0 0.0
    %515 = vmatprep.subr.mxu0 0.0
    %516 = vmatpush2.xpose.msra.mxu0 0.0
    %517 = vmatprep.subr.mxu0 0.0
    %518 = vmatpush2.xpose.msra.mxu0 0.0
    %519 = vmatprep.subr.mxu0 0.0
    %520 = vmatpush2.xpose.msra.mxu0 0.0
    %521 = vmatprep.subr.mxu0 0.0
    %522 = vmatpush2.xpose.msra.mxu0 0.0
    %523 = vmatprep.subr.mxu0 0.0
    %524 = vmatpush2.xpose.msra.mxu0 0.0
    %525 = vmatprep.subr.mxu0 0.0
    %526 = vmatpush2.xpose.msra.mxu0 0.0
    %527 = vmatprep.subr.mxu0 0.0
    %528 = vmatpush2.xpose.msra.mxu0 0.0
    %529 = vmatprep.subr.mxu0 0.0
    %530 = vmatpush2.xpose.msra.mxu0 0.0
    %531 = vmatprep.subr.mxu0 0.0
    %532 = vmatpush2.xpose.msra.mxu0 0.0
    %533 = vmatprep.subr.mxu0 0.0
    %534 = vmatpush2.xpose.msra.mxu0 0.0
    %535 = vmatprep.subr.mxu0 0.0
    %536 = vmatpush2.xpose.msra.mxu0 0.0
    %537 = vmatprep.subr.mxu0 0.0
    %538 = vmatpush2.xpose.msra.mxu0 0.0
    %539 = vmatprep.subr.mxu0 0.0
    %540 = vmatpush2.xpose.msra.mxu0 0.0
    %541 = vmatprep.mubr.f32.mxu0 0.0
    %542 = vmatmul.mubr.f32.gmra.mxu0 %v473
    %v543 = vpop.f32.mrf.mxu0
    %v544 = vadd.f32 %v196, %v543
    %v545 = vpop.f32.mrf.mxu0
    %546 = vdwg.mxu0
    %v547 = vsel %vm306, %v544, -inf
    %548 = vmax.xlane.f32.xlu0 %v547
    %v549 = vpop.xlane.xlu0 %548
    %v550 = vsub.f32 %v544, %v549
    %v551 = vmul.f32 %v550, 1.442695
    %v552 = vpow.pop %v551
    %v553 = vsel %vm306, %v552, 0.0
    %554 = vadd.xlane.f32.xlu0 %v553
    %v555 = vpop.xlane.xlu0 %554
    %v556 = vrcp.pop %v555
    %v557 = vmul.f32 %v552, %v556
    %558 = vrot.lane.b32.xlu0 %v300, 56
    %v559 = vpop.permute.xlu0 %558
    %v562 = vsel %vm306, %v557, 0
    %564 = vmatprep.subr.mxu0 0.0
    %565 = vmatpush1.msra.mxu0 0.0
    %566 = vmatprep.subr.mxu0 0.0
    %567 = vmatpush1.msra.mxu0 0.0
    %568 = vmatprep.subr.mxu0 0.0
    %569 = vmatpush1.msra.mxu0 0.0
    %570 = vmatprep.subr.mxu0 0.0
    %571 = vmatpush1.msra.mxu0 0.0
    %572 = vmatprep.subr.mxu0 0.0
    %573 = vmatpush1.msra.mxu0 0.0
    %574 = vmatprep.subr.mxu0 0.0
    %575 = vmatpush1.msra.mxu0 0.0
    %576 = vmatprep.subr.mxu0 0.0
    %577 = vmatpush1.msra.mxu0 0.0
    %578 = vmatprep.subr.mxu0 0.0
    %579 = vmatpush1.msra.mxu0 0.0
    %580 = vmatprep.subr.mxu0 0.0
    %581 = vmatpush1.msra.mxu0 0.0
    %582 = vmatprep.subr.mxu0 0.0
    %583 = vmatpush1.msra.mxu0 0.0
    %584 = vmatprep.subr.mxu0 0.0
    %585 = vmatpush1.msra.mxu0 0.0
    %586 = vmatprep.subr.mxu0 0.0
    %587 = vmatpush1.msra.mxu0 0.0
    %588 = vmatprep.subr.mxu0 0.0
    %589 = vmatpush1.msra.mxu0 0.0
    %590 = vmatprep.subr.mxu0 0.0
    %591 = vmatpush1.msra.mxu0 0.0
    %592 = vmatprep.subr.mxu0 0.0
    %593 = vmatpush1.msra.mxu0 0.0
    %594 = vmatprep.subr.mxu0 0.0
    %595 = vmatpush1.msra.mxu0 %v559
    %596 = vmatprep.subr.mxu0 0.0
    %597 = vmatpush2.msra.mxu0 0.0
    %598 = vmatprep.subr.mxu0 0.0
    %599 = vmatpush2.msra.mxu0 0.0
    %600 = vmatprep.subr.mxu0 0.0
    %601 = vmatpush2.msra.mxu0 0.0
    %602 = vmatprep.subr.mxu0 0.0
    %603 = vmatpush2.msra.mxu0 0.0
    %604 = vmatprep.subr.mxu0 0.0
    %605 = vmatpush2.msra.mxu0 0.0
    %606 = vmatprep.subr.mxu0 0.0
    %607 = vmatpush2.msra.mxu0 0.0
    %608 = vmatprep.subr.mxu0 0.0
    %609 = vmatpush2.msra.mxu0 0.0
    %610 = vmatprep.subr.mxu0 0.0
    %611 = vmatpush2.msra.mxu0 0.0
    %612 = vmatprep.subr.mxu0 0.0
    %613 = vmatpush2.msra.mxu0 0.0
    %614 = vmatprep.subr.mxu0 0.0
    %615 = vmatpush2.msra.mxu0 0.0
    %616 = vmatprep.subr.mxu0 0.0
    %617 = vmatpush2.msra.mxu0 0.0
    %618 = vmatprep.subr.mxu0 0.0
    %619 = vmatpush2.msra.mxu0 0.0
    %620 = vmatprep.subr.mxu0 0.0
    %621 = vmatpush2.msra.mxu0 0.0
    %622 = vmatprep.subr.mxu0 0.0
    %623 = vmatpush2.msra.mxu0 0.0
    %624 = vmatprep.subr.mxu0 0.0
    %625 = vmatpush2.msra.mxu0 0.0
    %626 = vmatprep.subr.mxu0 0.0
    %627 = vmatpush2.msra.mxu0 0.0
    %628 = vmatprep.mubr.f32.mxu0 0.0
    %629 = vmatmul.mubr.f32.gmra.mxu0 %v562
    %v630 = vpop.f32.mrf.mxu0
    %v631 = vadd.f32 0.0, %v630
    %v632 = vpop.f32.mrf.mxu0
    %633 = vdwg.mxu0
    %635 = vrot.lane.b32.xlu0 %v631, 8
    %v636 = vpop.permute.xlu0 %635
    %vm638 = vcmask 130112
    %639 = vst.msk [vmem:[#allocation2] sm:$0xff] %vm638, %v636
    %640 = vrot.lane.b32.xlu0 %v300, 112
    %v641 = vpop.permute.xlu0 %640
    %642 = vrot.lane.b32.xlu0 %v300, 80
    %v643 = vpop.permute.xlu0 %642
    %v644 = vsel %vm306, %v641, 0
    %v646 = vsel %vm306, %v643, 0
    %648 = vmatprep.subr.mxu0 0.0
    %649 = vmatpush1.xpose.msra.mxu0 0.0
    %650 = vmatprep.subr.mxu0 0.0
    %651 = vmatpush1.xpose.msra.mxu0 0.0
    %652 = vmatprep.subr.mxu0 0.0
    %653 = vmatpush1.xpose.msra.mxu0 0.0
    %654 = vmatprep.subr.mxu0 0.0
    %655 = vmatpush1.xpose.msra.mxu0 0.0
    %656 = vmatprep.subr.mxu0 0.0
    %657 = vmatpush1.xpose.msra.mxu0 0.0
    %658 = vmatprep.subr.mxu0 0.0
    %659 = vmatpush1.xpose.msra.mxu0 0.0
    %660 = vmatprep.subr.mxu0 0.0
    %661 = vmatpush1.xpose.msra.mxu0 0.0
    %662 = vmatprep.subr.mxu0 0.0
    %663 = vmatpush1.xpose.msra.mxu0 0.0
    %664 = vmatprep.subr.mxu0 0.0
    %665 = vmatpush1.xpose.msra.mxu0 0.0
    %666 = vmatprep.subr.mxu0 0.0
    %667 = vmatpush1.xpose.msra.mxu0 0.0
    %668 = vmatprep.subr.mxu0 0.0
    %669 = vmatpush1.xpose.msra.mxu0 0.0
    %670 = vmatprep.subr.mxu0 0.0
    %671 = vmatpush1.xpose.msra.mxu0 0.0
    %672 = vmatprep.subr.mxu0 0.0
    %673 = vmatpush1.xpose.msra.mxu0 0.0
    %674 = vmatprep.subr.mxu0 0.0
    %675 = vmatpush1.xpose.msra.mxu0 0.0
    %676 = vmatprep.subr.mxu0 0.0
    %677 = vmatpush1.xpose.msra.mxu0 0.0
    %678 = vmatprep.subr.mxu0 0.0
    %679 = vmatpush1.xpose.msra.mxu0 %v646
    %680 = vmatprep.subr.mxu0 0.0
    %681 = vmatpush2.xpose.msra.mxu0 0.0
    %682 = vmatprep.subr.mxu0 0.0
    %683 = vmatpush2.xpose.msra.mxu0 0.0
    %684 = vmatprep.subr.mxu0 0.0
    %685 = vmatpush2.xpose.msra.mxu0 0.0
    %686 = vmatprep.subr.mxu0 0.0
    %687 = vmatpush2.xpose.msra.mxu0 0.0
    %688 = vmatprep.subr.mxu0 0.0
    %689 = vmatpush2.xpose.msra.mxu0 0.0
    %690 = vmatprep.subr.mxu0 0.0
    %691 = vmatpush2.xpose.msra.mxu0 0.0
    %692 = vmatprep.subr.mxu0 0.0
    %693 = vmatpush2.xpose.msra.mxu0 0.0
    %694 = vmatprep.subr.mxu0 0.0
    %695 = vmatpush2.xpose.msra.mxu0 0.0
    %696 = vmatprep.subr.mxu0 0.0
    %697 = vmatpush2.xpose.msra.mxu0 0.0
    %698 = vmatprep.subr.mxu0 0.0
    %699 = vmatpush2.xpose.msra.mxu0 0.0
    %700 = vmatprep.subr.mxu0 0.0
    %701 = vmatpush2.xpose.msra.mxu0 0.0
    %702 = vmatprep.subr.mxu0 0.0
    %703 = vmatpush2.xpose.msra.mxu0 0.0
    %704 = vmatprep.subr.mxu0 0.0
    %705 = vmatpush2.xpose.msra.mxu0 0.0
    %706 = vmatprep.subr.mxu0 0.0
    %707 = vmatpush2.xpose.msra.mxu0 0.0
    %708 = vmatprep.subr.mxu0 0.0
    %709 = vmatpush2.xpose.msra.mxu0 0.0
    %710 = vmatprep.subr.mxu0 0.0
    %711 = vmatpush2.xpose.msra.mxu0 0.0
    %712 = vmatprep.mubr.f32.mxu0 0.0
    %713 = vmatmul.mubr.f32.gmra.mxu0 %v644
    %v714 = vpop.f32.mrf.mxu0
    %v715 = vadd.f32 %v196, %v714
    %v716 = vpop.f32.mrf.mxu0
    %717 = vdwg.mxu0
    %v718 = vsel %vm306, %v715, -inf
    %719 = vmax.xlane.f32.xlu0 %v718
    %v720 = vpop.xlane.xlu0 %719
    %v721 = vsub.f32 %v715, %v720
    %v722 = vmul.f32 %v721, 1.442695
    %v723 = vpow.pop %v722
    %v724 = vsel %vm306, %v723, 0.0
    %725 = vadd.xlane.f32.xlu0 %v724
    %v726 = vpop.xlane.xlu0 %725
    %v727 = vrcp.pop %v726
    %v728 = vmul.f32 %v723, %v727
    %729 = vrot.lane.b32.xlu0 %v300, 48
    %v730 = vpop.permute.xlu0 %729
    %v733 = vsel %vm306, %v728, 0
    %735 = vmatprep.subr.mxu0 0.0
    %736 = vmatpush1.msra.mxu0 0.0
    %737 = vmatprep.subr.mxu0 0.0
    %738 = vmatpush1.msra.mxu0 0.0
    %739 = vmatprep.subr.mxu0 0.0
    %740 = vmatpush1.msra.mxu0 0.0
    %741 = vmatprep.subr.mxu0 0.0
    %742 = vmatpush1.msra.mxu0 0.0
    %743 = vmatprep.subr.mxu0 0.0
    %744 = vmatpush1.msra.mxu0 0.0
    %745 = vmatprep.subr.mxu0 0.0
    %746 = vmatpush1.msra.mxu0 0.0
    %747 = vmatprep.subr.mxu0 0.0
    %748 = vmatpush1.msra.mxu0 0.0
    %749 = vmatprep.subr.mxu0 0.0
    %750 = vmatpush1.msra.mxu0 0.0
    %751 = vmatprep.subr.mxu0 0.0
    %752 = vmatpush1.msra.mxu0 0.0
    %753 = vmatprep.subr.mxu0 0.0
    %754 = vmatpush1.msra.mxu0 0.0
    %755 = vmatprep.subr.mxu0 0.0
    %756 = vmatpush1.msra.mxu0 0.0
    %757 = vmatprep.subr.mxu0 0.0
    %758 = vmatpush1.msra.mxu0 0.0
    %759 = vmatprep.subr.mxu0 0.0
    %760 = vmatpush1.msra.mxu0 0.0
    %761 = vmatprep.subr.mxu0 0.0
    %762 = vmatpush1.msra.mxu0 0.0
    %763 = vmatprep.subr.mxu0 0.0
    %764 = vmatpush1.msra.mxu0 0.0
    %765 = vmatprep.subr.mxu0 0.0
    %766 = vmatpush1.msra.mxu0 %v730
    %767 = vmatprep.subr.mxu0 0.0
    %768 = vmatpush2.msra.mxu0 0.0
    %769 = vmatprep.subr.mxu0 0.0
    %770 = vmatpush2.msra.mxu0 0.0
    %771 = vmatprep.subr.mxu0 0.0
    %772 = vmatpush2.msra.mxu0 0.0
    %773 = vmatprep.subr.mxu0 0.0
    %774 = vmatpush2.msra.mxu0 0.0
    %775 = vmatprep.subr.mxu0 0.0
    %776 = vmatpush2.msra.mxu0 0.0
    %777 = vmatprep.subr.mxu0 0.0
    %778 = vmatpush2.msra.mxu0 0.0
    %779 = vmatprep.subr.mxu0 0.0
    %780 = vmatpush2.msra.mxu0 0.0
    %781 = vmatprep.subr.mxu0 0.0
    %782 = vmatpush2.msra.mxu0 0.0
    %783 = vmatprep.subr.mxu0 0.0
    %784 = vmatpush2.msra.mxu0 0.0
    %785 = vmatprep.subr.mxu0 0.0
    %786 = vmatpush2.msra.mxu0 0.0
    %787 = vmatprep.subr.mxu0 0.0
    %788 = vmatpush2.msra.mxu0 0.0
    %789 = vmatprep.subr.mxu0 0.0
    %790 = vmatpush2.msra.mxu0 0.0
    %791 = vmatprep.subr.mxu0 0.0
    %792 = vmatpush2.msra.mxu0 0.0
    %793 = vmatprep.subr.mxu0 0.0
    %794 = vmatpush2.msra.mxu0 0.0
    %795 = vmatprep.subr.mxu0 0.0
    %796 = vmatpush2.msra.mxu0 0.0
    %797 = vmatprep.subr.mxu0 0.0
    %798 = vmatpush2.msra.mxu0 0.0
    %799 = vmatprep.mubr.f32.mxu0 0.0
    %800 = vmatmul.mubr.f32.gmra.mxu0 %v733
    %v801 = vpop.f32.mrf.mxu0
    %v802 = vadd.f32 0.0, %v801
    %v803 = vpop.f32.mrf.mxu0
    %804 = vdwg.mxu0
    %806 = vrot.lane.b32.xlu0 %v802, 16
    %v807 = vpop.permute.xlu0 %806
    %vm809 = vcmask 195712
    %810 = vst.msk [vmem:[#allocation2] sm:$0xff] %vm809, %v807
    %811 = vrot.lane.b32.xlu0 %v300, 104
    %v812 = vpop.permute.xlu0 %811
    %813 = vrot.lane.b32.xlu0 %v300, 72
    %v814 = vpop.permute.xlu0 %813
    %v815 = vsel %vm306, %v812, 0
    %v817 = vsel %vm306, %v814, 0
    %819 = vmatprep.subr.mxu0 0.0
    %820 = vmatpush1.xpose.msra.mxu0 0.0
    %821 = vmatprep.subr.mxu0 0.0
    %822 = vmatpush1.xpose.msra.mxu0 0.0
    %823 = vmatprep.subr.mxu0 0.0
    %824 = vmatpush1.xpose.msra.mxu0 0.0
    %825 = vmatprep.subr.mxu0 0.0
    %826 = vmatpush1.xpose.msra.mxu0 0.0
    %827 = vmatprep.subr.mxu0 0.0
    %828 = vmatpush1.xpose.msra.mxu0 0.0
    %829 = vmatprep.subr.mxu0 0.0
    %830 = vmatpush1.xpose.msra.mxu0 0.0
    %831 = vmatprep.subr.mxu0 0.0
    %832 = vmatpush1.xpose.msra.mxu0 0.0
    %833 = vmatprep.subr.mxu0 0.0
    %834 = vmatpush1.xpose.msra.mxu0 0.0
    %835 = vmatprep.subr.mxu0 0.0
    %836 = vmatpush1.xpose.msra.mxu0 0.0
    %837 = vmatprep.subr.mxu0 0.0
    %838 = vmatpush1.xpose.msra.mxu0 0.0
    %839 = vmatprep.subr.mxu0 0.0
    %840 = vmatpush1.xpose.msra.mxu0 0.0
    %841 = vmatprep.subr.mxu0 0.0
    %842 = vmatpush1.xpose.msra.mxu0 0.0
    %843 = vmatprep.subr.mxu0 0.0
    %844 = vmatpush1.xpose.msra.mxu0 0.0
    %845 = vmatprep.subr.mxu0 0.0
    %846 = vmatpush1.xpose.msra.mxu0 0.0
    %847 = vmatprep.subr.mxu0 0.0
    %848 = vmatpush1.xpose.msra.mxu0 0.0
    %849 = vmatprep.subr.mxu0 0.0
    %850 = vmatpush1.xpose.msra.mxu0 %v817
    %851 = vmatprep.subr.mxu0 0.0
    %852 = vmatpush2.xpose.msra.mxu0 0.0
    %853 = vmatprep.subr.mxu0 0.0
    %854 = vmatpush2.xpose.msra.mxu0 0.0
    %855 = vmatprep.subr.mxu0 0.0
    %856 = vmatpush2.xpose.msra.mxu0 0.0
    %857 = vmatprep.subr.mxu0 0.0
    %858 = vmatpush2.xpose.msra.mxu0 0.0
    %859 = vmatprep.subr.mxu0 0.0
    %860 = vmatpush2.xpose.msra.mxu0 0.0
    %861 = vmatprep.subr.mxu0 0.0
    %862 = vmatpush2.xpose.msra.mxu0 0.0
    %863 = vmatprep.subr.mxu0 0.0
    %864 = vmatpush2.xpose.msra.mxu0 0.0
    %865 = vmatprep.subr.mxu0 0.0
    %866 = vmatpush2.xpose.msra.mxu0 0.0
    %867 = vmatprep.subr.mxu0 0.0
    %868 = vmatpush2.xpose.msra.mxu0 0.0
    %869 = vmatprep.subr.mxu0 0.0
    %870 = vmatpush2.xpose.msra.mxu0 0.0
    %871 = vmatprep.subr.mxu0 0.0
    %872 = vmatpush2.xpose.msra.mxu0 0.0
    %873 = vmatprep.subr.mxu0 0.0
    %874 = vmatpush2.xpose.msra.mxu0 0.0
    %875 = vmatprep.subr.mxu0 0.0
    %876 = vmatpush2.xpose.msra.mxu0 0.0
    %877 = vmatprep.subr.mxu0 0.0
    %878 = vmatpush2.xpose.msra.mxu0 0.0
    %879 = vmatprep.subr.mxu0 0.0
    %880 = vmatpush2.xpose.msra.mxu0 0.0
    %881 = vmatprep.subr.mxu0 0.0
    %882 = vmatpush2.xpose.msra.mxu0 0.0
    %883 = vmatprep.mubr.f32.mxu0 0.0
    %884 = vmatmul.mubr.f32.gmra.mxu0 %v815
    %v885 = vpop.f32.mrf.mxu0
    %v886 = vadd.f32 %v196, %v885
    %v887 = vpop.f32.mrf.mxu0
    %888 = vdwg.mxu0
    %v889 = vsel %vm306, %v886, -inf
    %890 = vmax.xlane.f32.xlu0 %v889
    %v891 = vpop.xlane.xlu0 %890
    %v892 = vsub.f32 %v886, %v891
    %v893 = vmul.f32 %v892, 1.442695
    %v894 = vpow.pop %v893
    %v895 = vsel %vm306, %v894, 0.0
    %896 = vadd.xlane.f32.xlu0 %v895
    %v897 = vpop.xlane.xlu0 %896
    %v898 = vrcp.pop %v897
    %v899 = vmul.f32 %v894, %v898
    %900 = vrot.lane.b32.xlu0 %v300, 40
    %v901 = vpop.permute.xlu0 %900
    %v904 = vsel %vm306, %v899, 0
    %906 = vmatprep.subr.mxu0 0.0
    %907 = vmatpush1.msra.mxu0 0.0
    %908 = vmatprep.subr.mxu0 0.0
    %909 = vmatpush1.msra.mxu0 0.0
    %910 = vmatprep.subr.mxu0 0.0
    %911 = vmatpush1.msra.mxu0 0.0
    %912 = vmatprep.subr.mxu0 0.0
    %913 = vmatpush1.msra.mxu0 0.0
    %914 = vmatprep.subr.mxu0 0.0
    %915 = vmatpush1.msra.mxu0 0.0
    %916 = vmatprep.subr.mxu0 0.0
    %917 = vmatpush1.msra.mxu0 0.0
    %918 = vmatprep.subr.mxu0 0.0
    %919 = vmatpush1.msra.mxu0 0.0
    %920 = vmatprep.subr.mxu0 0.0
    %921 = vmatpush1.msra.mxu0 0.0
    %922 = vmatprep.subr.mxu0 0.0
    %923 = vmatpush1.msra.mxu0 0.0
    %924 = vmatprep.subr.mxu0 0.0
    %925 = vmatpush1.msra.mxu0 0.0
    %926 = vmatprep.subr.mxu0 0.0
    %927 = vmatpush1.msra.mxu0 0.0
    %928 = vmatprep.subr.mxu0 0.0
    %929 = vmatpush1.msra.mxu0 0.0
    %930 = vmatprep.subr.mxu0 0.0
    %931 = vmatpush1.msra.mxu0 0.0
    %932 = vmatprep.subr.mxu0 0.0
    %933 = vmatpush1.msra.mxu0 0.0
    %934 = vmatprep.subr.mxu0 0.0
    %935 = vmatpush1.msra.mxu0 0.0
    %936 = vmatprep.subr.mxu0 0.0
    %937 = vmatpush1.msra.mxu0 %v901
    %938 = vmatprep.subr.mxu0 0.0
    %939 = vmatpush2.msra.mxu0 0.0
    %940 = vmatprep.subr.mxu0 0.0
    %941 = vmatpush2.msra.mxu0 0.0
    %942 = vmatprep.subr.mxu0 0.0
    %943 = vmatpush2.msra.mxu0 0.0
    %944 = vmatprep.subr.mxu0 0.0
    %945 = vmatpush2.msra.mxu0 0.0
    %946 = vmatprep.subr.mxu0 0.0
    %947 = vmatpush2.msra.mxu0 0.0
    %948 = vmatprep.subr.mxu0 0.0
    %949 = vmatpush2.msra.mxu0 0.0
    %950 = vmatprep.subr.mxu0 0.0
    %951 = vmatpush2.msra.mxu0 0.0
    %952 = vmatprep.subr.mxu0 0.0
    %953 = vmatpush2.msra.mxu0 0.0
    %954 = vmatprep.subr.mxu0 0.0
    %955 = vmatpush2.msra.mxu0 0.0
    %956 = vmatprep.subr.mxu0 0.0
    %957 = vmatpush2.msra.mxu0 0.0
    %958 = vmatprep.subr.mxu0 0.0
    %959 = vmatpush2.msra.mxu0 0.0
    %960 = vmatprep.subr.mxu0 0.0
    %961 = vmatpush2.msra.mxu0 0.0
    %962 = vmatprep.subr.mxu0 0.0
    %963 = vmatpush2.msra.mxu0 0.0
    %964 = vmatprep.subr.mxu0 0.0
    %965 = vmatpush2.msra.mxu0 0.0
    %966 = vmatprep.subr.mxu0 0.0
    %967 = vmatpush2.msra.mxu0 0.0
    %968 = vmatprep.subr.mxu0 0.0
    %969 = vmatpush2.msra.mxu0 0.0
    %970 = vmatprep.mubr.f32.mxu0 0.0
    %971 = vmatmul.mubr.f32.gmra.mxu0 %v904
    %v972 = vpop.f32.mrf.mxu0
    %v973 = vadd.f32 0.0, %v972
    %v974 = vpop.f32.mrf.mxu0
    %975 = vdwg.mxu0
    %977 = vrot.lane.b32.xlu0 %v973, 24
    %v978 = vpop.permute.xlu0 %977
    %vm980 = vcmask 261312
    %981 = vst.msk [vmem:[#allocation2] sm:$0xff] %vm980, %v978
    %v982 = vld [vmem:[#allocation2] sm:$0xff]
    %v983 = vlaneseq
    %v984 = vshrl.u32 %v983, 7
    %v985 = vsub.s32 0, %v984
    %v986 = vrot.slane %v207, %v985
    %v988 = vsel %vm161, %v982, 0
    %990 = vmatprep.subr.mxu0 0.0
    %991 = vmatpush1.msra.mxu0 0.0
    %992 = vmatprep.subr.mxu0 0.0
    %993 = vmatpush1.msra.mxu0 0.0
    %994 = vmatprep.subr.mxu0 0.0
    %995 = vmatpush1.msra.mxu0 0.0
    %996 = vmatprep.subr.mxu0 0.0
    %997 = vmatpush1.msra.mxu0 0.0
    %998 = vmatprep.subr.mxu0 0.0
    %999 = vmatpush1.msra.mxu0 0.0
    %1000 = vmatprep.subr.mxu0 0.0
    %1001 = vmatpush1.msra.mxu0 0.0
    %1002 = vmatprep.subr.mxu0 0.0
    %1003 = vmatpush1.msra.mxu0 0.0
    %1004 = vmatprep.subr.mxu0 0.0
    %1005 = vmatpush1.msra.mxu0 0.0
    %1006 = vmatprep.subr.mxu0 0.0
    %1007 = vmatpush1.msra.mxu0 0.0
    %1008 = vmatprep.subr.mxu0 0.0
    %1009 = vmatpush1.msra.mxu0 0.0
    %1010 = vmatprep.subr.mxu0 0.0
    %1011 = vmatpush1.msra.mxu0 0.0
    %1012 = vmatprep.subr.mxu0 0.0
    %1013 = vmatpush1.msra.mxu0 0.0
    %1014 = vmatprep.subr.mxu0 0.0
    %1015 = vmatpush1.msra.mxu0 %v206
    %1016 = vmatprep.subr.mxu0 0.0
    %1017 = vmatpush1.msra.mxu0 %v205
    %1018 = vmatprep.subr.mxu0 0.0
    %1019 = vmatpush1.msra.mxu0 %v204
    %1020 = vmatprep.subr.mxu0 0.0
    %1021 = vmatpush1.msra.mxu0 %v203
    %1022 = vmatprep.subr.mxu0 0.0
    %1023 = vmatpush2.msra.mxu0 0.0
    %1024 = vmatprep.subr.mxu0 0.0
    %1025 = vmatpush2.msra.mxu0 0.0
    %1026 = vmatprep.subr.mxu0 0.0
    %1027 = vmatpush2.msra.mxu0 0.0
    %1028 = vmatprep.subr.mxu0 0.0
    %1029 = vmatpush2.msra.mxu0 0.0
    %1030 = vmatprep.subr.mxu0 0.0
    %1031 = vmatpush2.msra.mxu0 0.0
    %1032 = vmatprep.subr.mxu0 0.0
    %1033 = vmatpush2.msra.mxu0 0.0
    %1034 = vmatprep.subr.mxu0 0.0
    %1035 = vmatpush2.msra.mxu0 0.0
    %1036 = vmatprep.subr.mxu0 0.0
    %1037 = vmatpush2.msra.mxu0 0.0
    %1038 = vmatprep.subr.mxu0 0.0
    %1039 = vmatpush2.msra.mxu0 0.0
    %1040 = vmatprep.subr.mxu0 0.0
    %1041 = vmatpush2.msra.mxu0 0.0
    %1042 = vmatprep.subr.mxu0 0.0
    %1043 = vmatpush2.msra.mxu0 0.0
    %1044 = vmatprep.subr.mxu0 0.0
    %1045 = vmatpush2.msra.mxu0 0.0
    %1046 = vmatprep.subr.mxu0 0.0
    %1047 = vmatpush2.msra.mxu0 0.0
    %1048 = vmatprep.subr.mxu0 0.0
    %1049 = vmatpush2.msra.mxu0 0.0
    %1050 = vmatprep.subr.mxu0 0.0
    %1051 = vmatpush2.msra.mxu0 0.0
    %1052 = vmatprep.subr.mxu0 0.0
    %1053 = vmatpush2.msra.mxu0 0.0
    %1054 = vmatprep.mubr.f32.mxu0 0.0
    %1055 = vmatmul.mubr.f32.gmra.mxu0 %v988
    %v1056 = vpop.f32.mrf.mxu0
    %v1057 = vadd.f32 %v986, %v1056
    %v1058 = vpop.f32.mrf.mxu0
    %1059 = vdwg.mxu0
    %v1060 = vadd.f32 %v188, %v1057
    %v1061 = vsel %vm161, %v1060, 0.0
    %1062 = vadd.xlane.f32.xlu0 %v1061
    %v1063 = vpop.xlane.xlu0 %1062
    %v1064 = vmul.f32 %v1063, %v165
    %v1065 = vmul.f32 %v1060, %v1060
    %v1066 = vsel %vm161, %v1065, 0.0
    %1067 = vadd.xlane.f32.xlu0 %v1066
    %v1068 = vpop.xlane.xlu0 %1067
    %v1069 = vmul.f32 %v1068, %v165
    %v1070 = vmul.f32 %v1064, %v1064
    %v1071 = vsub.f32 %v1069, %v1070
    %v1072 = vmax.f32 %v1071, 0.0
    %v1073 = vsub.f32 %v1060, %v1064
    %v1074 = vadd.f32 %v1072, 1e-12
    %v1075 = vrsqrt.pop %v1074
    %v1076 = vmul.f32 %v1073, %v1075
    %v1077 = vlaneseq
    %v1078 = vshrl.u32 %v1077, 7
    %v1079 = vsub.s32 0, %v1078
    %v1080 = vrot.slane %v222, %v1079
    %v1081 = vmul.f32 %v1076, %v1080
    %v1082 = vlaneseq
    %v1083 = vshrl.u32 %v1082, 7
    %v1084 = vsub.s32 0, %v1083
    %v1085 = vrot.slane %v223, %v1084
    %v1086 = vadd.f32 %v1081, %v1085
    %v1087 = vlaneseq
    %v1088 = vshrl.u32 %v1087, 7
    %v1089 = vsub.s32 0, %v1088
    %v1090 = vrot.slane %v212, %v1089
    %v1092 = vsel %vm161, %v1086, 0
    %1094 = vmatprep.subr.mxu0 0.0
    %1095 = vmatpush1.msra.mxu0 0.0
    %1096 = vmatprep.subr.mxu0 0.0
    %1097 = vmatpush1.msra.mxu0 0.0
    %1098 = vmatprep.subr.mxu0 0.0
    %1099 = vmatpush1.msra.mxu0 0.0
    %1100 = vmatprep.subr.mxu0 0.0
    %1101 = vmatpush1.msra.mxu0 0.0
    %1102 = vmatprep.subr.mxu0 0.0
    %1103 = vmatpush1.msra.mxu0 0.0
    %1104 = vmatprep.subr.mxu0 0.0
    %1105 = vmatpush1.msra.mxu0 0.0
    %1106 = vmatprep.subr.mxu0 0.0
    %1107 = vmatpush1.msra.mxu0 0.0
    %1108 = vmatprep.subr.mxu0 0.0
    %1109 = vmatpush1.msra.mxu0 0.0
    %1110 = vmatprep.subr.mxu0 0.0
    %1111 = vmatpush1.msra.mxu0 0.0
    %1112 = vmatprep.subr.mxu0 0.0
    %1113 = vmatpush1.msra.mxu0 0.0
    %1114 = vmatprep.subr.mxu0 0.0
    %1115 = vmatpush1.msra.mxu0 0.0
    %1116 = vmatprep.subr.mxu0 0.0
    %1117 = vmatpush1.msra.mxu0 0.0
    %1118 = vmatprep.subr.mxu0 0.0
    %1119 = vmatpush1.msra.mxu0 %v211
    %1120 = vmatprep.subr.mxu0 0.0
    %1121 = vmatpush1.msra.mxu0 %v210
    %1122 = vmatprep.subr.mxu0 0.0
    %1123 = vmatpush1.msra.mxu0 %v209
    %1124 = vmatprep.subr.mxu0 0.0
    %1125 = vmatpush1.msra.mxu0 %v208
    %1126 = vmatprep.subr.mxu0 0.0
    %1127 = vmatpush2.msra.mxu0 0.0
    %1128 = vmatprep.subr.mxu0 0.0
    %1129 = vmatpush2.msra.mxu0 0.0
    %1130 = vmatprep.subr.mxu0 0.0
    %1131 = vmatpush2.msra.mxu0 0.0
    %1132 = vmatprep.subr.mxu0 0.0
    %1133 = vmatpush2.msra.mxu0 0.0
    %1134 = vmatprep.subr.mxu0 0.0
    %1135 = vmatpush2.msra.mxu0 0.0
    %1136 = vmatprep.subr.mxu0 0.0
    %1137 = vmatpush2.msra.mxu0 0.0
    %1138 = vmatprep.subr.mxu0 0.0
    %1139 = vmatpush2.msra.mxu0 0.0
    %1140 = vmatprep.subr.mxu0 0.0
    %1141 = vmatpush2.msra.mxu0 0.0
    %1142 = vmatprep.subr.mxu0 0.0
    %1143 = vmatpush2.msra.mxu0 0.0
    %1144 = vmatprep.subr.mxu0 0.0
    %1145 = vmatpush2.msra.mxu0 0.0
    %1146 = vmatprep.subr.mxu0 0.0
    %1147 = vmatpush2.msra.mxu0 0.0
    %1148 = vmatprep.subr.mxu0 0.0
    %1149 = vmatpush2.msra.mxu0 0.0
    %1150 = vmatprep.subr.mxu0 0.0
    %1151 = vmatpush2.msra.mxu0 0.0
    %1152 = vmatprep.subr.mxu0 0.0
    %1153 = vmatpush2.msra.mxu0 0.0
    %1154 = vmatprep.subr.mxu0 0.0
    %1155 = vmatpush2.msra.mxu0 0.0
    %1156 = vmatprep.subr.mxu0 0.0
    %1157 = vmatpush2.msra.mxu0 0.0
    %1158 = vmatprep.mubr.f32.mxu0 0.0
    %1159 = vmatmul.mubr.f32.gmra.mxu0 %v1092
    %v1160 = vpop.f32.mrf.mxu0
    %v1161 = vadd.f32 %v1090, %v1160
    %v1162 = vpop.f32.mrf.mxu0
    %1163 = vdwg.mxu0
    %v1164 = vmul.f32 %v1161, 0.5
    %v1165 = vmul.f32 %v1161, 0.044715
    %v1166 = vmul.f32 %v1165, %v1161
    %v1167 = vmul.f32 %v1166, %v1161
    %v1168 = vadd.f32 %v1161, %v1167
    %v1169 = vmul.f32 %v1168, 0.7978846
    %v1170 = vtanh.pop %v1169
    %v1171 = vadd.f32 %v1170, 1.0
    %v1172 = vmul.f32 %v1164, %v1171
    %v1173 = vlaneseq
    %v1174 = vshrl.u32 %v1173, 7
    %v1175 = vsub.s32 0, %v1174
    %v1176 = vrot.slane %v221, %v1175
    %vm1177 = vcmask 523264
    %v1179 = vsel %vm1177, %v1172, 0
    %1181 = vmatprep.subr.mxu0 0.0
    %1182 = vmatpush1.msra.mxu0 0.0
    %1183 = vmatprep.subr.mxu0 0.0
    %1184 = vmatpush1.msra.mxu0 0.0
    %1185 = vmatprep.subr.mxu0 0.0
    %1186 = vmatpush1.msra.mxu0 0.0
    %1187 = vmatprep.subr.mxu0 0.0
    %1188 = vmatpush1.msra.mxu0 0.0
    %1189 = vmatprep.subr.mxu0 0.0
    %1190 = vmatpush1.msra.mxu0 0.0
    %1191 = vmatprep.subr.mxu0 0.0
    %1192 = vmatpush1.msra.mxu0 0.0
    %1193 = vmatprep.subr.mxu0 0.0
    %1194 = vmatpush1.msra.mxu0 0.0
    %1195 = vmatprep.subr.mxu0 0.0
    %1196 = vmatpush1.msra.mxu0 0.0
    %1197 = vmatprep.subr.mxu0 0.0
    %1198 = vmatpush1.msra.mxu0 %v220
    %1199 = vmatprep.subr.mxu0 0.0
    %1200 = vmatpush1.msra.mxu0 %v219
    %1201 = vmatprep.subr.mxu0 0.0
    %1202 = vmatpush1.msra.mxu0 %v218
    %1203 = vmatprep.subr.mxu0 0.0
    %1204 = vmatpush1.msra.mxu0 %v217
    %1205 = vmatprep.subr.mxu0 0.0
    %1206 = vmatpush1.msra.mxu0 %v216
    %1207 = vmatprep.subr.mxu0 0.0
    %1208 = vmatpush1.msra.mxu0 %v215
    %1209 = vmatprep.subr.mxu0 0.0
    %1210 = vmatpush1.msra.mxu0 %v214
    %1211 = vmatprep.subr.mxu0 0.0
    %1212 = vmatpush1.msra.mxu0 %v213
    %1213 = vmatprep.subr.mxu0 0.0
    %1214 = vmatpush2.msra.mxu0 0.0
    %1215 = vmatprep.subr.mxu0 0.0
    %1216 = vmatpush2.msra.mxu0 0.0
    %1217 = vmatprep.subr.mxu0 0.0
    %1218 = vmatpush2.msra.mxu0 0.0
    %1219 = vmatprep.subr.mxu0 0.0
    %1220 = vmatpush2.msra.mxu0 0.0
    %1221 = vmatprep.subr.mxu0 0.0
    %1222 = vmatpush2.msra.mxu0 0.0
    %1223 = vmatprep.subr.mxu0 0.0
    %1224 = vmatpush2.msra.mxu0 0.0
    %1225 = vmatprep.subr.mxu0 0.0
    %1226 = vmatpush2.msra.mxu0 0.0
    %1227 = vmatprep.subr.mxu0 0.0
    %1228 = vmatpush2.msra.mxu0 0.0
    %1229 = vmatprep.subr.mxu0 0.0
    %1230 = vmatpush2.msra.mxu0 0.0
    %1231 = vmatprep.subr.mxu0 0.0
    %1232 = vmatpush2.msra.mxu0 0.0
    %1233 = vmatprep.subr.mxu0 0.0
    %1234 = vmatpush2.msra.mxu0 0.0
    %1235 = vmatprep.subr.mxu0 0.0
    %1236 = vmatpush2.msra.mxu0 0.0
    %1237 = vmatprep.subr.mxu0 0.0
    %1238 = vmatpush2.msra.mxu0 0.0
    %1239 = vmatprep.subr.mxu0 0.0
    %1240 = vmatpush2.msra.mxu0 0.0
    %1241 = vmatprep.subr.mxu0 0.0
    %1242 = vmatpush2.msra.mxu0 0.0
    %1243 = vmatprep.subr.mxu0 0.0
    %1244 = vmatpush2.msra.mxu0 0.0
    %1245 = vmatprep.mubr.f32.mxu0 0.0
    %1246 = vmatmul.mubr.f32.gmra.mxu0 %v1179
    %v1247 = vpop.f32.mrf.mxu0
    %v1248 = vadd.f32 %v1176, %v1247
    %v1249 = vpop.f32.mrf.mxu0
    %1250 = vdwg.mxu0
    %v1251 = vadd.f32 %v1086, %v1248
    %v1252 = vsel %vm161, %v1251, 0.0
    %1253 = vadd.xlane.f32.xlu0 %v1252
    %v1254 = vpop.xlane.xlu0 %1253
    %v1255 = vmul.f32 %v1254, %v165
    %v1256 = vmul.f32 %v1251, %v1251
    %v1257 = vsel %vm161, %v1256, 0.0
    %1258 = vadd.xlane.f32.xlu0 %v1257
    %v1259 = vpop.xlane.xlu0 %1258
    %v1260 = vmul.f32 %v1259, %v165
    %v1261 = vmul.f32 %v1255, %v1255
    %v1262 = vsub.f32 %v1260, %v1261
    %v1263 = vmax.f32 %v1262, 0.0
    %v1264 = vsub.f32 %v1251, %v1255
    %v1265 = vadd.f32 %v1263, 1e-12
    %v1266 = vrsqrt.pop %v1265
    %v1267 = vmul.f32 %v1264, %v1266
    %v1268 = vlaneseq
    %v1269 = vshrl.u32 %v1268, 7
    %v1270 = vsub.s32 0, %v1269
    %v1271 = vrot.slane %v224, %v1270
    %v1272 = vmul.f32 %v1267, %v1271
    %v1273 = vlaneseq
    %v1274 = vshrl.u32 %v1273, 7
    %v1275 = vsub.s32 0, %v1274
    %v1276 = vrot.slane %v225, %v1275
    %v1277 = vadd.f32 %v1272, %v1276
    %v1278 = vld [vmem:[#allocation3 + $0xc8] sm:$0xff]
    %v1279 = vld [vmem:[#allocation3 + $0xd0] sm:$0xff]
    %v1280 = vld [vmem:[#allocation3 + $0xd8] sm:$0xff]
    %v1281 = vld [vmem:[#allocation3 + $0xe0] sm:$0xff]
    %v1282 = vld [vmem:[#allocation3 + $0xc0] sm:$0x1]
    %v1283 = vld [vmem:[#allocation3 + $0xe8] sm:$0xff]
    %v1284 = vld [vmem:[#allocation3 + $0xf0] sm:$0xff]
    %v1285 = vld [vmem:[#allocation3 + $0xf8] sm:$0xff]
    %v1286 = vld [vmem:[#allocation3 + $0x100] sm:$0xff]
    %v1287 = vld [vmem:[#allocation3 + $0xc1] sm:$0x1]
    %v1288 = vld [vmem:[#allocation3 + $0x108] sm:$0xff]
    %v1289 = vld [vmem:[#allocation3 + $0x110] sm:$0xff]
    %v1290 = vld [vmem:[#allocation3 + $0x118] sm:$0xff]
    %v1291 = vld [vmem:[#allocation3 + $0x120] sm:$0xff]
    %v1292 = vld [vmem:[#allocation3 + $0xc2] sm:$0x1]
    %v1293 = vld [vmem:[#allocation3 + $0x128] sm:$0xff]
    %v1294 = vld [vmem:[#allocation3 + $0x130] sm:$0xff]
    %v1295 = vld [vmem:[#allocation3 + $0x138] sm:$0xff]
    %v1296 = vld [vmem:[#allocation3 + $0x140] sm:$0xff]
    %v1297 = vld [vmem:[#allocation3 + $0x148] sm:$0xff]
    %v1298 = vld [vmem:[#allocation3 + $0x150] sm:$0xff]
    %v1299 = vld [vmem:[#allocation3 + $0x158] sm:$0xff]
    %v1300 = vld [vmem:[#allocation3 + $0x160] sm:$0xff]
    %v1301 = vld [vmem:[#allocation3 + $0xc3] sm:$0x1]
    %v1302 = vld [vmem:[#allocation3 + $0xc4] sm:$0x1]
    %v1303 = vld [vmem:[#allocation3 + $0xc5] sm:$0x1]
    %v1304 = vld [vmem:[#allocation3 + $0xc6] sm:$0x1]
    %v1305 = vld [vmem:[#allocation3 + $0xc7] sm:$0x1]
    %v1306 = vlaneseq
    %v1307 = vshrl.u32 %v1306, 7
    %v1308 = vsub.s32 0, %v1307
    %v1309 = vrot.slane %v1282, %v1308
    %v1311 = vsel %vm161, %v1277, 0
    %1313 = vmatprep.subr.mxu0 0.0
    %1314 = vmatpush1.msra.mxu0 0.0
    %1315 = vmatprep.subr.mxu0 0.0
    %1316 = vmatpush1.msra.mxu0 0.0
    %1317 = vmatprep.subr.mxu0 0.0
    %1318 = vmatpush1.msra.mxu0 0.0
    %1319 = vmatprep.subr.mxu0 0.0
    %1320 = vmatpush1.msra.mxu0 0.0
    %1321 = vmatprep.subr.mxu0 0.0
    %1322 = vmatpush1.msra.mxu0 0.0
    %1323 = vmatprep.subr.mxu0 0.0
    %1324 = vmatpush1.msra.mxu0 0.0
    %1325 = vmatprep.subr.mxu0 0.0
    %1326 = vmatpush1.msra.mxu0 0.0
    %1327 = vmatprep.subr.mxu0 0.0
    %1328 = vmatpush1.msra.mxu0 0.0
    %1329 = vmatprep.subr.mxu0 0.0
    %1330 = vmatpush1.msra.mxu0 0.0
    %1331 = vmatprep.subr.mxu0 0.0
    %1332 = vmatpush1.msra.mxu0 0.0
    %1333 = vmatprep.subr.mxu0 0.0
    %1334 = vmatpush1.msra.mxu0 0.0
    %1335 = vmatprep.subr.mxu0 0.0
    %1336 = vmatpush1.msra.mxu0 0.0
    %1337 = vmatprep.subr.mxu0 0.0
    %1338 = vmatpush1.msra.mxu0 %v1281
    %1339 = vmatprep.subr.mxu0 0.0
    %1340 = vmatpush1.msra.mxu0 %v1280
    %1341 = vmatprep.subr.mxu0 0.0
    %1342 = vmatpush1.msra.mxu0 %v1279
    %1343 = vmatprep.subr.mxu0 0.0
    %1344 = vmatpush1.msra.mxu0 %v1278
    %1345 = vmatprep.subr.mxu0 0.0
    %1346 = vmatpush2.msra.mxu0 0.0
    %1347 = vmatprep.subr.mxu0 0.0
    %1348 = vmatpush2.msra.mxu0 0.0
    %1349 = vmatprep.subr.mxu0 0.0
    %1350 = vmatpush2.msra.mxu0 0.0
    %1351 = vmatprep.subr.mxu0 0.0
    %1352 = vmatpush2.msra.mxu0 0.0
    %1353 = vmatprep.subr.mxu0 0.0
    %1354 = vmatpush2.msra.mxu0 0.0
    %1355 = vmatprep.subr.mxu0 0.0
    %1356 = vmatpush2.msra.mxu0 0.0
    %1357 = vmatprep.subr.mxu0 0.0
    %1358 = vmatpush2.msra.mxu0 0.0
    %1359 = vmatprep.subr.mxu0 0.0
    %1360 = vmatpush2.msra.mxu0 0.0
    %1361 = vmatprep.subr.mxu0 0.0
    %1362 = vmatpush2.msra.mxu0 0.0
    %1363 = vmatprep.subr.mxu0 0.0
    %1364 = vmatpush2.msra.mxu0 0.0
    %1365 = vmatprep.subr.mxu0 0.0
    %1366 = vmatpush2.msra.mxu0 0.0
    %1367 = vmatprep.subr.mxu0 0.0
    %1368 = vmatpush2.msra.mxu0 0.0
    %1369 = vmatprep.subr.mxu0 0.0
    %1370 = vmatpush2.msra.mxu0 0.0
    %1371 = vmatprep.subr.mxu0 0.0
    %1372 = vmatpush2.msra.mxu0 0.0
    %1373 = vmatprep.subr.mxu0 0.0
    %1374 = vmatpush2.msra.mxu0 0.0
    %1375 = vmatprep.subr.mxu0 0.0
    %1376 = vmatpush2.msra.mxu0 0.0
    %1377 = vmatprep.mubr.f32.mxu0 0.0
    %1378 = vmatmul.mubr.f32.gmra.mxu0 %v1311
    %v1379 = vpop.f32.mrf.mxu0
    %v1380 = vadd.f32 %v1309, %v1379
    %v1381 = vpop.f32.mrf.mxu0
    %1382 = vdwg.mxu0
    %1384 = vrot.lane.b32.xlu0 %v1380, 96
    %v1385 = vpop.permute.xlu0 %1384
    %v1386 = vsel %vm306, %v1380, 0
    %v1388 = vsel %vm306, %v1385, 0
    %1390 = vmatprep.subr.mxu0 0.0
    %1391 = vmatpush1.xpose.msra.mxu0 0.0
    %1392 = vmatprep.subr.mxu0 0.0
    %1393 = vmatpush1.xpose.msra.mxu0 0.0
    %1394 = vmatprep.subr.mxu0 0.0
    %1395 = vmatpush1.xpose.msra.mxu0 0.0
    %1396 = vmatprep.subr.mxu0 0.0
    %1397 = vmatpush1.xpose.msra.mxu0 0.0
    %1398 = vmatprep.subr.mxu0 0.0
    %1399 = vmatpush1.xpose.msra.mxu0 0.0
    %1400 = vmatprep.subr.mxu0 0.0
    %1401 = vmatpush1.xpose.msra.mxu0 0.0
    %1402 = vmatprep.subr.mxu0 0.0
    %1403 = vmatpush1.xpose.msra.mxu0 0.0
    %1404 = vmatprep.subr.mxu0 0.0
    %1405 = vmatpush1.xpose.msra.mxu0 0.0
    %1406 = vmatprep.subr.mxu0 0.0
    %1407 = vmatpush1.xpose.msra.mxu0 0.0
    %1408 = vmatprep.subr.mxu0 0.0
    %1409 = vmatpush1.xpose.msra.mxu0 0.0
    %1410 = vmatprep.subr.mxu0 0.0
    %1411 = vmatpush1.xpose.msra.mxu0 0.0
    %1412 = vmatprep.subr.mxu0 0.0
    %1413 = vmatpush1.xpose.msra.mxu0 0.0
    %1414 = vmatprep.subr.mxu0 0.0
    %1415 = vmatpush1.xpose.msra.mxu0 0.0
    %1416 = vmatprep.subr.mxu0 0.0
    %1417 = vmatpush1.xpose.msra.mxu0 0.0
    %1418 = vmatprep.subr.mxu0 0.0
    %1419 = vmatpush1.xpose.msra.mxu0 0.0
    %1420 = vmatprep.subr.mxu0 0.0
    %1421 = vmatpush1.xpose.msra.mxu0 %v1388
    %1422 = vmatprep.subr.mxu0 0.0
    %1423 = vmatpush2.xpose.msra.mxu0 0.0
    %1424 = vmatprep.subr.mxu0 0.0
    %1425 = vmatpush2.xpose.msra.mxu0 0.0
    %1426 = vmatprep.subr.mxu0 0.0
    %1427 = vmatpush2.xpose.msra.mxu0 0.0
    %1428 = vmatprep.subr.mxu0 0.0
    %1429 = vmatpush2.xpose.msra.mxu0 0.0
    %1430 = vmatprep.subr.mxu0 0.0
    %1431 = vmatpush2.xpose.msra.mxu0 0.0
    %1432 = vmatprep.subr.mxu0 0.0
    %1433 = vmatpush2.xpose.msra.mxu0 0.0
    %1434 = vmatprep.subr.mxu0 0.0
    %1435 = vmatpush2.xpose.msra.mxu0 0.0
    %1436 = vmatprep.subr.mxu0 0.0
    %1437 = vmatpush2.xpose.msra.mxu0 0.0
    %1438 = vmatprep.subr.mxu0 0.0
    %1439 = vmatpush2.xpose.msra.mxu0 0.0
    %1440 = vmatprep.subr.mxu0 0.0
    %1441 = vmatpush2.xpose.msra.mxu0 0.0
    %1442 = vmatprep.subr.mxu0 0.0
    %1443 = vmatpush2.xpose.msra.mxu0 0.0
    %1444 = vmatprep.subr.mxu0 0.0
    %1445 = vmatpush2.xpose.msra.mxu0 0.0
    %1446 = vmatprep.subr.mxu0 0.0
    %1447 = vmatpush2.xpose.msra.mxu0 0.0
    %1448 = vmatprep.subr.mxu0 0.0
    %1449 = vmatpush2.xpose.msra.mxu0 0.0
    %1450 = vmatprep.subr.mxu0 0.0
    %1451 = vmatpush2.xpose.msra.mxu0 0.0
    %1452 = vmatprep.subr.mxu0 0.0
    %1453 = vmatpush2.xpose.msra.mxu0 0.0
    %1454 = vmatprep.mubr.f32.mxu0 0.0
    %1455 = vmatmul.mubr.f32.gmra.mxu0 %v1386
    %v1456 = vpop.f32.mrf.mxu0
    %v1457 = vadd.f32 %v196, %v1456
    %v1458 = vpop.f32.mrf.mxu0
    %1459 = vdwg.mxu0
    %v1460 = vsel %vm306, %v1457, -inf
    %1461 = vmax.xlane.f32.xlu0 %v1460
    %v1462 = vpop.xlane.xlu0 %1461
    %v1463 = vsub.f32 %v1457, %v1462
    %v1464 = vmul.f32 %v1463, 1.442695
    %v1465 = vpow.pop %v1464
    %v1466 = vsel %vm306, %v1465, 0.0
    %1467 = vadd.xlane.f32.xlu0 %v1466
    %v1468 = vpop.xlane.xlu0 %1467
    %v1469 = vrcp.pop %v1468
    %v1470 = vmul.f32 %v1465, %v1469
    %1471 = vrot.lane.b32.xlu0 %v1380, 64
    %v1472 = vpop.permute.xlu0 %1471
    %v1475 = vsel %vm306, %v1470, 0
    %1477 = vmatprep.subr.mxu0 0.0
    %1478 = vmatpush1.msra.mxu0 0.0
    %1479 = vmatprep.subr.mxu0 0.0
    %1480 = vmatpush1.msra.mxu0 0.0
    %1481 = vmatprep.subr.mxu0 0.0
    %1482 = vmatpush1.msra.mxu0 0.0
    %1483 = vmatprep.subr.mxu0 0.0
    %1484 = vmatpush1.msra.mxu0 0.0
    %1485 = vmatprep.subr.mxu0 0.0
    %1486 = vmatpush1.msra.mxu0 0.0
    %1487 = vmatprep.subr.mxu0 0.0
    %1488 = vmatpush1.msra.mxu0 0.0
    %1489 = vmatprep.subr.mxu0 0.0
    %1490 = vmatpush1.msra.mxu0 0.0
    %1491 = vmatprep.subr.mxu0 0.0
    %1492 = vmatpush1.msra.mxu0 0.0
    %1493 = vmatprep.subr.mxu0 0.0
    %1494 = vmatpush1.msra.mxu0 0.0
    %1495 = vmatprep.subr.mxu0 0.0
    %1496 = vmatpush1.msra.mxu0 0.0
    %1497 = vmatprep.subr.mxu0 0.0
    %1498 = vmatpush1.msra.mxu0 0.0
    %1499 = vmatprep.subr.mxu0 0.0
    %1500 = vmatpush1.msra.mxu0 0.0
    %1501 = vmatprep.subr.mxu0 0.0
    %1502 = vmatpush1.msra.mxu0 0.0
    %1503 = vmatprep.subr.mxu0 0.0
    %1504 = vmatpush1.msra.mxu0 0.0
    %1505 = vmatprep.subr.mxu0 0.0
    %1506 = vmatpush1.msra.mxu0 0.0
    %1507 = vmatprep.subr.mxu0 0.0
    %1508 = vmatpush1.msra.mxu0 %v1472
    %1509 = vmatprep.subr.mxu0 0.0
    %1510 = vmatpush2.msra.mxu0 0.0
    %1511 = vmatprep.subr.mxu0 0.0
    %1512 = vmatpush2.msra.mxu0 0.0
    %1513 = vmatprep.subr.mxu0 0.0
    %1514 = vmatpush2.msra.mxu0 0.0
    %1515 = vmatprep.subr.mxu0 0.0
    %1516 = vmatpush2.msra.mxu0 0.0
    %1517 = vmatprep.subr.mxu0 0.0
    %1518 = vmatpush2.msra.mxu0 0.0
    %1519 = vmatprep.subr.mxu0 0.0
    %1520 = vmatpush2.msra.mxu0 0.0
    %1521 = vmatprep.subr.mxu0 0.0
    %1522 = vmatpush2.msra.mxu0 0.0
    %1523 = vmatprep.subr.mxu0 0.0
    %1524 = vmatpush2.msra.mxu0 0.0
    %1525 = vmatprep.subr.mxu0 0.0
    %1526 = vmatpush2.msra.mxu0 0.0
    %1527 = vmatprep.subr.mxu0 0.0
    %1528 = vmatpush2.msra.mxu0 0.0
    %1529 = vmatprep.subr.mxu0 0.0
    %1530 = vmatpush2.msra.mxu0 0.0
    %1531 = vmatprep.subr.mxu0 0.0
    %1532 = vmatpush2.msra.mxu0 0.0
    %1533 = vmatprep.subr.mxu0 0.0
    %1534 = vmatpush2.msra.mxu0 0.0
    %1535 = vmatprep.subr.mxu0 0.0
    %1536 = vmatpush2.msra.mxu0 0.0
    %1537 = vmatprep.subr.mxu0 0.0
    %1538 = vmatpush2.msra.mxu0 0.0
    %1539 = vmatprep.subr.mxu0 0.0
    %1540 = vmatpush2.msra.mxu0 0.0
    %1541 = vmatprep.mubr.f32.mxu0 0.0
    %1542 = vmatmul.mubr.f32.gmra.mxu0 %v1475
    %v1543 = vpop.f32.mrf.mxu0
    %v1544 = vadd.f32 0.0, %v1543
    %v1545 = vpop.f32.mrf.mxu0
    %1546 = vdwg.mxu0
    %1547 = vst.msk [vmem:[#allocation2] sm:$0xff] %vm306, %v1544
    %1548 = vrot.lane.b32.xlu0 %v1380, 120
    %v1549 = vpop.permute.xlu0 %1548
    %1550 = vrot.lane.b32.xlu0 %v1380, 88
    %v1551 = vpop.permute.xlu0 %1550
    %v1552 = vsel %vm306, %v1549, 0
    %v1554 = vsel %vm306, %v1551, 0
    %1556 = vmatprep.subr.mxu0 0.0
    %1557 = vmatpush1.xpose.msra.mxu0 0.0
    %1558 = vmatprep.subr.mxu0 0.0
    %1559 = vmatpush1.xpose.msra.mxu0 0.0
    %1560 = vmatprep.subr.mxu0 0.0
    %1561 = vmatpush1.xpose.msra.mxu0 0.0
    %1562 = vmatprep.subr.mxu0 0.0
    %1563 = vmatpush1.xpose.msra.mxu0 0.0
    %1564 = vmatprep.subr.mxu0 0.0
    %1565 = vmatpush1.xpose.msra.mxu0 0.0
    %1566 = vmatprep.subr.mxu0 0.0
    %1567 = vmatpush1.xpose.msra.mxu0 0.0
    %1568 = vmatprep.subr.mxu0 0.0
    %1569 = vmatpush1.xpose.msra.mxu0 0.0
    %1570 = vmatprep.subr.mxu0 0.0
    %1571 = vmatpush1.xpose.msra.mxu0 0.0
    %1572 = vmatprep.subr.mxu0 0.0
    %1573 = vmatpush1.xpose.msra.mxu0 0.0
    %1574 = vmatprep.subr.mxu0 0.0
    %1575 = vmatpush1.xpose.msra.mxu0 0.0
    %1576 = vmatprep.subr.mxu0 0.0
    %1577 = vmatpush1.xpose.msra.mxu0 0.0
    %1578 = vmatprep.subr.mxu0 0.0
    %1579 = vmatpush1.xpose.msra.mxu0 0.0
    %1580 = vmatprep.subr.mxu0 0.0
    %1581 = vmatpush1.xpose.msra.mxu0 0.0
    %1582 = vmatprep.subr.mxu0 0.0
    %1583 = vmatpush1.xpose.msra.mxu0 0.0
    %1584 = vmatprep.subr.mxu0 0.0
    %1585 = vmatpush1.xpose.msra.mxu0 0.0
    %1586 = vmatprep.subr.mxu0 0.0
    %1587 = vmatpush1.xpose.msra.mxu0 %v1554
    %1588 = vmatprep.subr.mxu0 0.0
    %1589 = vmatpush2.xpose.msra.mxu0 0.0
    %1590 = vmatprep.subr.mxu0 0.0
    %1591 = vmatpush2.xpose.msra.mxu0 0.0
    %1592 = vmatprep.subr.mxu0 0.0
    %1593 = vmatpush2.xpose.msra.mxu0 0.0
    %1594 = vmatprep.subr.mxu0 0.0
    %1595 = vmatpush2.xpose.msra.mxu0 0.0
    %1596 = vmatprep.subr.mxu0 0.0
    %1597 = vmatpush2.xpose.msra.mxu0 0.0
    %1598 = vmatprep.subr.mxu0 0.0
    %1599 = vmatpush2.xpose.msra.mxu0 0.0
    %1600 = vmatprep.subr.mxu0 0.0
    %1601 = vmatpush2.xpose.msra.mxu0 0.0
    %1602 = vmatprep.subr.mxu0 0.0
    %1603 = vmatpush2.xpose.msra.mxu0 0.0
    %1604 = vmatprep.subr.mxu0 0.0
    %1605 = vmatpush2.xpose.msra.mxu0 0.0
    %1606 = vmatprep.subr.mxu0 0.0
    %1607 = vmatpush2.xpose.msra.mxu0 0.0
    %1608 = vmatprep.subr.mxu0 0.0
    %1609 = vmatpush2.xpose.msra.mxu0 0.0
    %1610 = vmatprep.subr.mxu0 0.0
    %1611 = vmatpush2.xpose.msra.mxu0 0.0
    %1612 = vmatprep.subr.mxu0 0.0
    %1613 = vmatpush2.xpose.msra.mxu0 0.0
    %1614 = vmatprep.subr.mxu0 0.0
    %1615 = vmatpush2.xpose.msra.mxu0 0.0
    %1616 = vmatprep.subr.mxu0 0.0
    %1617 = vmatpush2.xpose.msra.mxu0 0.0
    %1618 = vmatprep.subr.mxu0 0.0
    %1619 = vmatpush2.xpose.msra.mxu0 0.0
    %1620 = vmatprep.mubr.f32.mxu0 0.0
    %1621 = vmatmul.mubr.f32.gmra.mxu0 %v1552
    %v1622 = vpop.f32.mrf.mxu0
    %v1623 = vadd.f32 %v196, %v1622
    %v1624 = vpop.f32.mrf.mxu0
    %1625 = vdwg.mxu0
    %v1626 = vsel %vm306, %v1623, -inf
    %1627 = vmax.xlane.f32.xlu0 %v1626
    %v1628 = vpop.xlane.xlu0 %1627
    %v1629 = vsub.f32 %v1623, %v1628
    %v1630 = vmul.f32 %v1629, 1.442695
    %v1631 = vpow.pop %v1630
    %v1632 = vsel %vm306, %v1631, 0.0
    %1633 = vadd.xlane.f32.xlu0 %v1632
    %v1634 = vpop.xlane.xlu0 %1633
    %v1635 = vrcp.pop %v1634
    %v1636 = vmul.f32 %v1631, %v1635
    %1637 = vrot.lane.b32.xlu0 %v1380, 56
    %v1638 = vpop.permute.xlu0 %1637
    %v1641 = vsel %vm306, %v1636, 0
    %1643 = vmatprep.subr.mxu0 0.0
    %1644 = vmatpush1.msra.mxu0 0.0
    %1645 = vmatprep.subr.mxu0 0.0
    %1646 = vmatpush1.msra.mxu0 0.0
    %1647 = vmatprep.subr.mxu0 0.0
    %1648 = vmatpush1.msra.mxu0 0.0
    %1649 = vmatprep.subr.mxu0 0.0
    %1650 = vmatpush1.msra.mxu0 0.0
    %1651 = vmatprep.subr.mxu0 0.0
    %1652 = vmatpush1.msra.mxu0 0.0
    %1653 = vmatprep.subr.mxu0 0.0
    %1654 = vmatpush1.msra.mxu0 0.0
    %1655 = vmatprep.subr.mxu0 0.0
    %1656 = vmatpush1.msra.mxu0 0.0
    %1657 = vmatprep.subr.mxu0 0.0
    %1658 = vmatpush1.msra.mxu0 0.0
    %1659 = vmatprep.subr.mxu0 0.0
    %1660 = vmatpush1.msra.mxu0 0.0
    %1661 = vmatprep.subr.mxu0 0.0
    %1662 = vmatpush1.msra.mxu0 0.0
    %1663 = vmatprep.subr.mxu0 0.0
    %1664 = vmatpush1.msra.mxu0 0.0
    %1665 = vmatprep.subr.mxu0 0.0
    %1666 = vmatpush1.msra.mxu0 0.0
    %1667 = vmatprep.subr.mxu0 0.0
    %1668 = vmatpush1.msra.mxu0 0.0
    %1669 = vmatprep.subr.mxu0 0.0
    %1670 = vmatpush1.msra.mxu0 0.0
    %1671 = vmatprep.subr.mxu0 0.0
    %1672 = vmatpush1.msra.mxu0 0.0
    %1673 = vmatprep.subr.mxu0 0.0
    %1674 = vmatpush1.msra.mxu0 %v1638
    %1675 = vmatprep.subr.mxu0 0.0
    %1676 = vmatpush2.msra.mxu0 0.0
    %1677 = vmatprep.subr.mxu0 0.0
    %1678 = vmatpush2.msra.mxu0 0.0
    %1679 = vmatprep.subr.mxu0 0.0
    %1680 = vmatpush2.msra.mxu0 0.0
    %1681 = vmatprep.subr.mxu0 0.0
    %1682 = vmatpush2.msra.mxu0 0.0
    %1683 = vmatprep.subr.mxu0 0.0
    %1684 = vmatpush2.msra.mxu0 0.0
    %1685 = vmatprep.subr.mxu0 0.0
    %1686 = vmatpush2.msra.mxu0 0.0
    %1687 = vmatprep.subr.mxu0 0.0
    %1688 = vmatpush2.msra.mxu0 0.0
    %1689 = vmatprep.subr.mxu0 0.0
    %1690 = vmatpush2.msra.mxu0 0.0
    %1691 = vmatprep.subr.mxu0 0.0
    %1692 = vmatpush2.msra.mxu0 0.0
    %1693 = vmatprep.subr.mxu0 0.0
    %1694 = vmatpush2.msra.mxu0 0.0
    %1695 = vmatprep.subr.mxu0 0.0
    %1696 = vmatpush2.msra.mxu0 0.0
    %1697 = vmatprep.subr.mxu0 0.0
    %1698 = vmatpush2.msra.mxu0 0.0
    %1699 = vmatprep.subr.mxu0 0.0
    %1700 = vmatpush2.msra.mxu0 0.0
    %1701 = vmatprep.subr.mxu0 0.0
    %1702 = vmatpush2.msra.mxu0 0.0
    %1703 = vmatprep.subr.mxu0 0.0
    %1704 = vmatpush2.msra.mxu0 0.0
    %1705 = vmatprep.subr.mxu0 0.0
    %1706 = vmatpush2.msra.mxu0 0.0
    %1707 = vmatprep.mubr.f32.mxu0 0.0
    %1708 = vmatmul.mubr.f32.gmra.mxu0 %v1641
    %v1709 = vpop.f32.mrf.mxu0
    %v1710 = vadd.f32 0.0, %v1709
    %v1711 = vpop.f32.mrf.mxu0
    %1712 = vdwg.mxu0
    %1714 = vrot.lane.b32.xlu0 %v1710, 8
    %v1715 = vpop.permute.xlu0 %1714
    %1717 = vst.msk [vmem:[#allocation2] sm:$0xff] %vm638, %v1715
    %1718 = vrot.lane.b32.xlu0 %v1380, 112
    %v1719 = vpop.permute.xlu0 %1718
    %1720 = vrot.lane.b32.xlu0 %v1380, 80
    %v1721 = vpop.permute.xlu0 %1720
    %v1722 = vsel %vm306, %v1719, 0
    %v1724 = vsel %vm306, %v1721, 0
    %1726 = vmatprep.subr.mxu0 0.0
    %1727 = vmatpush1.xpose.msra.mxu0 0.0
    %1728 = vmatprep.subr.mxu0 0.0
    %1729 = vmatpush1.xpose.msra.mxu0 0.0
    %1730 = vmatprep.subr.mxu0 0.0
    %1731 = vmatpush1.xpose.msra.mxu0 0.0
    %1732 = vmatprep.subr.mxu0 0.0
    %1733 = vmatpush1.xpose.msra.mxu0 0.0
    %1734 = vmatprep.subr.mxu0 0.0
    %1735 = vmatpush1.xpose.msra.mxu0 0.0
    %1736 = vmatprep.subr.mxu0 0.0
    %1737 = vmatpush1.xpose.msra.mxu0 0.0
    %1738 = vmatprep.subr.mxu0 0.0
    %1739 = vmatpush1.xpose.msra.mxu0 0.0
    %1740 = vmatprep.subr.mxu0 0.0
    %1741 = vmatpush1.xpose.msra.mxu0 0.0
    %1742 = vmatprep.subr.mxu0 0.0
    %1743 = vmatpush1.xpose.msra.mxu0 0.0
    %1744 = vmatprep.subr.mxu0 0.0
    %1745 = vmatpush1.xpose.msra.mxu0 0.0
    %1746 = vmatprep.subr.mxu0 0.0
    %1747 = vmatpush1.xpose.msra.mxu0 0.0
    %1748 = vmatprep.subr.mxu0 0.0
    %1749 = vmatpush1.xpose.msra.mxu0 0.0
    %1750 = vmatprep.subr.mxu0 0.0
    %1751 = vmatpush1.xpose.msra.mxu0 0.0
    %1752 = vmatprep.subr.mxu0 0.0
    %1753 = vmatpush1.xpose.msra.mxu0 0.0
    %1754 = vmatprep.subr.mxu0 0.0
    %1755 = vmatpush1.xpose.msra.mxu0 0.0
    %1756 = vmatprep.subr.mxu0 0.0
    %1757 = vmatpush1.xpose.msra.mxu0 %v1724
    %1758 = vmatprep.subr.mxu0 0.0
    %1759 = vmatpush2.xpose.msra.mxu0 0.0
    %1760 = vmatprep.subr.mxu0 0.0
    %1761 = vmatpush2.xpose.msra.mxu0 0.0
    %1762 = vmatprep.subr.mxu0 0.0
    %1763 = vmatpush2.xpose.msra.mxu0 0.0
    %1764 = vmatprep.subr.mxu0 0.0
    %1765 = vmatpush2.xpose.msra.mxu0 0.0
    %1766 = vmatprep.subr.mxu0 0.0
    %1767 = vmatpush2.xpose.msra.mxu0 0.0
    %1768 = vmatprep.subr.mxu0 0.0
    %1769 = vmatpush2.xpose.msra.mxu0 0.0
    %1770 = vmatprep.subr.mxu0 0.0
    %1771 = vmatpush2.xpose.msra.mxu0 0.0
    %1772 = vmatprep.subr.mxu0 0.0
    %1773 = vmatpush2.xpose.msra.mxu0 0.0
    %1774 = vmatprep.subr.mxu0 0.0
    %1775 = vmatpush2.xpose.msra.mxu0 0.0
    %1776 = vmatprep.subr.mxu0 0.0
    %1777 = vmatpush2.xpose.msra.mxu0 0.0
    %1778 = vmatprep.subr.mxu0 0.0
    %1779 = vmatpush2.xpose.msra.mxu0 0.0
    %1780 = vmatprep.subr.mxu0 0.0
    %1781 = vmatpush2.xpose.msra.mxu0 0.0
    %1782 = vmatprep.subr.mxu0 0.0
    %1783 = vmatpush2.xpose.msra.mxu0 0.0
    %1784 = vmatprep.subr.mxu0 0.0
    %1785 = vmatpush2.xpose.msra.mxu0 0.0
    %1786 = vmatprep.subr.mxu0 0.0
    %1787 = vmatpush2.xpose.msra.mxu0 0.0
    %1788 = vmatprep.subr.mxu0 0.0
    %1789 = vmatpush2.xpose.msra.mxu0 0.0
    %1790 = vmatprep.mubr.f32.mxu0 0.0
    %1791 = vmatmul.mubr.f32.gmra.mxu0 %v1722
    %v1792 = vpop.f32.mrf.mxu0
    %v1793 = vadd.f32 %v196, %v1792
    %v1794 = vpop.f32.mrf.mxu0
    %1795 = vdwg.mxu0
    %v1796 = vsel %vm306, %v1793, -inf
    %1797 = vmax.xlane.f32.xlu0 %v1796
    %v1798 = vpop.xlane.xlu0 %1797
    %v1799 = vsub.f32 %v1793, %v1798
    %v1800 = vmul.f32 %v1799, 1.442695
    %v1801 = vpow.pop %v1800
    %v1802 = vsel %vm306, %v1801, 0.0
    %1803 = vadd.xlane.f32.xlu0 %v1802
    %v1804 = vpop.xlane.xlu0 %1803
    %v1805 = vrcp.pop %v1804
    %v1806 = vmul.f32 %v1801, %v1805
    %1807 = vrot.lane.b32.xlu0 %v1380, 48
    %v1808 = vpop.permute.xlu0 %1807
    %v1811 = vsel %vm306, %v1806, 0
    %1813 = vmatprep.subr.mxu0 0.0
    %1814 = vmatpush1.msra.mxu0 0.0
    %1815 = vmatprep.subr.mxu0 0.0
    %1816 = vmatpush1.msra.mxu0 0.0
    %1817 = vmatprep.subr.mxu0 0.0
    %1818 = vmatpush1.msra.mxu0 0.0
    %1819 = vmatprep.subr.mxu0 0.0
    %1820 = vmatpush1.msra.mxu0 0.0
    %1821 = vmatprep.subr.mxu0 0.0
    %1822 = vmatpush1.msra.mxu0 0.0
    %1823 = vmatprep.subr.mxu0 0.0
    %1824 = vmatpush1.msra.mxu0 0.0
    %1825 = vmatprep.subr.mxu0 0.0
    %1826 = vmatpush1.msra.mxu0 0.0
    %1827 = vmatprep.subr.mxu0 0.0
    %1828 = vmatpush1.msra.mxu0 0.0
    %1829 = vmatprep.subr.mxu0 0.0
    %1830 = vmatpush1.msra.mxu0 0.0
    %1831 = vmatprep.subr.mxu0 0.0
    %1832 = vmatpush1.msra.mxu0 0.0
    %1833 = vmatprep.subr.mxu0 0.0
    %1834 = vmatpush1.msra.mxu0 0.0
    %1835 = vmatprep.subr.mxu0 0.0
    %1836 = vmatpush1.msra.mxu0 0.0
    %1837 = vmatprep.subr.mxu0 0.0
    %1838 = vmatpush1.msra.mxu0 0.0
    %1839 = vmatprep.subr.mxu0 0.0
    %1840 = vmatpush1.msra.mxu0 0.0
    %1841 = vmatprep.subr.mxu0 0.0
    %1842 = vmatpush1.msra.mxu0 0.0
    %1843 = vmatprep.subr.mxu0 0.0
    %1844 = vmatpush1.msra.mxu0 %v1808
    %1845 = vmatprep.subr.mxu0 0.0
    %1846 = vmatpush2.msra.mxu0 0.0
    %1847 = vmatprep.subr.mxu0 0.0
    %1848 = vmatpush2.msra.mxu0 0.0
    %1849 = vmatprep.subr.mxu0 0.0
    %1850 = vmatpush2.msra.mxu0 0.0
    %1851 = vmatprep.subr.mxu0 0.0
    %1852 = vmatpush2.msra.mxu0 0.0
    %1853 = vmatprep.subr.mxu0 0.0
    %1854 = vmatpush2.msra.mxu0 0.0
    %1855 = vmatprep.subr.mxu0 0.0
    %1856 = vmatpush2.msra.mxu0 0.0
    %1857 = vmatprep.subr.mxu0 0.0
    %1858 = vmatpush2.msra.mxu0 0.0
    %1859 = vmatprep.subr.mxu0 0.0
    %1860 = vmatpush2.msra.mxu0 0.0
    %1861 = vmatprep.subr.mxu0 0.0
    %1862 = vmatpush2.msra.mxu0 0.0
    %1863 = vmatprep.subr.mxu0 0.0
    %1864 = vmatpush2.msra.mxu0 0.0
    %1865 = vmatprep.subr.mxu0 0.0
    %1866 = vmatpush2.msra.mxu0 0.0
    %1867 = vmatprep.subr.mxu0 0.0
    %1868 = vmatpush2.msra.mxu0 0.0
    %1869 = vmatprep.subr.mxu0 0.0
    %1870 = vmatpush2.msra.mxu0 0.0
    %1871 = vmatprep.subr.mxu0 0.0
    %1872 = vmatpush2.msra.mxu0 0.0
    %1873 = vmatprep.subr.mxu0 0.0
    %1874 = vmatpush2.msra.mxu0 0.0
    %1875 = vmatprep.subr.mxu0 0.0
    %1876 = vmatpush2.msra.mxu0 0.0
    %1877 = vmatprep.mubr.f32.mxu0 0.0
    %1878 = vmatmul.mubr.f32.gmra.mxu0 %v1811
    %v1879 = vpop.f32.mrf.mxu0
    %v1880 = vadd.f32 0.0, %v1879
    %v1881 = vpop.f32.mrf.mxu0
    %1882 = vdwg.mxu0
    %1884 = vrot.lane.b32.xlu0 %v1880, 16
    %v1885 = vpop.permute.xlu0 %1884
    %1887 = vst.msk [vmem:[#allocation2] sm:$0xff] %vm809, %v1885
    %1888 = vrot.lane.b32.xlu0 %v1380, 104
    %v1889 = vpop.permute.xlu0 %1888
    %1890 = vrot.lane.b32.xlu0 %v1380, 72
    %v1891 = vpop.permute.xlu0 %1890
    %v1892 = vsel %vm306, %v1889, 0
    %v1894 = vsel %vm306, %v1891, 0
    %1896 = vmatprep.subr.mxu0 0.0
    %1897 = vmatpush1.xpose.msra.mxu0 0.0
    %1898 = vmatprep.subr.mxu0 0.0
    %1899 = vmatpush1.xpose.msra.mxu0 0.0
    %1900 = vmatprep.subr.mxu0 0.0
    %1901 = vmatpush1.xpose.msra.mxu0 0.0
    %1902 = vmatprep.subr.mxu0 0.0
    %1903 = vmatpush1.xpose.msra.mxu0 0.0
    %1904 = vmatprep.subr.mxu0 0.0
    %1905 = vmatpush1.xpose.msra.mxu0 0.0
    %1906 = vmatprep.subr.mxu0 0.0
    %1907 = vmatpush1.xpose.msra.mxu0 0.0
    %1908 = vmatprep.subr.mxu0 0.0
    %1909 = vmatpush1.xpose.msra.mxu0 0.0
    %1910 = vmatprep.subr.mxu0 0.0
    %1911 = vmatpush1.xpose.msra.mxu0 0.0
    %1912 = vmatprep.subr.mxu0 0.0
    %1913 = vmatpush1.xpose.msra.mxu0 0.0
    %1914 = vmatprep.subr.mxu0 0.0
    %1915 = vmatpush1.xpose.msra.mxu0 0.0
    %1916 = vmatprep.subr.mxu0 0.0
    %1917 = vmatpush1.xpose.msra.mxu0 0.0
    %1918 = vmatprep.subr.mxu0 0.0
    %1919 = vmatpush1.xpose.msra.mxu0 0.0
    %1920 = vmatprep.subr.mxu0 0.0
    %1921 = vmatpush1.xpose.msra.mxu0 0.0
    %1922 = vmatprep.subr.mxu0 0.0
    %1923 = vmatpush1.xpose.msra.mxu0 0.0
    %1924 = vmatprep.subr.mxu0 0.0
    %1925 = vmatpush1.xpose.msra.mxu0 0.0
    %1926 = vmatprep.subr.mxu0 0.0
    %1927 = vmatpush1.xpose.msra.mxu0 %v1894
    %1928 = vmatprep.subr.mxu0 0.0
    %1929 = vmatpush2.xpose.msra.mxu0 0.0
    %1930 = vmatprep.subr.mxu0 0.0
    %1931 = vmatpush2.xpose.msra.mxu0 0.0
    %1932 = vmatprep.subr.mxu0 0.0
    %1933 = vmatpush2.xpose.msra.mxu0 0.0
    %1934 = vmatprep.subr.mxu0 0.0
    %1935 = vmatpush2.xpose.msra.mxu0 0.0
    %1936 = vmatprep.subr.mxu0 0.0
    %1937 = vmatpush2.xpose.msra.mxu0 0.0
    %1938 = vmatprep.subr.mxu0 0.0
    %1939 = vmatpush2.xpose.msra.mxu0 0.0
    %1940 = vmatprep.subr.mxu0 0.0
    %1941 = vmatpush2.xpose.msra.mxu0 0.0
    %1942 = vmatprep.subr.mxu0 0.0
    %1943 = vmatpush2.xpose.msra.mxu0 0.0
    %1944 = vmatprep.subr.mxu0 0.0
    %1945 = vmatpush2.xpose.msra.mxu0 0.0
    %1946 = vmatprep.subr.mxu0 0.0
    %1947 = vmatpush2.xpose.msra.mxu0 0.0
    %1948 = vmatprep.subr.mxu0 0.0
    %1949 = vmatpush2.xpose.msra.mxu0 0.0
    %1950 = vmatprep.subr.mxu0 0.0
    %1951 = vmatpush2.xpose.msra.mxu0 0.0
    %1952 = vmatprep.subr.mxu0 0.0
    %1953 = vmatpush2.xpose.msra.mxu0 0.0
    %1954 = vmatprep.subr.mxu0 0.0
    %1955 = vmatpush2.xpose.msra.mxu0 0.0
    %1956 = vmatprep.subr.mxu0 0.0
    %1957 = vmatpush2.xpose.msra.mxu0 0.0
    %1958 = vmatprep.subr.mxu0 0.0
    %1959 = vmatpush2.xpose.msra.mxu0 0.0
    %1960 = vmatprep.mubr.f32.mxu0 0.0
    %1961 = vmatmul.mubr.f32.gmra.mxu0 %v1892
    %v1962 = vpop.f32.mrf.mxu0
    %v1963 = vadd.f32 %v196, %v1962
    %v1964 = vpop.f32.mrf.mxu0
    %1965 = vdwg.mxu0
    %v1966 = vsel %vm306, %v1963, -inf
    %1967 = vmax.xlane.f32.xlu0 %v1966
    %v1968 = vpop.xlane.xlu0 %1967
    %v1969 = vsub.f32 %v1963, %v1968
    %v1970 = vmul.f32 %v1969, 1.442695
    %v1971 = vpow.pop %v1970
    %v1972 = vsel %vm306, %v1971, 0.0
    %1973 = vadd.xlane.f32.xlu0 %v1972
    %v1974 = vpop.xlane.xlu0 %1973
    %v1975 = vrcp.pop %v1974
    %v1976 = vmul.f32 %v1971, %v1975
    %1977 = vrot.lane.b32.xlu0 %v1380, 40
    %v1978 = vpop.permute.xlu0 %1977
    %v1981 = vsel %vm306, %v1976, 0
    %1983 = vmatprep.subr.mxu0 0.0
    %1984 = vmatpush1.msra.mxu0 0.0
    %1985 = vmatprep.subr.mxu0 0.0
    %1986 = vmatpush1.msra.mxu0 0.0
    %1987 = vmatprep.subr.mxu0 0.0
    %1988 = vmatpush1.msra.mxu0 0.0
    %1989 = vmatprep.subr.mxu0 0.0
    %1990 = vmatpush1.msra.mxu0 0.0
    %1991 = vmatprep.subr.mxu0 0.0
    %1992 = vmatpush1.msra.mxu0 0.0
    %1993 = vmatprep.subr.mxu0 0.0
    %1994 = vmatpush1.msra.mxu0 0.0
    %1995 = vmatprep.subr.mxu0 0.0
    %1996 = vmatpush1.msra.mxu0 0.0
    %1997 = vmatprep.subr.mxu0 0.0
    %1998 = vmatpush1.msra.mxu0 0.0
    %1999 = vmatprep.subr.mxu0 0.0
    %2000 = vmatpush1.msra.mxu0 0.0
    %2001 = vmatprep.subr.mxu0 0.0
    %2002 = vmatpush1.msra.mxu0 0.0
    %2003 = vmatprep.subr.mxu0 0.0
    %2004 = vmatpush1.msra.mxu0 0.0
    %2005 = vmatprep.subr.mxu0 0.0
    %2006 = vmatpush1.msra.mxu0 0.0
    %2007 = vmatprep.subr.mxu0 0.0
    %2008 = vmatpush1.msra.mxu0 0.0
    %2009 = vmatprep.subr.mxu0 0.0
    %2010 = vmatpush1.msra.mxu0 0.0
    %2011 = vmatprep.subr.mxu0 0.0
    %2012 = vmatpush1.msra.mxu0 0.0
    %2013 = vmatprep.subr.mxu0 0.0
    %2014 = vmatpush1.msra.mxu0 %v1978
    %2015 = vmatprep.subr.mxu0 0.0
    %2016 = vmatpush2.msra.mxu0 0.0
    %2017 = vmatprep.subr.mxu0 0.0
    %2018 = vmatpush2.msra.mxu0 0.0
    %2019 = vmatprep.subr.mxu0 0.0
    %2020 = vmatpush2.msra.mxu0 0.0
    %2021 = vmatprep.subr.mxu0 0.0
    %2022 = vmatpush2.msra.mxu0 0.0
    %2023 = vmatprep.subr.mxu0 0.0
    %2024 = vmatpush2.msra.mxu0 0.0
    %2025 = vmatprep.subr.mxu0 0.0
    %2026 = vmatpush2.msra.mxu0 0.0
    %2027 = vmatprep.subr.mxu0 0.0
    %2028 = vmatpush2.msra.mxu0 0.0
    %2029 = vmatprep.subr.mxu0 0.0
    %2030 = vmatpush2.msra.mxu0 0.0
    %2031 = vmatprep.subr.mxu0 0.0
    %2032 = vmatpush2.msra.mxu0 0.0
    %2033 = vmatprep.subr.mxu0 0.0
    %2034 = vmatpush2.msra.mxu0 0.0
    %2035 = vmatprep.subr.mxu0 0.0
    %2036 = vmatpush2.msra.mxu0 0.0
    %2037 = vmatprep.subr.mxu0 0.0
    %2038 = vmatpush2.msra.mxu0 0.0
    %2039 = vmatprep.subr.mxu0 0.0
    %2040 = vmatpush2.msra.mxu0 0.0
    %2041 = vmatprep.subr.mxu0 0.0
    %2042 = vmatpush2.msra.mxu0 0.0
    %2043 = vmatprep.subr.mxu0 0.0
    %2044 = vmatpush2.msra.mxu0 0.0
    %2045 = vmatprep.subr.mxu0 0.0
    %2046 = vmatpush2.msra.mxu0 0.0
    %2047 = vmatprep.mubr.f32.mxu0 0.0
    %2048 = vmatmul.mubr.f32.gmra.mxu0 %v1981
    %v2049 = vpop.f32.mrf.mxu0
    %v2050 = vadd.f32 0.0, %v2049
    %v2051 = vpop.f32.mrf.mxu0
    %2052 = vdwg.mxu0
    %2054 = vrot.lane.b32.xlu0 %v2050, 24
    %v2055 = vpop.permute.xlu0 %2054
    %2057 = vst.msk [vmem:[#allocation2] sm:$0xff] %vm980, %v2055
    %v2058 = vld [vmem:[#allocation2] sm:$0xff]
    %v2059 = vlaneseq
    %v2060 = vshrl.u32 %v2059, 7
    %v2061 = vsub.s32 0, %v2060
    %v2062 = vrot.slane %v1287, %v2061
    %v2064 = vsel %vm161, %v2058, 0
    %2066 = vmatprep.subr.mxu0 0.0
    %2067 = vmatpush1.msra.mxu0 0.0
    %2068 = vmatprep.subr.mxu0 0.0
    %2069 = vmatpush1.msra.mxu0 0.0
    %2070 = vmatprep.subr.mxu0 0.0
    %2071 = vmatpush1.msra.mxu0 0.0
    %2072 = vmatprep.subr.mxu0 0.0
    %2073 = vmatpush1.msra.mxu0 0.0
    %2074 = vmatprep.subr.mxu0 0.0
    %2075 = vmatpush1.msra.mxu0 0.0
    %2076 = vmatprep.subr.mxu0 0.0
    %2077 = vmatpush1.msra.mxu0 0.0
    %2078 = vmatprep.subr.mxu0 0.0
    %2079 = vmatpush1.msra.mxu0 0.0
    %2080 = vmatprep.subr.mxu0 0.0
    %2081 = vmatpush1.msra.mxu0 0.0
    %2082 = vmatprep.subr.mxu0 0.0
    %2083 = vmatpush1.msra.mxu0 0.0
    %2084 = vmatprep.subr.mxu0 0.0
    %2085 = vmatpush1.msra.mxu0 0.0
    %2086 = vmatprep.subr.mxu0 0.0
    %2087 = vmatpush1.msra.mxu0 0.0
    %2088 = vmatprep.subr.mxu0 0.0
    %2089 = vmatpush1.msra.mxu0 0.0
    %2090 = vmatprep.subr.mxu0 0.0
    %2091 = vmatpush1.msra.mxu0 %v1286
    %2092 = vmatprep.subr.mxu0 0.0
    %2093 = vmatpush1.msra.mxu0 %v1285
    %2094 = vmatprep.subr.mxu0 0.0
    %2095 = vmatpush1.msra.mxu0 %v1284
    %2096 = vmatprep.subr.mxu0 0.0
    %2097 = vmatpush1.msra.mxu0 %v1283
    %2098 = vmatprep.subr.mxu0 0.0
    %2099 = vmatpush2.msra.mxu0 0.0
    %2100 = vmatprep.subr.mxu0 0.0
    %2101 = vmatpush2.msra.mxu0 0.0
    %2102 = vmatprep.subr.mxu0 0.0
    %2103 = vmatpush2.msra.mxu0 0.0
    %2104 = vmatprep.subr.mxu0 0.0
    %2105 = vmatpush2.msra.mxu0 0.0
    %2106 = vmatprep.subr.mxu0 0.0
    %2107 = vmatpush2.msra.mxu0 0.0
    %2108 = vmatprep.subr.mxu0 0.0
    %2109 = vmatpush2.msra.mxu0 0.0
    %2110 = vmatprep.subr.mxu0 0.0
    %2111 = vmatpush2.msra.mxu0 0.0
    %2112 = vmatprep.subr.mxu0 0.0
    %2113 = vmatpush2.msra.mxu0 0.0
    %2114 = vmatprep.subr.mxu0 0.0
    %2115 = vmatpush2.msra.mxu0 0.0
    %2116 = vmatprep.subr.mxu0 0.0
    %2117 = vmatpush2.msra.mxu0 0.0
    %2118 = vmatprep.subr.mxu0 0.0
    %2119 = vmatpush2.msra.mxu0 0.0
    %2120 = vmatprep.subr.mxu0 0.0
    %2121 = vmatpush2.msra.mxu0 0.0
    %2122 = vmatprep.subr.mxu0 0.0
    %2123 = vmatpush2.msra.mxu0 0.0
    %2124 = vmatprep.subr.mxu0 0.0
    %2125 = vmatpush2.msra.mxu0 0.0
    %2126 = vmatprep.subr.mxu0 0.0
    %2127 = vmatpush2.msra.mxu0 0.0
    %2128 = vmatprep.subr.mxu0 0.0
    %2129 = vmatpush2.msra.mxu0 0.0
    %2130 = vmatprep.mubr.f32.mxu0 0.0
    %2131 = vmatmul.mubr.f32.gmra.mxu0 %v2064
    %v2132 = vpop.f32.mrf.mxu0
    %v2133 = vadd.f32 %v2062, %v2132
    %v2134 = vpop.f32.mrf.mxu0
    %2135 = vdwg.mxu0
    %v2136 = vadd.f32 %v1277, %v2133
    %v2137 = vsel %vm161, %v2136, 0.0
    %2138 = vadd.xlane.f32.xlu0 %v2137
    %v2139 = vpop.xlane.xlu0 %2138
    %v2140 = vmul.f32 %v2139, %v165
    %v2141 = vmul.f32 %v2136, %v2136
    %v2142 = vsel %vm161, %v2141, 0.0
    %2143 = vadd.xlane.f32.xlu0 %v2142
    %v2144 = vpop.xlane.xlu0 %2143
    %v2145 = vmul.f32 %v2144, %v165
    %v2146 = vmul.f32 %v2140, %v2140
    %v2147 = vsub.f32 %v2145, %v2146
    %v2148 = vmax.f32 %v2147, 0.0
    %v2149 = vsub.f32 %v2136, %v2140
    %v2150 = vadd.f32 %v2148, 1e-12
    %v2151 = vrsqrt.pop %v2150
    %v2152 = vmul.f32 %v2149, %v2151
    %v2153 = vlaneseq
    %v2154 = vshrl.u32 %v2153, 7
    %v2155 = vsub.s32 0, %v2154
    %v2156 = vrot.slane %v1302, %v2155
    %v2157 = vmul.f32 %v2152, %v2156
    %v2158 = vlaneseq
    %v2159 = vshrl.u32 %v2158, 7
    %v2160 = vsub.s32 0, %v2159
    %v2161 = vrot.slane %v1303, %v2160
    %v2162 = vadd.f32 %v2157, %v2161
    %v2163 = vlaneseq
    %v2164 = vshrl.u32 %v2163, 7
    %v2165 = vsub.s32 0, %v2164
    %v2166 = vrot.slane %v1292, %v2165
    %v2168 = vsel %vm161, %v2162, 0
    %2170 = vmatprep.subr.mxu0 0.0
    %2171 = vmatpush1.msra.mxu0 0.0
    %2172 = vmatprep.subr.mxu0 0.0
    %2173 = vmatpush1.msra.mxu0 0.0
    %2174 = vmatprep.subr.mxu0 0.0
    %2175 = vmatpush1.msra.mxu0 0.0
    %2176 = vmatprep.subr.mxu0 0.0
    %2177 = vmatpush1.msra.mxu0 0.0
    %2178 = vmatprep.subr.mxu0 0.0
    %2179 = vmatpush1.msra.mxu0 0.0
    %2180 = vmatprep.subr.mxu0 0.0
    %2181 = vmatpush1.msra.mxu0 0.0
    %2182 = vmatprep.subr.mxu0 0.0
    %2183 = vmatpush1.msra.mxu0 0.0
    %2184 = vmatprep.subr.mxu0 0.0
    %2185 = vmatpush1.msra.mxu0 0.0
    %2186 = vmatprep.subr.mxu0 0.0
    %2187 = vmatpush1.msra.mxu0 0.0
    %2188 = vmatprep.subr.mxu0 0.0
    %2189 = vmatpush1.msra.mxu0 0.0
    %2190 = vmatprep.subr.mxu0 0.0
    %2191 = vmatpush1.msra.mxu0 0.0
    %2192 = vmatprep.subr.mxu0 0.0
    %2193 = vmatpush1.msra.mxu0 0.0
    %2194 = vmatprep.subr.mxu0 0.0
    %2195 = vmatpush1.msra.mxu0 %v1291
    %2196 = vmatprep.subr.mxu0 0.0
    %2197 = vmatpush1.msra.mxu0 %v1290
    %2198 = vmatprep.subr.mxu0 0.0
    %2199 = vmatpush1.msra.mxu0 %v1289
    %2200 = vmatprep.subr.mxu0 0.0
    %2201 = vmatpush1.msra.mxu0 %v1288
    %2202 = vmatprep.subr.mxu0 0.0
    %2203 = vmatpush2.msra.mxu0 0.0
    %2204 = vmatprep.subr.mxu0 0.0
    %2205 = vmatpush2.msra.mxu0 0.0
    %2206 = vmatprep.subr.mxu0 0.0
    %2207 = vmatpush2.msra.mxu0 0.0
    %2208 = vmatprep.subr.mxu0 0.0
    %2209 = vmatpush2.msra.mxu0 0.0
    %2210 = vmatprep.subr.mxu0 0.0
    %2211 = vmatpush2.msra.mxu0 0.0
    %2212 = vmatprep.subr.mxu0 0.0
    %2213 = vmatpush2.msra.mxu0 0.0
    %2214 = vmatprep.subr.mxu0 0.0
    %2215 = vmatpush2.msra.mxu0 0.0
    %2216 = vmatprep.subr.mxu0 0.0
    %2217 = vmatpush2.msra.mxu0 0.0
    %2218 = vmatprep.subr.mxu0 0.0
    %2219 = vmatpush2.msra.mxu0 0.0
    %2220 = vmatprep.subr.mxu0 0.0
    %2221 = vmatpush2.msra.mxu0 0.0
    %2222 = vmatprep.subr.mxu0 0.0
    %2223 = vmatpush2.msra.mxu0 0.0
    %2224 = vmatprep.subr.mxu0 0.0
    %2225 = vmatpush2.msra.mxu0 0.0
    %2226 = vmatprep.subr.mxu0 0.0
    %2227 = vmatpush2.msra.mxu0 0.0
    %2228 = vmatprep.subr.mxu0 0.0
    %2229 = vmatpush2.msra.mxu0 0.0
    %2230 = vmatprep.subr.mxu0 0.0
    %2231 = vmatpush2.msra.mxu0 0.0
    %2232 = vmatprep.subr.mxu0 0.0
    %2233 = vmatpush2.msra.mxu0 0.0
    %2234 = vmatprep.mubr.f32.mxu0 0.0
    %2235 = vmatmul.mubr.f32.gmra.mxu0 %v2168
    %v2236 = vpop.f32.mrf.mxu0
    %v2237 = vadd.f32 %v2166, %v2236
    %v2238 = vpop.f32.mrf.mxu0
    %2239 = vdwg.mxu0
    %v2240 = vmul.f32 %v2237, 0.5
    %v2241 = vmul.f32 %v2237, 0.044715
    %v2242 = vmul.f32 %v2241, %v2237
    %v2243 = vmul.f32 %v2242, %v2237
    %v2244 = vadd.f32 %v2237, %v2243
    %v2245 = vmul.f32 %v2244, 0.7978846
    %v2246 = vtanh.pop %v2245
    %v2247 = vadd.f32 %v2246, 1.0
    %v2248 = vmul.f32 %v2240, %v2247
    %v2249 = vlaneseq
    %v2250 = vshrl.u32 %v2249, 7
    %v2251 = vsub.s32 0, %v2250
    %v2252 = vrot.slane %v1301, %v2251
    %v2254 = vsel %vm1177, %v2248, 0
    %2256 = vmatprep.subr.mxu0 0.0
    %2257 = vmatpush1.msra.mxu0 0.0
    %2258 = vmatprep.subr.mxu0 0.0
    %2259 = vmatpush1.msra.mxu0 0.0
    %2260 = vmatprep.subr.mxu0 0.0
    %2261 = vmatpush1.msra.mxu0 0.0
    %2262 = vmatprep.subr.mxu0 0.0
    %2263 = vmatpush1.msra.mxu0 0.0
    %2264 = vmatprep.subr.mxu0 0.0
    %2265 = vmatpush1.msra.mxu0 0.0
    %2266 = vmatprep.subr.mxu0 0.0
    %2267 = vmatpush1.msra.mxu0 0.0
    %2268 = vmatprep.subr.mxu0 0.0
    %2269 = vmatpush1.msra.mxu0 0.0
    %2270 = vmatprep.subr.mxu0 0.0
    %2271 = vmatpush1.msra.mxu0 0.0
    %2272 = vmatprep.subr.mxu0 0.0
    %2273 = vmatpush1.msra.mxu0 %v1300
    %2274 = vmatprep.subr.mxu0 0.0
    %2275 = vmatpush1.msra.mxu0 %v1299
    %2276 = vmatprep.subr.mxu0 0.0
    %2277 = vmatpush1.msra.mxu0 %v1298
    %2278 = vmatprep.subr.mxu0 0.0
    %2279 = vmatpush1.msra.mxu0 %v1297
    %2280 = vmatprep.subr.mxu0 0.0
    %2281 = vmatpush1.msra.mxu0 %v1296
    %2282 = vmatprep.subr.mxu0 0.0
    %2283 = vmatpush1.msra.mxu0 %v1295
    %2284 = vmatprep.subr.mxu0 0.0
    %2285 = vmatpush1.msra.mxu0 %v1294
    %2286 = vmatprep.subr.mxu0 0.0
    %2287 = vmatpush1.msra.mxu0 %v1293
    %2288 = vmatprep.subr.mxu0 0.0
    %2289 = vmatpush2.msra.mxu0 0.0
    %2290 = vmatprep.subr.mxu0 0.0
    %2291 = vmatpush2.msra.mxu0 0.0
    %2292 = vmatprep.subr.mxu0 0.0
    %2293 = vmatpush2.msra.mxu0 0.0
    %2294 = vmatprep.subr.mxu0 0.0
    %2295 = vmatpush2.msra.mxu0 0.0
    %2296 = vmatprep.subr.mxu0 0.0
    %2297 = vmatpush2.msra.mxu0 0.0
    %2298 = vmatprep.subr.mxu0 0.0
    %2299 = vmatpush2.msra.mxu0 0.0
    %2300 = vmatprep.subr.mxu0 0.0
    %2301 = vmatpush2.msra.mxu0 0.0
    %2302 = vmatprep.subr.mxu0 0.0
    %2303 = vmatpush2.msra.mxu0 0.0
    %2304 = vmatprep.subr.mxu0 0.0
    %2305 = vmatpush2.msra.mxu0 0.0
    %2306 = vmatprep.subr.mxu0 0.0
    %2307 = vmatpush2.msra.mxu0 0.0
    %2308 = vmatprep.subr.mxu0 0.0
    %2309 = vmatpush2.msra.mxu0 0.0
    %2310 = vmatprep.subr.mxu0 0.0
    %2311 = vmatpush2.msra.mxu0 0.0
    %2312 = vmatprep.subr.mxu0 0.0
    %2313 = vmatpush2.msra.mxu0 0.0
    %2314 = vmatprep.subr.mxu0 0.0
    %2315 = vmatpush2.msra.mxu0 0.0
    %2316 = vmatprep.subr.mxu0 0.0
    %2317 = vmatpush2.msra.mxu0 0.0
    %2318 = vmatprep.subr.mxu0 0.0
    %2319 = vmatpush2.msra.mxu0 0.0
    %2320 = vmatprep.mubr.f32.mxu0 0.0
    %2321 = vmatmul.mubr.f32.gmra.mxu0 %v2254
    %v2322 = vpop.f32.mrf.mxu0
    %v2323 = vadd.f32 %v2252, %v2322
    %v2324 = vpop.f32.mrf.mxu0
    %2325 = vdwg.mxu0
    %v2326 = vadd.f32 %v2162, %v2323
    %v2327 = vsel %vm161, %v2326, 0.0
    %2328 = vadd.xlane.f32.xlu0 %v2327
    %v2329 = vpop.xlane.xlu0 %2328
    %v2330 = vmul.f32 %v2329, %v165
    %v2331 = vmul.f32 %v2326, %v2326
    %v2332 = vsel %vm161, %v2331, 0.0
    %2333 = vadd.xlane.f32.xlu0 %v2332
    %v2334 = vpop.xlane.xlu0 %2333
    %v2335 = vmul.f32 %v2334, %v165
    %v2336 = vmul.f32 %v2330, %v2330
    %v2337 = vsub.f32 %v2335, %v2336
    %v2338 = vmax.f32 %v2337, 0.0
    %v2339 = vsub.f32 %v2326, %v2330
    %v2340 = vadd.f32 %v2338, 1e-12
    %v2341 = vrsqrt.pop %v2340
    %v2342 = vmul.f32 %v2339, %v2341
    %v2343 = vlaneseq
    %v2344 = vshrl.u32 %v2343, 7
    %v2345 = vsub.s32 0, %v2344
    %v2346 = vrot.slane %v1304, %v2345
    %v2347 = vmul.f32 %v2342, %v2346
    %v2348 = vlaneseq
    %v2349 = vshrl.u32 %v2348, 7
    %v2350 = vsub.s32 0, %v2349
    %v2351 = vrot.slane %v1305, %v2350
    %v2352 = vadd.f32 %v2347, %v2351
    %v2353 = vld [vmem:[#allocation3 + $0x14] sm:$0x3]
    %2355 = vset.pattern.permute.xlu0 32
    %2356 = vperm.xlu0 %2355, %v2353
    %v2357 = vpop.permute.xlu0 %2356
    %v2359 = vsel %vm161, %v2353, 0
    %v2362 = vsel %vm161, %v2352, 0
    %2364 = vmatprep.subr.mxu0 0.0
    %2365 = vmatpush1.xpose.msra.mxu0 0.0
    %2366 = vmatprep.subr.mxu0 0.0
    %2367 = vmatpush1.xpose.msra.mxu0 0.0
    %2368 = vmatprep.subr.mxu0 0.0
    %2369 = vmatpush1.xpose.msra.mxu0 0.0
    %2370 = vmatprep.subr.mxu0 0.0
    %2371 = vmatpush1.xpose.msra.mxu0 0.0
    %2372 = vmatprep.subr.mxu0 0.0
    %2373 = vmatpush1.xpose.msra.mxu0 0.0
    %2374 = vmatprep.subr.mxu0 0.0
    %2375 = vmatpush1.xpose.msra.mxu0 0.0
    %2376 = vmatprep.subr.mxu0 0.0
    %2377 = vmatpush1.xpose.msra.mxu0 0.0
    %2378 = vmatprep.subr.mxu0 0.0
    %2379 = vmatpush1.xpose.msra.mxu0 0.0
    %2380 = vmatprep.subr.mxu0 0.0
    %2381 = vmatpush1.xpose.msra.mxu0 0.0
    %2382 = vmatprep.subr.mxu0 0.0
    %2383 = vmatpush1.xpose.msra.mxu0 0.0
    %2384 = vmatprep.subr.mxu0 0.0
    %2385 = vmatpush1.xpose.msra.mxu0 0.0
    %2386 = vmatprep.subr.mxu0 0.0
    %2387 = vmatpush1.xpose.msra.mxu0 0.0
    %2388 = vmatprep.subr.mxu0 0.0
    %2389 = vmatpush1.xpose.msra.mxu0 0.0
    %2390 = vmatprep.subr.mxu0 0.0
    %2391 = vmatpush1.xpose.msra.mxu0 0.0
    %2392 = vmatprep.subr.mxu0 0.0
    %2393 = vmatpush1.xpose.msra.mxu0 0.0
    %2394 = vmatprep.subr.mxu0 0.0
    %2395 = vmatpush1.xpose.msra.mxu0 %v2362
    %2396 = vmatprep.subr.mxu0 0.0
    %2397 = vmatpush2.xpose.msra.mxu0 0.0
    %2398 = vmatprep.subr.mxu0 0.0
    %2399 = vmatpush2.xpose.msra.mxu0 0.0
    %2400 = vmatprep.subr.mxu0 0.0
    %2401 = vmatpush2.xpose.msra.mxu0 0.0
    %2402 = vmatprep.subr.mxu0 0.0
    %2403 = vmatpush2.xpose.msra.mxu0 0.0
    %2404 = vmatprep.subr.mxu0 0.0
    %2405 = vmatpush2.xpose.msra.mxu0 0.0
    %2406 = vmatprep.subr.mxu0 0.0
    %2407 = vmatpush2.xpose.msra.mxu0 0.0
    %2408 = vmatprep.subr.mxu0 0.0
    %2409 = vmatpush2.xpose.msra.mxu0 0.0
    %2410 = vmatprep.subr.mxu0 0.0
    %2411 = vmatpush2.xpose.msra.mxu0 0.0
    %2412 = vmatprep.subr.mxu0 0.0
    %2413 = vmatpush2.xpose.msra.mxu0 0.0
    %2414 = vmatprep.subr.mxu0 0.0
    %2415 = vmatpush2.xpose.msra.mxu0 0.0
    %2416 = vmatprep.subr.mxu0 0.0
    %2417 = vmatpush2.xpose.msra.mxu0 0.0
    %2418 = vmatprep.subr.mxu0 0.0
    %2419 = vmatpush2.xpose.msra.mxu0 0.0
    %2420 = vmatprep.subr.mxu0 0.0
    %2421 = vmatpush2.xpose.msra.mxu0 0.0
    %2422 = vmatprep.subr.mxu0 0.0
    %2423 = vmatpush2.xpose.msra.mxu0 0.0
    %2424 = vmatprep.subr.mxu0 0.0
    %2425 = vmatpush2.xpose.msra.mxu0 0.0
    %2426 = vmatprep.subr.mxu0 0.0
    %2427 = vmatpush2.xpose.msra.mxu0 0.0
    %2428 = vmatprep.mubr.f32.mxu0 0.0
    %2429 = vmatmul.mubr.f32.gmra.mxu0 %v2359
    %v2430 = vpop.f32.mrf.mxu0
    %v2431 = vadd.f32 %v2357, %v2430
    %v2432 = vpop.f32.mrf.mxu0
    %2433 = vdwg.mxu0
    %vm2434 = vcmask 58368
    %v2435 = vsel %vm2434, %v2431, -inf
    %2436 = vmax.xlane.f32.xlu0 %v2435
    %v2437 = vpop.xlane.xlu0 %2436
    %v2438 = vsub.f32 %v2431, %v2437
    %v2439 = vmul.f32 %v2438, 1.442695
    %v2440 = vpow.pop %v2439
    %v2441 = vsel %vm2434, %v2440, 0.0
    %2442 = vadd.xlane.f32.xlu0 %v2441
    %v2443 = vpop.xlane.xlu0 %2442
    %v2444 = vlog2.pop %v2443
    %v2445 = vmul.f32 %v2444, 0.6931472
    %v2446 = vsub.f32 %v2438, %v2445
    %2447 = vst.msk [vmem:[#allocation6] sm:$0x3] %vm2434, %v2446
    // Predicated region
    $region22: #{tpu_custom_call.1} parent=1 // pred_check
      _
    $region23: #{tpu_custom_call.1} parent=1 // pred_check_branch
      %2449 = sbr.rel (0) target = $region25
    $region24: #{tpu_custom_call.1} parent=1 // pred_region
      %s2451 = ssub.s32 32, 32
      %2452 = vsyncadd [#allocation5], %s2451
      %s2454 = sshll.u32 [#allocation6], 4
      %s2455 = int_to_ptr.vmem [resolvable:$true] %s2454
      %2457 = dma.vmem_to_hbm [thread:$0]  %s2455, 32, %s4, [#allocation5]
    $region25: #{tpu_custom_call.1} parent=1 // pred_fallthru
      _
    // Predicated region
    $region26: #{tpu_custom_call.1} parent=1 // pred_check
      _
    $region27: #{tpu_custom_call.1} parent=1 // pred_check_branch
      %2459 = sbr.rel (0) target = $region29
    $region28: #{tpu_custom_call.1} parent=1 // pred_region
      %2460 = dma.done [#allocation5], 32
    $region29: #{tpu_custom_call.1} parent=1 // pred_fallthru
      _
    %2461 = vsyncpa [#allocation4], 1
    %2462 = vsyncpa [#allocation5], 1

</llo_original>
